<compile_context>
chip_gen: v5e
topology: v5e:2x2
jax: 0.10.0
libtpu: 0.0.40
codegen_flags: <defaults>
</compile_context>

<pallas_src>
import functools

import jax
import jax.numpy as jnp
from jax.experimental import pallas as pl
from jax.experimental.pallas import tpu as pltpu


# ----------------------------------------------------------------------------
# Pooler kernel: per-ROI interpolation matmul (ROIAlign without gathers)
# ----------------------------------------------------------------------------
def _pooler_kernel(bidx_ref, interp_ref, feat_ref, pooled_ref, xs_ref):
    del bidx_ref                                           # only used in index_maps
    pp = pooled_ref.shape[1]                               # P*P (multiple of 8)
    # One MXU matmul per ROI covering both the full-resolution pooled map and
    # the stride-2 head input rows.
    acc = jnp.dot(interp_ref[0], feat_ref[0],
                  preferred_element_type=jnp.float32)      # (P*P + hc*hc, C)
    pooled_ref[0] = acc[:pp].astype(pooled_ref.dtype)      # aligned sublane slice
    xs_ref[0] = acc[pp:].astype(xs_ref.dtype)


# TODO(synk): the per-ROI bilinear weight construction below is tiny scalar
# math and is left in plain JAX (it only feeds the Pallas matmul as an operand).
def _roi_axis_weights(rois, H, W, P, spatial_scale, sampling_ratio):
    """Separable ROIAlign weights: Ay (R,P,H), Ax (R,P,W)."""
    s = sampling_ratio

    def axis_w(start, length, size):
        bin_sz = length / P
        off = (jnp.arange(s, dtype=jnp.float32) + 0.5) / s
        idx = jnp.arange(P, dtype=jnp.float32)
        coords = (start + idx[:, None] * bin_sz + off[None, :] * bin_sz).reshape(-1)
        valid = (coords >= -1.0) & (coords <= float(size))
        cc = jnp.clip(coords, 0.0, size - 1.0)
        grid = jnp.arange(size, dtype=jnp.float32)
        w = jnp.maximum(0.0, 1.0 - jnp.abs(cc[:, None] - grid[None, :]))
        w = w * valid[:, None].astype(jnp.float32)
        return w.reshape(P, s, size).mean(axis=1)          # (P, size)

    def one(roi):
        x1 = roi[1] * spatial_scale
        y1 = roi[2] * spatial_scale
        x2 = roi[3] * spatial_scale
        y2 = roi[4] * spatial_scale
        roi_w = jnp.maximum(x2 - x1, 1.0)
        roi_h = jnp.maximum(y2 - y1, 1.0)
        return axis_w(y1, roi_h, H), axis_w(x1, roi_w, W)

    return jax.vmap(one)(rois)


def roi_align_pooler(features_nchw, rois, P, spatial_scale, sampling_ratio):
    """Returns (pooled_flat (R,P*P,C) f32, xs (R,(P/2)^2,C) bf16 head input)."""
    N, C, H, W = features_nchw.shape
    R = rois.shape[0]
    hc = P // 2

    feat = jnp.transpose(features_nchw, (0, 2, 3, 1)).reshape(N, H * W, C)
    feat = feat.astype(jnp.float32)

    Ay, Ax = _roi_axis_weights(rois, H, W, P, spatial_scale, sampling_ratio)
    interp = jnp.einsum("rph,rqw->rpqhw", Ay, Ax).reshape(R, P * P, H * W)
    # stride-2 output positions of the head's first (strided) 1x1 conv
    interp_s = jnp.einsum(
        "rph,rqw->rpqhw", Ay[:, ::2, :], Ax[:, ::2, :]
    ).reshape(R, hc * hc, H * W)
    # Concatenate so the kernel does a single matmul per ROI.
    interp_all = jnp.concatenate([interp, interp_s], axis=1)  # (R, P*P+hc*hc, H*W)
    rows = P * P + hc * hc
    bidx = rois[:, 0].astype(jnp.int32)

    grid_spec = pltpu.PrefetchScalarGridSpec(
        num_scalar_prefetch=1,
        grid=(R,),
        in_specs=[
            pl.BlockSpec((1, rows, H * W), lambda r, b: (r, 0, 0)),
            pl.BlockSpec((1, H * W, C), lambda r, b: (b[r], 0, 0)),
        ],
        out_specs=[
            pl.BlockSpec((1, P * P, C), lambda r, b: (r, 0, 0)),
            pl.BlockSpec((1, hc * hc, C), lambda r, b: (r, 0, 0)),
        ],
    )
    pooled, xs = pl.pallas_call(
        _pooler_kernel,
        grid_spec=grid_spec,
        out_shape=(
            jax.ShapeDtypeStruct((R, P * P, C), jnp.float32),
            jax.ShapeDtypeStruct((R, hc * hc, C), jnp.bfloat16),
        ),
        compiler_params=pltpu.CompilerParams(
            dimension_semantics=("parallel",)),
    )(bidx, interp_all, feat)
    return pooled, xs


# ----------------------------------------------------------------------------
# Fully fused C5 head kernel: 3 bottleneck blocks in one pallas_call
# ----------------------------------------------------------------------------
def _head_kernel(x_ref, *refs, num_blocks, hc):
    out_ref = refs[-2]
    pad_ref = refs[-1]                 # (rb, hc+2, hc+2, bneck) bf16 halo scratch
    wrefs = refs[:-2]

    rb = x_ref.shape[0]
    m = rb * hc * hc

    def mm(x2, w_ref, b_ref, residual=None, relu=True):
        acc = jnp.dot(x2, w_ref[...], preferred_element_type=jnp.float32)
        acc = acc + b_ref[...]
        if residual is not None:
            acc = acc + residual
        if relu:
            acc = jnp.maximum(acc, 0.0)
        return acc

    def conv3x3(h, w2_ref, b_ref):
        c = w2_ref.shape[1]
        cout = w2_ref.shape[2]
        pad_ref[:, 1:hc + 1, 1:hc + 1, :] = (
            h.astype(jnp.bfloat16).reshape(rb, hc, hc, c))
        acc = jnp.zeros((m, cout), jnp.float32)
        for kh in range(3):
            for kw in range(3):
                win = pad_ref[:, kh:kh + hc, kw:kw + hc, :].reshape(m, c)
                acc = acc + jnp.dot(win, w2_ref[kh * 3 + kw],
                                    preferred_element_type=jnp.float32)
        acc = acc + b_ref[...]
        return jnp.maximum(acc, 0.0)

    # zero the halo border once; the interior is fully overwritten every conv
    pad_ref[...] = jnp.zeros(pad_ref.shape, pad_ref.dtype)

    x2 = x_ref[...].reshape(m, x_ref.shape[-1])            # bf16 activations
    h = None
    idx = 0
    for blk in range(num_blocks):
        if blk == 0:
            w1, b1, w2, b2, w3, b3, wd, bd = wrefs[idx:idx + 8]
            idx += 8
            identity = mm(x2, wd, bd, relu=False)          # downsample branch
        else:
            w1, b1, w2, b2, w3, b3 = wrefs[idx:idx + 6]
            idx += 6
            identity = x2.astype(jnp.float32)
        h = mm(x2, w1, b1)                                  # 1x1 (+BN+ReLU)
        h = conv3x3(h, w2, b2)                              # 3x3 (+BN+ReLU)
        h = mm(h.astype(jnp.bfloat16), w3, b3,
               residual=identity)                           # 1x1 +BN +res +ReLU
        x2 = h.astype(jnp.bfloat16)
    out_ref[...] = h.reshape(out_ref.shape).astype(out_ref.dtype)


def run_head(xs, weights, *, rb, hc):
    R, pps, cin = xs.shape
    n_groups = R // rb
    num_blocks = 1 + (len(weights) - 8) // 6
    bneck = weights[0].shape[-1]
    out_ch = weights[4].shape[-1]

    in_specs = [pl.BlockSpec((rb, pps, cin), lambda g: (g, 0, 0))]
    for wgt in weights:
        in_specs.append(
            pl.BlockSpec(wgt.shape, lambda g, _nd=wgt.ndim: (0,) * _nd))
    out_spec = pl.BlockSpec((rb, pps, out_ch), lambda g: (g, 0, 0))

    kernel = functools.partial(_head_kernel, num_blocks=num_blocks, hc=hc)
    # NOTE: for production C5 sizes on v7x (64 MiB VMEM) keep weights bf16 and
    # set pltpu.CompilerParams(vmem_limit_bytes=...) explicitly; unnecessary
    # at these toy shapes.
    return pl.pallas_call(
        kernel,
        grid=(n_groups,),
        in_specs=in_specs,
        out_specs=out_spec,
        out_shape=jax.ShapeDtypeStruct((R, pps, out_ch), jnp.float32),
        scratch_shapes=[pltpu.VMEM((rb, hc + 2, hc + 2, bneck), jnp.bfloat16)],
        compiler_params=pltpu.CompilerParams(
            dimension_semantics=("parallel",)),
    )(xs, *weights)


# ----------------------------------------------------------------------------
# Parameters (frozen BN folded into conv) — deterministic synthetic init.
# NOTE: real PyTorch conv weights are (cout, cin, kh, kw); they would need a
# transpose into the (kh*3+kw, cin, cout) / (cin, cout) layouts used here.
# ----------------------------------------------------------------------------
def _fold_bn(key, w, cout):
    k1, k2, k3, k4 = jax.random.split(key, 4)
    gamma = 1.0 + 0.1 * jax.random.normal(k1, (cout,), jnp.float32)
    beta = 0.1 * jax.random.normal(k2, (cout,), jnp.float32)
    mean = 0.1 * jax.random.normal(k3, (cout,), jnp.float32)
    var = 1.0 + 0.1 * jnp.abs(jax.random.normal(k4, (cout,), jnp.float32))
    scale = gamma / jnp.sqrt(var + 1e-5)
    bias = beta - mean * scale
    return w * scale, bias            # scale broadcasts over last (cout) axis


def init_head_params(key, in_ch, bneck, out_ch, num_blocks=3):
    weights = []
    for i in range(num_blocks):
        blk_in = in_ch if i == 0 else out_ch
        key, *ks = jax.random.split(key, 9)
        w1 = 0.1 * jax.random.normal(ks[0], (blk_in, bneck), jnp.float32)
        w1, b1 = _fold_bn(ks[1], w1, bneck)
        w2 = 0.05 * jax.random.normal(ks[2], (3, 3, bneck, bneck), jnp.float32)
        w2, b2 = _fold_bn(ks[3], w2.reshape(9, bneck, bneck), bneck)
        w3 = 0.1 * jax.random.normal(ks[4], (bneck, out_ch), jnp.float32)
        w3, b3 = _fold_bn(ks[5], w3, out_ch)
        blk = [w1.astype(jnp.bfloat16), b1.reshape(1, -1),
               w2.astype(jnp.bfloat16), b2.reshape(1, -1),
               w3.astype(jnp.bfloat16), b3.reshape(1, -1)]
        if i == 0:  # downsample branch (channels change + stride 2)
            wd = 0.1 * jax.random.normal(ks[6], (blk_in, out_ch), jnp.float32)
            wd, bd = _fold_bn(ks[7], wd, out_ch)
            blk += [wd.astype(jnp.bfloat16), bd.reshape(1, -1)]
        weights += blk
    return weights


# ----------------------------------------------------------------------------
# Module forward: (x, pooled_feats)
# ----------------------------------------------------------------------------
def forward(features, rois, head_weights, *, resolution, spatial_scale,
            sampling_ratio):
    N, C, H, W = features.shape
    R = rois.shape[0]
    P = resolution
    hc = P // 2

    pooled_flat, xs = roi_align_pooler(
        features, rois, P, spatial_scale, sampling_ratio)
    pooled_feats = jnp.transpose(
        pooled_flat.reshape(R, P, P, C), (0, 3, 1, 2))     # NCHW

    # >=2 parallel ROI-group steps so both v7x TensorCores get work.
    n_groups = 2 if (R >= 2 and R % 2 == 0) else 1
    head_out = run_head(xs, head_weights, rb=R // n_groups, hc=hc)
    out_ch = head_weights[4].shape[-1]
    x_out = jnp.transpose(
        head_out.reshape(R, hc, hc, out_ch), (0, 3, 1, 2))  # NCHW
    return x_out, pooled_feats


if __name__ == "__main__":
    key = jax.random.PRNGKey(0)
    N, C_in, H, W = 2, 32, 16, 16     # backbone feature map (NCHW)
    R = 4                             # number of proposals (rois)
    P = 8                             # POOLER_RESOLUTION (small)
    spatial_scale = 1.0 / 8.0         # POOLER_SCALES
    sampling_ratio = 2                # POOLER_SAMPLING_RATIO
    bneck_ch = 16                     # scaled-down bottleneck channels
    out_ch = 64                       # scaled-down head out_channels

    k_feat, k_rois, k_head = jax.random.split(key, 3)
    features = jax.random.normal(k_feat, (N, C_in, H, W), jnp.float32)

    img = H / spatial_scale
    kx = jax.random.split(k_rois, 4)
    x1 = jax.random.uniform(kx[0], (R,), minval=0.0, maxval=img * 0.5)
    y1 = jax.random.uniform(kx[1], (R,), minval=0.0, maxval=img * 0.5)
    ww = jax.random.uniform(kx[2], (R,), minval=img * 0.2, maxval=img * 0.45)
    hh = jax.random.uniform(kx[3], (R,), minval=img * 0.2, maxval=img * 0.45)
    batch_idx = jnp.array([0.0, 0.0, 1.0, 1.0], jnp.float32)
    rois = jnp.stack([batch_idx, x1, y1, x1 + ww, y1 + hh], axis=1)  # (R, 5)

    head_weights = init_head_params(k_head, C_in, bneck_ch, out_ch, 3)

    fwd = jax.jit(
        functools.partial(
            forward,
            resolution=P,
            spatial_scale=spatial_scale,
            sampling_ratio=sampling_ratio,
        )
    )
    x_out, pooled = fwd(features, rois, head_weights)
    jax.block_until_ready((x_out, pooled))

    assert pooled.shape == (R, C_in, P, P)
    assert x_out.shape == (R, out_ch, P // 2, P // 2)
    assert bool(jnp.all(jnp.isfinite(x_out))) and bool(jnp.all(jnp.isfinite(pooled)))
    print("KERNEL_OK")
</pallas_src>

<mosaic_0001>
module attributes {stable_mosaic.version = 11 : i64} {
  func.func @_pooler_kernel(%arg0: i32, %arg1: memref<4xi32, #tpu.memory_space<smem>>, %arg2: memref<1x80x256xf32, #tpu.memory_space<vmem>>, %arg3: memref<1x256x32xf32, #tpu.memory_space<vmem>>, %arg4: memref<1x64x32xf32, #tpu.memory_space<vmem>>, %arg5: memref<1x16x32xbf16, #tpu.memory_space<vmem>>) attributes {dimension_semantics = [#tpu.dimension_semantics<parallel>], iteration_bounds = array<i64: 4>, scalar_prefetch = 1 : i64, scratch_operands = 0 : i64, tpu.core_type = #tpu.core_type<tc>, window_params = [{transform_indices = @transform_0, window_bounds = array<i64: 1, 80, 256>}, {transform_indices = @transform_1, window_bounds = array<i64: 1, 256, 32>}, {transform_indices = @transform_2, window_bounds = array<i64: 1, 64, 32>}, {transform_indices = @transform_3, window_bounds = array<i64: 1, 16, 32>}]} {
    %c0 = arith.constant 0 : index
    %c0_0 = arith.constant 0 : index
    %c0_1 = arith.constant 0 : index
    %0 = vector.load %arg2[%c0, %c0_0, %c0_1] : memref<1x80x256xf32, #tpu.memory_space<vmem>>, vector<1x80x256xf32>
    %1 = vector.shape_cast %0 : vector<1x80x256xf32> to vector<80x256xf32>
    %c0_2 = arith.constant 0 : index
    %c0_3 = arith.constant 0 : index
    %c0_4 = arith.constant 0 : index
    %2 = vector.load %arg3[%c0_2, %c0_3, %c0_4] : memref<1x256x32xf32, #tpu.memory_space<vmem>>, vector<1x256x32xf32>
    %3 = vector.shape_cast %2 : vector<1x256x32xf32> to vector<256x32xf32>
    %cst = arith.constant dense<0.000000e+00> : vector<80x32xf32>
    %4 = tpu.matmul %1, %3, %cst {dimension_numbers = #tpu.dot_dimension_numbers<[1], [0], [0], [1], [0, 0, 1, 1], [], []>} : vector<80x256xf32>, vector<256x32xf32>, vector<80x32xf32> -> vector<80x32xf32>
    %5 = vector.extract_strided_slice %4 {offsets = [0, 0], sizes = [64, 32], strides = [1, 1]} : vector<80x32xf32> to vector<64x32xf32>
    %c0_5 = arith.constant 0 : index
    %c0_6 = arith.constant 0 : index
    %c0_7 = arith.constant 0 : index
    %6 = vector.load %arg4[%c0_5, %c0_6, %c0_7] : memref<1x64x32xf32, #tpu.memory_space<vmem>>, vector<1x64x32xf32>
    %7 = vector.shape_cast %6 : vector<1x64x32xf32> to vector<64x32xf32>
    %8 = vector.shape_cast %5 : vector<64x32xf32> to vector<1x64x32xf32>
    tpu.vector_store %arg4[%c0_5, %c0_6, %c0_7], %8 {strides = array<i32>} : memref<1x64x32xf32, #tpu.memory_space<vmem>>, vector<1x64x32xf32>,
    %9 = vector.extract_strided_slice %4 {offsets = [64, 0], sizes = [16, 32], strides = [1, 1]} : vector<80x32xf32> to vector<16x32xf32>
    %10 = arith.truncf %9 : vector<16x32xf32> to vector<16x32xbf16>
    %c0_8 = arith.constant 0 : index
    %c0_9 = arith.constant 0 : index
    %c0_10 = arith.constant 0 : index
    %11 = vector.load %arg5[%c0_8, %c0_9, %c0_10] : memref<1x16x32xbf16, #tpu.memory_space<vmem>>, vector<1x16x32xbf16>
    %12 = vector.shape_cast %11 : vector<1x16x32xbf16> to vector<16x32xbf16>
    %13 = vector.shape_cast %10 : vector<16x32xbf16> to vector<1x16x32xbf16>
    tpu.vector_store %arg5[%c0_8, %c0_9, %c0_10], %13 {strides = array<i32>} : memref<1x16x32xbf16, #tpu.memory_space<vmem>>, vector<1x16x32xbf16>,
    return
  }
  func.func @transform_0(%arg0: i32, %arg1: memref<4xi32, #tpu.memory_space<smem>>) -> (i32, i32, i32) {
    %c0_i32 = arith.constant 0 : i32
    %c0_i32_0 = arith.constant 0 : i32
    %c0_i32_1 = arith.constant 0 : i32
    return %arg0, %c0_i32, %c0_i32_0 : i32, i32, i32
  }
  func.func @transform_1(%arg0: i32, %arg1: memref<4xi32, #tpu.memory_space<smem>>) -> (i32, i32, i32) {
    %0 = arith.index_cast %arg0 : i32 to index
    %1 = memref.load %arg1[%0] : memref<4xi32, #tpu.memory_space<smem>>
    %c0_i32 = arith.constant 0 : i32
    %c0_i32_0 = arith.constant 0 : i32
    %c0_i32_1 = arith.constant 0 : i32
    return %1, %c0_i32, %c0_i32_0 : i32, i32, i32
  }
  func.func @transform_2(%arg0: i32, %arg1: memref<4xi32, #tpu.memory_space<smem>>) -> (i32, i32, i32) {
    %c0_i32 = arith.constant 0 : i32
    %c0_i32_0 = arith.constant 0 : i32
    %c0_i32_1 = arith.constant 0 : i32
    return %arg0, %c0_i32, %c0_i32_0 : i32, i32, i32
  }
  func.func @transform_3(%arg0: i32, %arg1: memref<4xi32, #tpu.memory_space<smem>>) -> (i32, i32, i32) {
    %c0_i32 = arith.constant 0 : i32
    %c0_i32_0 = arith.constant 0 : i32
    %c0_i32_1 = arith.constant 0 : i32
    return %arg0, %c0_i32, %c0_i32_0 : i32, i32, i32
  }
}

module attributes {stable_mosaic.version = 11 : i64} {
  func.func @_head_kernel(%arg0: i32, %arg1: memref<2x16x32xbf16, #tpu.memory_space<vmem>>, %arg2: memref<32x16xbf16, #tpu.memory_space<vmem>>, %arg3: memref<1x16xf32, #tpu.memory_space<vmem>>, %arg4: memref<9x16x16xbf16, #tpu.memory_space<vmem>>, %arg5: memref<1x16xf32, #tpu.memory_space<vmem>>, %arg6: memref<16x64xbf16, #tpu.memory_space<vmem>>, %arg7: memref<1x64xf32, #tpu.memory_space<vmem>>, %arg8: memref<32x64xbf16, #tpu.memory_space<vmem>>, %arg9: memref<1x64xf32, #tpu.memory_space<vmem>>, %arg10: memref<64x16xbf16, #tpu.memory_space<vmem>>, %arg11: memref<1x16xf32, #tpu.memory_space<vmem>>, %arg12: memref<9x16x16xbf16, #tpu.memory_space<vmem>>, %arg13: memref<1x16xf32, #tpu.memory_space<vmem>>, %arg14: memref<16x64xbf16, #tpu.memory_space<vmem>>, %arg15: memref<1x64xf32, #tpu.memory_space<vmem>>, %arg16: memref<64x16xbf16, #tpu.memory_space<vmem>>, %arg17: memref<1x16xf32, #tpu.memory_space<vmem>>, %arg18: memref<9x16x16xbf16, #tpu.memory_space<vmem>>, %arg19: memref<1x16xf32, #tpu.memory_space<vmem>>, %arg20: memref<16x64xbf16, #tpu.memory_space<vmem>>, %arg21: memref<1x64xf32, #tpu.memory_space<vmem>>, %arg22: memref<2x16x64xf32, #tpu.memory_space<vmem>>, %arg23: memref<2x6x6x16xbf16, #tpu.memory_space<vmem>>) attributes {dimension_semantics = [#tpu.dimension_semantics<parallel>], iteration_bounds = array<i64: 2>, scalar_prefetch = 0 : i64, scratch_operands = 1 : i64, tpu.core_type = #tpu.core_type<tc>, window_params = [{transform_indices = @transform_0, window_bounds = array<i64: 2, 16, 32>}, {pipeline_mode = #tpu.pipeline_mode<synchronous>, transform_indices = @transform_1, window_bounds = array<i64: 32, 16>}, {pipeline_mode = #tpu.pipeline_mode<synchronous>, transform_indices = @transform_2, window_bounds = array<i64: 1, 16>}, {pipeline_mode = #tpu.pipeline_mode<synchronous>, transform_indices = @transform_3, window_bounds = array<i64: 9, 16, 16>}, {pipeline_mode = #tpu.pipeline_mode<synchronous>, transform_indices = @transform_4, window_bounds = array<i64: 1, 16>}, {pipeline_mode = #tpu.pipeline_mode<synchronous>, transform_indices = @transform_5, window_bounds = array<i64: 16, 64>}, {pipeline_mode = #tpu.pipeline_mode<synchronous>, transform_indices = @transform_6, window_bounds = array<i64: 1, 64>}, {pipeline_mode = #tpu.pipeline_mode<synchronous>, transform_indices = @transform_7, window_bounds = array<i64: 32, 64>}, {pipeline_mode = #tpu.pipeline_mode<synchronous>, transform_indices = @transform_8, window_bounds = array<i64: 1, 64>}, {pipeline_mode = #tpu.pipeline_mode<synchronous>, transform_indices = @transform_9, window_bounds = array<i64: 64, 16>}, {pipeline_mode = #tpu.pipeline_mode<synchronous>, transform_indices = @transform_10, window_bounds = array<i64: 1, 16>}, {pipeline_mode = #tpu.pipeline_mode<synchronous>, transform_indices = @transform_11, window_bounds = array<i64: 9, 16, 16>}, {pipeline_mode = #tpu.pipeline_mode<synchronous>, transform_indices = @transform_12, window_bounds = array<i64: 1, 16>}, {pipeline_mode = #tpu.pipeline_mode<synchronous>, transform_indices = @transform_13, window_bounds = array<i64: 16, 64>}, {pipeline_mode = #tpu.pipeline_mode<synchronous>, transform_indices = @transform_14, window_bounds = array<i64: 1, 64>}, {pipeline_mode = #tpu.pipeline_mode<synchronous>, transform_indices = @transform_15, window_bounds = array<i64: 64, 16>}, {pipeline_mode = #tpu.pipeline_mode<synchronous>, transform_indices = @transform_16, window_bounds = array<i64: 1, 16>}, {pipeline_mode = #tpu.pipeline_mode<synchronous>, transform_indices = @transform_17, window_bounds = array<i64: 9, 16, 16>}, {pipeline_mode = #tpu.pipeline_mode<synchronous>, transform_indices = @transform_18, window_bounds = array<i64: 1, 16>}, {pipeline_mode = #tpu.pipeline_mode<synchronous>, transform_indices = @transform_19, window_bounds = array<i64: 16, 64>}, {pipeline_mode = #tpu.pipeline_mode<synchronous>, transform_indices = @transform_20, window_bounds = array<i64: 1, 64>}, {transform_indices = @transform_21, window_bounds = array<i64: 2, 16, 64>}]} {
    %cst = arith.constant 0.000000e+00 : bf16
    %0 = vector.broadcast %cst : bf16 to vector<2x6x6x16xbf16>
    %c0 = arith.constant 0 : index
    %c0_0 = arith.constant 0 : index
    %c0_1 = arith.constant 0 : index
    %c0_2 = arith.constant 0 : index
    %1 = vector.load %arg23[%c0, %c0_0, %c0_1, %c0_2] : memref<2x6x6x16xbf16, #tpu.memory_space<vmem>>, vector<2x6x6x16xbf16>
    tpu.vector_store %arg23[%c0, %c0_0, %c0_1, %c0_2], %0 {strides = array<i32>} : memref<2x6x6x16xbf16, #tpu.memory_space<vmem>>, vector<2x6x6x16xbf16>,
    %c0_3 = arith.constant 0 : index
    %c0_4 = arith.constant 0 : index
    %c0_5 = arith.constant 0 : index
    %2 = vector.load %arg1[%c0_3, %c0_4, %c0_5] : memref<2x16x32xbf16, #tpu.memory_space<vmem>>, vector<2x16x32xbf16>
    %3 = vector.shape_cast %2 : vector<2x16x32xbf16> to vector<32x32xbf16>
    %c0_6 = arith.constant 0 : index
    %c0_7 = arith.constant 0 : index
    %4 = vector.load %arg8[%c0_6, %c0_7] : memref<32x64xbf16, #tpu.memory_space<vmem>>, vector<32x64xbf16>
    %cst_8 = arith.constant dense<0.000000e+00> : vector<32x64xf32>
    %5 = tpu.matmul %3, %4, %cst_8 {dimension_numbers = #tpu.dot_dimension_numbers<[1], [0], [0], [1], [0, 0, 1, 1], [], []>} : vector<32x32xbf16>, vector<32x64xbf16>, vector<32x64xf32> -> vector<32x64xf32>
    %c0_9 = arith.constant 0 : index
    %c0_10 = arith.constant 0 : index
    %6 = vector.load %arg9[%c0_9, %c0_10] : memref<1x64xf32, #tpu.memory_space<vmem>>, vector<1x64xf32>
    %7 = vector.broadcast %6 : vector<1x64xf32> to vector<32x64xf32>
    %8 = arith.addf %5, %7 : vector<32x64xf32>
    %c0_11 = arith.constant 0 : index
    %c0_12 = arith.constant 0 : index
    %9 = vector.load %arg2[%c0_11, %c0_12] : memref<32x16xbf16, #tpu.memory_space<vmem>>, vector<32x16xbf16>
    %cst_13 = arith.constant dense<0.000000e+00> : vector<32x16xf32>
    %10 = tpu.matmul %3, %9, %cst_13 {dimension_numbers = #tpu.dot_dimension_numbers<[1], [0], [0], [1], [0, 0, 1, 1], [], []>} : vector<32x32xbf16>, vector<32x16xbf16>, vector<32x16xf32> -> vector<32x16xf32>
    %c0_14 = arith.constant 0 : index
    %c0_15 = arith.constant 0 : index
    %11 = vector.load %arg3[%c0_14, %c0_15] : memref<1x16xf32, #tpu.memory_space<vmem>>, vector<1x16xf32>
    %12 = vector.broadcast %11 : vector<1x16xf32> to vector<32x16xf32>
    %13 = arith.addf %10, %12 : vector<32x16xf32>
    %cst_16 = arith.constant 0.000000e+00 : f32
    %14 = vector.broadcast %cst_16 : f32 to vector<32x16xf32>
    %15 = arith.maximumf %13, %14 : vector<32x16xf32>
    %16 = arith.truncf %15 : vector<32x16xf32> to vector<32x16xbf16>
    %17 = vector.shape_cast %16 : vector<32x16xbf16> to vector<2x4x4x16xbf16>
    %c0_17 = arith.constant 0 : index
    %c1 = arith.constant 1 : index
    %c1_18 = arith.constant 1 : index
    %c0_19 = arith.constant 0 : index
    %18 = vector.load %arg23[%c0_17, %c1, %c1_18, %c0_19] : memref<2x6x6x16xbf16, #tpu.memory_space<vmem>>, vector<2x4x4x16xbf16>
    tpu.vector_store %arg23[%c0_17, %c1, %c1_18, %c0_19], %17 {strides = array<i32>} : memref<2x6x6x16xbf16, #tpu.memory_space<vmem>>, vector<2x4x4x16xbf16>,
    %cst_20 = arith.constant 0.000000e+00 : f32
    %19 = vector.broadcast %cst_20 : f32 to vector<32x16xf32>
    %c0_21 = arith.constant 0 : index
    %c0_22 = arith.constant 0 : index
    %c0_23 = arith.constant 0 : index
    %c0_24 = arith.constant 0 : index
    %20 = vector.load %arg23[%c0_21, %c0_22, %c0_23, %c0_24] : memref<2x6x6x16xbf16, #tpu.memory_space<vmem>>, vector<2x4x4x16xbf16>
    %21 = vector.shape_cast %20 : vector<2x4x4x16xbf16> to vector<32x16xbf16>
    %c0_25 = arith.constant 0 : index
    %c0_26 = arith.constant 0 : index
    %c0_27 = arith.constant 0 : index
    %22 = vector.load %arg4[%c0_25, %c0_26, %c0_27] : memref<9x16x16xbf16, #tpu.memory_space<vmem>>, vector<1x16x16xbf16>
    %23 = vector.shape_cast %22 : vector<1x16x16xbf16> to vector<16x16xbf16>
    %cst_28 = arith.constant dense<0.000000e+00> : vector<32x16xf32>
    %24 = tpu.matmul %21, %23, %cst_28 {dimension_numbers = #tpu.dot_dimension_numbers<[1], [0], [0], [1], [0, 0, 1, 1], [], []>} : vector<32x16xbf16>, vector<16x16xbf16>, vector<32x16xf32> -> vector<32x16xf32>
    %25 = arith.addf %19, %24 : vector<32x16xf32>
    %c0_29 = arith.constant 0 : index
    %c0_30 = arith.constant 0 : index
    %c1_31 = arith.constant 1 : index
    %c0_32 = arith.constant 0 : index
    %26 = vector.load %arg23[%c0_29, %c0_30, %c1_31, %c0_32] : memref<2x6x6x16xbf16, #tpu.memory_space<vmem>>, vector<2x4x4x16xbf16>
    %27 = vector.shape_cast %26 : vector<2x4x4x16xbf16> to vector<32x16xbf16>
    %c1_33 = arith.constant 1 : index
    %c0_34 = arith.constant 0 : index
    %c0_35 = arith.constant 0 : index
    %28 = vector.load %arg4[%c1_33, %c0_34, %c0_35] : memref<9x16x16xbf16, #tpu.memory_space<vmem>>, vector<1x16x16xbf16>
    %29 = vector.shape_cast %28 : vector<1x16x16xbf16> to vector<16x16xbf16>
    %cst_36 = arith.constant dense<0.000000e+00> : vector<32x16xf32>
    %30 = tpu.matmul %27, %29, %cst_36 {dimension_numbers = #tpu.dot_dimension_numbers<[1], [0], [0], [1], [0, 0, 1, 1], [], []>} : vector<32x16xbf16>, vector<16x16xbf16>, vector<32x16xf32> -> vector<32x16xf32>
    %31 = arith.addf %25, %30 : vector<32x16xf32>
    %c0_37 = arith.constant 0 : index
    %c0_38 = arith.constant 0 : index
    %c2 = arith.constant 2 : index
    %c0_39 = arith.constant 0 : index
    %32 = vector.load %arg23[%c0_37, %c0_38, %c2, %c0_39] : memref<2x6x6x16xbf16, #tpu.memory_space<vmem>>, vector<2x4x4x16xbf16>
    %33 = vector.shape_cast %32 : vector<2x4x4x16xbf16> to vector<32x16xbf16>
    %c2_40 = arith.constant 2 : index
    %c0_41 = arith.constant 0 : index
    %c0_42 = arith.constant 0 : index
    %34 = vector.load %arg4[%c2_40, %c0_41, %c0_42] : memref<9x16x16xbf16, #tpu.memory_space<vmem>>, vector<1x16x16xbf16>
    %35 = vector.shape_cast %34 : vector<1x16x16xbf16> to vector<16x16xbf16>
    %cst_43 = arith.constant dense<0.000000e+00> : vector<32x16xf32>
    %36 = tpu.matmul %33, %35, %cst_43 {dimension_numbers = #tpu.dot_dimension_numbers<[1], [0], [0], [1], [0, 0, 1, 1], [], []>} : vector<32x16xbf16>, vector<16x16xbf16>, vector<32x16xf32> -> vector<32x16xf32>
    %37 = arith.addf %31, %36 : vector<32x16xf32>
    %c0_44 = arith.constant 0 : index
    %c1_45 = arith.constant 1 : index
    %c0_46 = arith.constant 0 : index
    %c0_47 = arith.constant 0 : index
    %38 = vector.load %arg23[%c0_44, %c1_45, %c0_46, %c0_47] : memref<2x6x6x16xbf16, #tpu.memory_space<vmem>>, vector<2x4x4x16xbf16>
    %39 = vector.shape_cast %38 : vector<2x4x4x16xbf16> to vector<32x16xbf16>
    %c3 = arith.constant 3 : index
    %c0_48 = arith.constant 0 : index
    %c0_49 = arith.constant 0 : index
    %40 = vector.load %arg4[%c3, %c0_48, %c0_49] : memref<9x16x16xbf16, #tpu.memory_space<vmem>>, vector<1x16x16xbf16>
    %41 = vector.shape_cast %40 : vector<1x16x16xbf16> to vector<16x16xbf16>
    %cst_50 = arith.constant dense<0.000000e+00> : vector<32x16xf32>
    %42 = tpu.matmul %39, %41, %cst_50 {dimension_numbers = #tpu.dot_dimension_numbers<[1], [0], [0], [1], [0, 0, 1, 1], [], []>} : vector<32x16xbf16>, vector<16x16xbf16>, vector<32x16xf32> -> vector<32x16xf32>
    %43 = arith.addf %37, %42 : vector<32x16xf32>
    %c0_51 = arith.constant 0 : index
    %c1_52 = arith.constant 1 : index
    %c1_53 = arith.constant 1 : index
    %c0_54 = arith.constant 0 : index
    %44 = vector.load %arg23[%c0_51, %c1_52, %c1_53, %c0_54] : memref<2x6x6x16xbf16, #tpu.memory_space<vmem>>, vector<2x4x4x16xbf16>
    %45 = vector.shape_cast %44 : vector<2x4x4x16xbf16> to vector<32x16xbf16>
    %c4 = arith.constant 4 : index
    %c0_55 = arith.constant 0 : index
    %c0_56 = arith.constant 0 : index
    %46 = vector.load %arg4[%c4, %c0_55, %c0_56] : memref<9x16x16xbf16, #tpu.memory_space<vmem>>, vector<1x16x16xbf16>
    %47 = vector.shape_cast %46 : vector<1x16x16xbf16> to vector<16x16xbf16>
    %cst_57 = arith.constant dense<0.000000e+00> : vector<32x16xf32>
    %48 = tpu.matmul %45, %47, %cst_57 {dimension_numbers = #tpu.dot_dimension_numbers<[1], [0], [0], [1], [0, 0, 1, 1], [], []>} : vector<32x16xbf16>, vector<16x16xbf16>, vector<32x16xf32> -> vector<32x16xf32>
    %49 = arith.addf %43, %48 : vector<32x16xf32>
    %c0_58 = arith.constant 0 : index
    %c1_59 = arith.constant 1 : index
    %c2_60 = arith.constant 2 : index
    %c0_61 = arith.constant 0 : index
    %50 = vector.load %arg23[%c0_58, %c1_59, %c2_60, %c0_61] : memref<2x6x6x16xbf16, #tpu.memory_space<vmem>>, vector<2x4x4x16xbf16>
    %51 = vector.shape_cast %50 : vector<2x4x4x16xbf16> to vector<32x16xbf16>
    %c5 = arith.constant 5 : index
    %c0_62 = arith.constant 0 : index
    %c0_63 = arith.constant 0 : index
    %52 = vector.load %arg4[%c5, %c0_62, %c0_63] : memref<9x16x16xbf16, #tpu.memory_space<vmem>>, vector<1x16x16xbf16>
    %53 = vector.shape_cast %52 : vector<1x16x16xbf16> to vector<16x16xbf16>
    %cst_64 = arith.constant dense<0.000000e+00> : vector<32x16xf32>
    %54 = tpu.matmul %51, %53, %cst_64 {dimension_numbers = #tpu.dot_dimension_numbers<[1], [0], [0], [1], [0, 0, 1, 1], [], []>} : vector<32x16xbf16>, vector<16x16xbf16>, vector<32x16xf32> -> vector<32x16xf32>
    %55 = arith.addf %49, %54 : vector<32x16xf32>
    %c0_65 = arith.constant 0 : index
    %c2_66 = arith.constant 2 : index
    %c0_67 = arith.constant 0 : index
    %c0_68 = arith.constant 0 : index
    %56 = vector.load %arg23[%c0_65, %c2_66, %c0_67, %c0_68] : memref<2x6x6x16xbf16, #tpu.memory_space<vmem>>, vector<2x4x4x16xbf16>
    %57 = vector.shape_cast %56 : vector<2x4x4x16xbf16> to vector<32x16xbf16>
    %c6 = arith.constant 6 : index
    %c0_69 = arith.constant 0 : index
    %c0_70 = arith.constant 0 : index
    %58 = vector.load %arg4[%c6, %c0_69, %c0_70] : memref<9x16x16xbf16, #tpu.memory_space<vmem>>, vector<1x16x16xbf16>
    %59 = vector.shape_cast %58 : vector<1x16x16xbf16> to vector<16x16xbf16>
    %cst_71 = arith.constant dense<0.000000e+00> : vector<32x16xf32>
    %60 = tpu.matmul %57, %59, %cst_71 {dimension_numbers = #tpu.dot_dimension_numbers<[1], [0], [0], [1], [0, 0, 1, 1], [], []>} : vector<32x16xbf16>, vector<16x16xbf16>, vector<32x16xf32> -> vector<32x16xf32>
    %61 = arith.addf %55, %60 : vector<32x16xf32>
    %c0_72 = arith.constant 0 : index
    %c2_73 = arith.constant 2 : index
    %c1_74 = arith.constant 1 : index
    %c0_75 = arith.constant 0 : index
    %62 = vector.load %arg23[%c0_72, %c2_73, %c1_74, %c0_75] : memref<2x6x6x16xbf16, #tpu.memory_space<vmem>>, vector<2x4x4x16xbf16>
    %63 = vector.shape_cast %62 : vector<2x4x4x16xbf16> to vector<32x16xbf16>
    %c7 = arith.constant 7 : index
    %c0_76 = arith.constant 0 : index
    %c0_77 = arith.constant 0 : index
    %64 = vector.load %arg4[%c7, %c0_76, %c0_77] : memref<9x16x16xbf16, #tpu.memory_space<vmem>>, vector<1x16x16xbf16>
    %65 = vector.shape_cast %64 : vector<1x16x16xbf16> to vector<16x16xbf16>
    %cst_78 = arith.constant dense<0.000000e+00> : vector<32x16xf32>
    %66 = tpu.matmul %63, %65, %cst_78 {dimension_numbers = #tpu.dot_dimension_numbers<[1], [0], [0], [1], [0, 0, 1, 1], [], []>} : vector<32x16xbf16>, vector<16x16xbf16>, vector<32x16xf32> -> vector<32x16xf32>
    %67 = arith.addf %61, %66 : vector<32x16xf32>
    %c0_79 = arith.constant 0 : index
    %c2_80 = arith.constant 2 : index
    %c2_81 = arith.constant 2 : index
    %c0_82 = arith.constant 0 : index
    %68 = vector.load %arg23[%c0_79, %c2_80, %c2_81, %c0_82] : memref<2x6x6x16xbf16, #tpu.memory_space<vmem>>, vector<2x4x4x16xbf16>
    %69 = vector.shape_cast %68 : vector<2x4x4x16xbf16> to vector<32x16xbf16>
    %c8 = arith.constant 8 : index
    %c0_83 = arith.constant 0 : index
    %c0_84 = arith.constant 0 : index
    %70 = vector.load %arg4[%c8, %c0_83, %c0_84] : memref<9x16x16xbf16, #tpu.memory_space<vmem>>, vector<1x16x16xbf16>
    %71 = vector.shape_cast %70 : vector<1x16x16xbf16> to vector<16x16xbf16>
    %cst_85 = arith.constant dense<0.000000e+00> : vector<32x16xf32>
    %72 = tpu.matmul %69, %71, %cst_85 {dimension_numbers = #tpu.dot_dimension_numbers<[1], [0], [0], [1], [0, 0, 1, 1], [], []>} : vector<32x16xbf16>, vector<16x16xbf16>, vector<32x16xf32> -> vector<32x16xf32>
    %73 = arith.addf %67, %72 : vector<32x16xf32>
    %c0_86 = arith.constant 0 : index
    %c0_87 = arith.constant 0 : index
    %74 = vector.load %arg5[%c0_86, %c0_87] : memref<1x16xf32, #tpu.memory_space<vmem>>, vector<1x16xf32>
    %75 = vector.broadcast %74 : vector<1x16xf32> to vector<32x16xf32>
    %76 = arith.addf %73, %75 : vector<32x16xf32>
    %cst_88 = arith.constant 0.000000e+00 : f32
    %77 = vector.broadcast %cst_88 : f32 to vector<32x16xf32>
    %78 = arith.maximumf %76, %77 : vector<32x16xf32>
    %79 = arith.truncf %78 : vector<32x16xf32> to vector<32x16xbf16>
    %c0_89 = arith.constant 0 : index
    %c0_90 = arith.constant 0 : index
    %80 = vector.load %arg6[%c0_89, %c0_90] : memref<16x64xbf16, #tpu.memory_space<vmem>>, vector<16x64xbf16>
    %cst_91 = arith.constant dense<0.000000e+00> : vector<32x64xf32>
    %81 = tpu.matmul %79, %80, %cst_91 {dimension_numbers = #tpu.dot_dimension_numbers<[1], [0], [0], [1], [0, 0, 1, 1], [], []>} : vector<32x16xbf16>, vector<16x64xbf16>, vector<32x64xf32> -> vector<32x64xf32>
    %c0_92 = arith.constant 0 : index
    %c0_93 = arith.constant 0 : index
    %82 = vector.load %arg7[%c0_92, %c0_93] : memref<1x64xf32, #tpu.memory_space<vmem>>, vector<1x64xf32>
    %83 = vector.broadcast %82 : vector<1x64xf32> to vector<32x64xf32>
    %84 = arith.addf %81, %83 : vector<32x64xf32>
    %85 = arith.addf %84, %8 : vector<32x64xf32>
    %cst_94 = arith.constant 0.000000e+00 : f32
    %86 = vector.broadcast %cst_94 : f32 to vector<32x64xf32>
    %87 = arith.maximumf %85, %86 : vector<32x64xf32>
    %88 = arith.truncf %87 : vector<32x64xf32> to vector<32x64xbf16>
    %89 = arith.extf %88 : vector<32x64xbf16> to vector<32x64xf32>
    %c0_95 = arith.constant 0 : index
    %c0_96 = arith.constant 0 : index
    %90 = vector.load %arg10[%c0_95, %c0_96] : memref<64x16xbf16, #tpu.memory_space<vmem>>, vector<64x16xbf16>
    %cst_97 = arith.constant dense<0.000000e+00> : vector<32x16xf32>
    %91 = tpu.matmul %88, %90, %cst_97 {dimension_numbers = #tpu.dot_dimension_numbers<[1], [0], [0], [1], [0, 0, 1, 1], [], []>} : vector<32x64xbf16>, vector<64x16xbf16>, vector<32x16xf32> -> vector<32x16xf32>
    %c0_98 = arith.constant 0 : index
    %c0_99 = arith.constant 0 : index
    %92 = vector.load %arg11[%c0_98, %c0_99] : memref<1x16xf32, #tpu.memory_space<vmem>>, vector<1x16xf32>
    %93 = vector.broadcast %92 : vector<1x16xf32> to vector<32x16xf32>
    %94 = arith.addf %91, %93 : vector<32x16xf32>
    %cst_100 = arith.constant 0.000000e+00 : f32
    %95 = vector.broadcast %cst_100 : f32 to vector<32x16xf32>
    %96 = arith.maximumf %94, %95 : vector<32x16xf32>
    %97 = arith.truncf %96 : vector<32x16xf32> to vector<32x16xbf16>
    %98 = vector.shape_cast %97 : vector<32x16xbf16> to vector<2x4x4x16xbf16>
    %c0_101 = arith.constant 0 : index
    %c1_102 = arith.constant 1 : index
    %c1_103 = arith.constant 1 : index
    %c0_104 = arith.constant 0 : index
    %99 = vector.load %arg23[%c0_101, %c1_102, %c1_103, %c0_104] : memref<2x6x6x16xbf16, #tpu.memory_space<vmem>>, vector<2x4x4x16xbf16>
    tpu.vector_store %arg23[%c0_101, %c1_102, %c1_103, %c0_104], %98 {strides = array<i32>} : memref<2x6x6x16xbf16, #tpu.memory_space<vmem>>, vector<2x4x4x16xbf16>,
    %cst_105 = arith.constant 0.000000e+00 : f32
    %100 = vector.broadcast %cst_105 : f32 to vector<32x16xf32>
    %c0_106 = arith.constant 0 : index
    %c0_107 = arith.constant 0 : index
    %c0_108 = arith.constant 0 : index
    %c0_109 = arith.constant 0 : index
    %101 = vector.load %arg23[%c0_106, %c0_107, %c0_108, %c0_109] : memref<2x6x6x16xbf16, #tpu.memory_space<vmem>>, vector<2x4x4x16xbf16>
    %102 = vector.shape_cast %101 : vector<2x4x4x16xbf16> to vector<32x16xbf16>
    %c0_110 = arith.constant 0 : index
    %c0_111 = arith.constant 0 : index
    %c0_112 = arith.constant 0 : index
    %103 = vector.load %arg12[%c0_110, %c0_111, %c0_112] : memref<9x16x16xbf16, #tpu.memory_space<vmem>>, vector<1x16x16xbf16>
    %104 = vector.shape_cast %103 : vector<1x16x16xbf16> to vector<16x16xbf16>
    %cst_113 = arith.constant dense<0.000000e+00> : vector<32x16xf32>
    %105 = tpu.matmul %102, %104, %cst_113 {dimension_numbers = #tpu.dot_dimension_numbers<[1], [0], [0], [1], [0, 0, 1, 1], [], []>} : vector<32x16xbf16>, vector<16x16xbf16>, vector<32x16xf32> -> vector<32x16xf32>
    %106 = arith.addf %100, %105 : vector<32x16xf32>
    %c0_114 = arith.constant 0 : index
    %c0_115 = arith.constant 0 : index
    %c1_116 = arith.constant 1 : index
    %c0_117 = arith.constant 0 : index
    %107 = vector.load %arg23[%c0_114, %c0_115, %c1_116, %c0_117] : memref<2x6x6x16xbf16, #tpu.memory_space<vmem>>, vector<2x4x4x16xbf16>
    %108 = vector.shape_cast %107 : vector<2x4x4x16xbf16> to vector<32x16xbf16>
    %c1_118 = arith.constant 1 : index
    %c0_119 = arith.constant 0 : index
    %c0_120 = arith.constant 0 : index
    %109 = vector.load %arg12[%c1_118, %c0_119, %c0_120] : memref<9x16x16xbf16, #tpu.memory_space<vmem>>, vector<1x16x16xbf16>
    %110 = vector.shape_cast %109 : vector<1x16x16xbf16> to vector<16x16xbf16>
    %cst_121 = arith.constant dense<0.000000e+00> : vector<32x16xf32>
    %111 = tpu.matmul %108, %110, %cst_121 {dimension_numbers = #tpu.dot_dimension_numbers<[1], [0], [0], [1], [0, 0, 1, 1], [], []>} : vector<32x16xbf16>, vector<16x16xbf16>, vector<32x16xf32> -> vector<32x16xf32>
    %112 = arith.addf %106, %111 : vector<32x16xf32>
    %c0_122 = arith.constant 0 : index
    %c0_123 = arith.constant 0 : index
    %c2_124 = arith.constant 2 : index
    %c0_125 = arith.constant 0 : index
    %113 = vector.load %arg23[%c0_122, %c0_123, %c2_124, %c0_125] : memref<2x6x6x16xbf16, #tpu.memory_space<vmem>>, vector<2x4x4x16xbf16>
    %114 = vector.shape_cast %113 : vector<2x4x4x16xbf16> to vector<32x16xbf16>
    %c2_126 = arith.constant 2 : index
    %c0_127 = arith.constant 0 : index
    %c0_128 = arith.constant 0 : index
    %115 = vector.load %arg12[%c2_126, %c0_127, %c0_128] : memref<9x16x16xbf16, #tpu.memory_space<vmem>>, vector<1x16x16xbf16>
    %116 = vector.shape_cast %115 : vector<1x16x16xbf16> to vector<16x16xbf16>
    %cst_129 = arith.constant dense<0.000000e+00> : vector<32x16xf32>
    %117 = tpu.matmul %114, %116, %cst_129 {dimension_numbers = #tpu.dot_dimension_numbers<[1], [0], [0], [1], [0, 0, 1, 1], [], []>} : vector<32x16xbf16>, vector<16x16xbf16>, vector<32x16xf32> -> vector<32x16xf32>
    %118 = arith.addf %112, %117 : vector<32x16xf32>
    %c0_130 = arith.constant 0 : index
    %c1_131 = arith.constant 1 : index
    %c0_132 = arith.constant 0 : index
    %c0_133 = arith.constant 0 : index
    %119 = vector.load %arg23[%c0_130, %c1_131, %c0_132, %c0_133] : memref<2x6x6x16xbf16, #tpu.memory_space<vmem>>, vector<2x4x4x16xbf16>
    %120 = vector.shape_cast %119 : vector<2x4x4x16xbf16> to vector<32x16xbf16>
    %c3_134 = arith.constant 3 : index
    %c0_135 = arith.constant 0 : index
    %c0_136 = arith.constant 0 : index
    %121 = vector.load %arg12[%c3_134, %c0_135, %c0_136] : memref<9x16x16xbf16, #tpu.memory_space<vmem>>, vector<1x16x16xbf16>
    %122 = vector.shape_cast %121 : vector<1x16x16xbf16> to vector<16x16xbf16>
    %cst_137 = arith.constant dense<0.000000e+00> : vector<32x16xf32>
    %123 = tpu.matmul %120, %122, %cst_137 {dimension_numbers = #tpu.dot_dimension_numbers<[1], [0], [0], [1], [0, 0, 1, 1], [], []>} : vector<32x16xbf16>, vector<16x16xbf16>, vector<32x16xf32> -> vector<32x16xf32>
    %124 = arith.addf %118, %123 : vector<32x16xf32>
    %c0_138 = arith.constant 0 : index
    %c1_139 = arith.constant 1 : index
    %c1_140 = arith.constant 1 : index
    %c0_141 = arith.constant 0 : index
    %125 = vector.load %arg23[%c0_138, %c1_139, %c1_140, %c0_141] : memref<2x6x6x16xbf16, #tpu.memory_space<vmem>>, vector<2x4x4x16xbf16>
    %126 = vector.shape_cast %125 : vector<2x4x4x16xbf16> to vector<32x16xbf16>
    %c4_142 = arith.constant 4 : index
    %c0_143 = arith.constant 0 : index
    %c0_144 = arith.constant 0 : index
    %127 = vector.load %arg12[%c4_142, %c0_143, %c0_144] : memref<9x16x16xbf16, #tpu.memory_space<vmem>>, vector<1x16x16xbf16>
    %128 = vector.shape_cast %127 : vector<1x16x16xbf16> to vector<16x16xbf16>
    %cst_145 = arith.constant dense<0.000000e+00> : vector<32x16xf32>
    %129 = tpu.matmul %126, %128, %cst_145 {dimension_numbers = #tpu.dot_dimension_numbers<[1], [0], [0], [1], [0, 0, 1, 1], [], []>} : vector<32x16xbf16>, vector<16x16xbf16>, vector<32x16xf32> -> vector<32x16xf32>
    %130 = arith.addf %124, %129 : vector<32x16xf32>
    %c0_146 = arith.constant 0 : index
    %c1_147 = arith.constant 1 : index
    %c2_148 = arith.constant 2 : index
    %c0_149 = arith.constant 0 : index
    %131 = vector.load %arg23[%c0_146, %c1_147, %c2_148, %c0_149] : memref<2x6x6x16xbf16, #tpu.memory_space<vmem>>, vector<2x4x4x16xbf16>
    %132 = vector.shape_cast %131 : vector<2x4x4x16xbf16> to vector<32x16xbf16>
    %c5_150 = arith.constant 5 : index
    %c0_151 = arith.constant 0 : index
    %c0_152 = arith.constant 0 : index
    %133 = vector.load %arg12[%c5_150, %c0_151, %c0_152] : memref<9x16x16xbf16, #tpu.memory_space<vmem>>, vector<1x16x16xbf16>
    %134 = vector.shape_cast %133 : vector<1x16x16xbf16> to vector<16x16xbf16>
    %cst_153 = arith.constant dense<0.000000e+00> : vector<32x16xf32>
    %135 = tpu.matmul %132, %134, %cst_153 {dimension_numbers = #tpu.dot_dimension_numbers<[1], [0], [0], [1], [0, 0, 1, 1], [], []>} : vector<32x16xbf16>, vector<16x16xbf16>, vector<32x16xf32> -> vector<32x16xf32>
    %136 = arith.addf %130, %135 : vector<32x16xf32>
    %c0_154 = arith.constant 0 : index
    %c2_155 = arith.constant 2 : index
    %c0_156 = arith.constant 0 : index
    %c0_157 = arith.constant 0 : index
    %137 = vector.load %arg23[%c0_154, %c2_155, %c0_156, %c0_157] : memref<2x6x6x16xbf16, #tpu.memory_space<vmem>>, vector<2x4x4x16xbf16>
    %138 = vector.shape_cast %137 : vector<2x4x4x16xbf16> to vector<32x16xbf16>
    %c6_158 = arith.constant 6 : index
    %c0_159 = arith.constant 0 : index
    %c0_160 = arith.constant 0 : index
    %139 = vector.load %arg12[%c6_158, %c0_159, %c0_160] : memref<9x16x16xbf16, #tpu.memory_space<vmem>>, vector<1x16x16xbf16>
    %140 = vector.shape_cast %139 : vector<1x16x16xbf16> to vector<16x16xbf16>
    %cst_161 = arith.constant dense<0.000000e+00> : vector<32x16xf32>
    %141 = tpu.matmul %138, %140, %cst_161 {dimension_numbers = #tpu.dot_dimension_numbers<[1], [0], [0], [1], [0, 0, 1, 1], [], []>} : vector<32x16xbf16>, vector<16x16xbf16>, vector<32x16xf32> -> vector<32x16xf32>
    %142 = arith.addf %136, %141 : vector<32x16xf32>
    %c0_162 = arith.constant 0 : index
    %c2_163 = arith.constant 2 : index
    %c1_164 = arith.constant 1 : index
    %c0_165 = arith.constant 0 : index
    %143 = vector.load %arg23[%c0_162, %c2_163, %c1_164, %c0_165] : memref<2x6x6x16xbf16, #tpu.memory_space<vmem>>, vector<2x4x4x16xbf16>
    %144 = vector.shape_cast %143 : vector<2x4x4x16xbf16> to vector<32x16xbf16>
    %c7_166 = arith.constant 7 : index
    %c0_167 = arith.constant 0 : index
    %c0_168 = arith.constant 0 : index
    %145 = vector.load %arg12[%c7_166, %c0_167, %c0_168] : memref<9x16x16xbf16, #tpu.memory_space<vmem>>, vector<1x16x16xbf16>
    %146 = vector.shape_cast %145 : vector<1x16x16xbf16> to vector<16x16xbf16>
    %cst_169 = arith.constant dense<0.000000e+00> : vector<32x16xf32>
    %147 = tpu.matmul %144, %146, %cst_169 {dimension_numbers = #tpu.dot_dimension_numbers<[1], [0], [0], [1], [0, 0, 1, 1], [], []>} : vector<32x16xbf16>, vector<16x16xbf16>, vector<32x16xf32> -> vector<32x16xf32>
    %148 = arith.addf %142, %147 : vector<32x16xf32>
    %c0_170 = arith.constant 0 : index
    %c2_171 = arith.constant 2 : index
    %c2_172 = arith.constant 2 : index
    %c0_173 = arith.constant 0 : index
    %149 = vector.load %arg23[%c0_170, %c2_171, %c2_172, %c0_173] : memref<2x6x6x16xbf16, #tpu.memory_space<vmem>>, vector<2x4x4x16xbf16>
    %150 = vector.shape_cast %149 : vector<2x4x4x16xbf16> to vector<32x16xbf16>
    %c8_174 = arith.constant 8 : index
    %c0_175 = arith.constant 0 : index
    %c0_176 = arith.constant 0 : index
    %151 = vector.load %arg12[%c8_174, %c0_175, %c0_176] : memref<9x16x16xbf16, #tpu.memory_space<vmem>>, vector<1x16x16xbf16>
    %152 = vector.shape_cast %151 : vector<1x16x16xbf16> to vector<16x16xbf16>
    %cst_177 = arith.constant dense<0.000000e+00> : vector<32x16xf32>
    %153 = tpu.matmul %150, %152, %cst_177 {dimension_numbers = #tpu.dot_dimension_numbers<[1], [0], [0], [1], [0, 0, 1, 1], [], []>} : vector<32x16xbf16>, vector<16x16xbf16>, vector<32x16xf32> -> vector<32x16xf32>
    %154 = arith.addf %148, %153 : vector<32x16xf32>
    %c0_178 = arith.constant 0 : index
    %c0_179 = arith.constant 0 : index
    %155 = vector.load %arg13[%c0_178, %c0_179] : memref<1x16xf32, #tpu.memory_space<vmem>>, vector<1x16xf32>
    %156 = vector.broadcast %155 : vector<1x16xf32> to vector<32x16xf32>
    %157 = arith.addf %154, %156 : vector<32x16xf32>
    %cst_180 = arith.constant 0.000000e+00 : f32
    %158 = vector.broadcast %cst_180 : f32 to vector<32x16xf32>
    %159 = arith.maximumf %157, %158 : vector<32x16xf32>
    %160 = arith.truncf %159 : vector<32x16xf32> to vector<32x16xbf16>
    %c0_181 = arith.constant 0 : index
    %c0_182 = arith.constant 0 : index
    %161 = vector.load %arg14[%c0_181, %c0_182] : memref<16x64xbf16, #tpu.memory_space<vmem>>, vector<16x64xbf16>
    %cst_183 = arith.constant dense<0.000000e+00> : vector<32x64xf32>
    %162 = tpu.matmul %160, %161, %cst_183 {dimension_numbers = #tpu.dot_dimension_numbers<[1], [0], [0], [1], [0, 0, 1, 1], [], []>} : vector<32x16xbf16>, vector<16x64xbf16>, vector<32x64xf32> -> vector<32x64xf32>
    %c0_184 = arith.constant 0 : index
    %c0_185 = arith.constant 0 : index
    %163 = vector.load %arg15[%c0_184, %c0_185] : memref<1x64xf32, #tpu.memory_space<vmem>>, vector<1x64xf32>
    %164 = vector.broadcast %163 : vector<1x64xf32> to vector<32x64xf32>
    %165 = arith.addf %162, %164 : vector<32x64xf32>
    %166 = arith.addf %165, %89 : vector<32x64xf32>
    %cst_186 = arith.constant 0.000000e+00 : f32
    %167 = vector.broadcast %cst_186 : f32 to vector<32x64xf32>
    %168 = arith.maximumf %166, %167 : vector<32x64xf32>
    %169 = arith.truncf %168 : vector<32x64xf32> to vector<32x64xbf16>
    %170 = arith.extf %169 : vector<32x64xbf16> to vector<32x64xf32>
    %c0_187 = arith.constant 0 : index
    %c0_188 = arith.constant 0 : index
    %171 = vector.load %arg16[%c0_187, %c0_188] : memref<64x16xbf16, #tpu.memory_space<vmem>>, vector<64x16xbf16>
    %cst_189 = arith.constant dense<0.000000e+00> : vector<32x16xf32>
    %172 = tpu.matmul %169, %171, %cst_189 {dimension_numbers = #tpu.dot_dimension_numbers<[1], [0], [0], [1], [0, 0, 1, 1], [], []>} : vector<32x64xbf16>, vector<64x16xbf16>, vector<32x16xf32> -> vector<32x16xf32>
    %c0_190 = arith.constant 0 : index
    %c0_191 = arith.constant 0 : index
    %173 = vector.load %arg17[%c0_190, %c0_191] : memref<1x16xf32, #tpu.memory_space<vmem>>, vector<1x16xf32>
    %174 = vector.broadcast %173 : vector<1x16xf32> to vector<32x16xf32>
    %175 = arith.addf %172, %174 : vector<32x16xf32>
    %cst_192 = arith.constant 0.000000e+00 : f32
    %176 = vector.broadcast %cst_192 : f32 to vector<32x16xf32>
    %177 = arith.maximumf %175, %176 : vector<32x16xf32>
    %178 = arith.truncf %177 : vector<32x16xf32> to vector<32x16xbf16>
    %179 = vector.shape_cast %178 : vector<32x16xbf16> to vector<2x4x4x16xbf16>
    %c0_193 = arith.constant 0 : index
    %c1_194 = arith.constant 1 : index
    %c1_195 = arith.constant 1 : index
    %c0_196 = arith.constant 0 : index
    %180 = vector.load %arg23[%c0_193, %c1_194, %c1_195, %c0_196] : memref<2x6x6x16xbf16, #tpu.memory_space<vmem>>, vector<2x4x4x16xbf16>
    tpu.vector_store %arg23[%c0_193, %c1_194, %c1_195, %c0_196], %179 {strides = array<i32>} : memref<2x6x6x16xbf16, #tpu.memory_space<vmem>>, vector<2x4x4x16xbf16>,
    %cst_197 = arith.constant 0.000000e+00 : f32
    %181 = vector.broadcast %cst_197 : f32 to vector<32x16xf32>
    %c0_198 = arith.constant 0 : index
    %c0_199 = arith.constant 0 : index
    %c0_200 = arith.constant 0 : index
    %c0_201 = arith.constant 0 : index
    %182 = vector.load %arg23[%c0_198, %c0_199, %c0_200, %c0_201] : memref<2x6x6x16xbf16, #tpu.memory_space<vmem>>, vector<2x4x4x16xbf16>
    %183 = vector.shape_cast %182 : vector<2x4x4x16xbf16> to vector<32x16xbf16>
    %c0_202 = arith.constant 0 : index
    %c0_203 = arith.constant 0 : index
    %c0_204 = arith.constant 0 : index
    %184 = vector.load %arg18[%c0_202, %c0_203, %c0_204] : memref<9x16x16xbf16, #tpu.memory_space<vmem>>, vector<1x16x16xbf16>
    %185 = vector.shape_cast %184 : vector<1x16x16xbf16> to vector<16x16xbf16>
    %cst_205 = arith.constant dense<0.000000e+00> : vector<32x16xf32>
    %186 = tpu.matmul %183, %185, %cst_205 {dimension_numbers = #tpu.dot_dimension_numbers<[1], [0], [0], [1], [0, 0, 1, 1], [], []>} : vector<32x16xbf16>, vector<16x16xbf16>, vector<32x16xf32> -> vector<32x16xf32>
    %187 = arith.addf %181, %186 : vector<32x16xf32>
    %c0_206 = arith.constant 0 : index
    %c0_207 = arith.constant 0 : index
    %c1_208 = arith.constant 1 : index
    %c0_209 = arith.constant 0 : index
    %188 = vector.load %arg23[%c0_206, %c0_207, %c1_208, %c0_209] : memref<2x6x6x16xbf16, #tpu.memory_space<vmem>>, vector<2x4x4x16xbf16>
    %189 = vector.shape_cast %188 : vector<2x4x4x16xbf16> to vector<32x16xbf16>
    %c1_210 = arith.constant 1 : index
    %c0_211 = arith.constant 0 : index
    %c0_212 = arith.constant 0 : index
    %190 = vector.load %arg18[%c1_210, %c0_211, %c0_212] : memref<9x16x16xbf16, #tpu.memory_space<vmem>>, vector<1x16x16xbf16>
    %191 = vector.shape_cast %190 : vector<1x16x16xbf16> to vector<16x16xbf16>
    %cst_213 = arith.constant dense<0.000000e+00> : vector<32x16xf32>
    %192 = tpu.matmul %189, %191, %cst_213 {dimension_numbers = #tpu.dot_dimension_numbers<[1], [0], [0], [1], [0, 0, 1, 1], [], []>} : vector<32x16xbf16>, vector<16x16xbf16>, vector<32x16xf32> -> vector<32x16xf32>
    %193 = arith.addf %187, %192 : vector<32x16xf32>
    %c0_214 = arith.constant 0 : index
    %c0_215 = arith.constant 0 : index
    %c2_216 = arith.constant 2 : index
    %c0_217 = arith.constant 0 : index
    %194 = vector.load %arg23[%c0_214, %c0_215, %c2_216, %c0_217] : memref<2x6x6x16xbf16, #tpu.memory_space<vmem>>, vector<2x4x4x16xbf16>
    %195 = vector.shape_cast %194 : vector<2x4x4x16xbf16> to vector<32x16xbf16>
    %c2_218 = arith.constant 2 : index
    %c0_219 = arith.constant 0 : index
    %c0_220 = arith.constant 0 : index
    %196 = vector.load %arg18[%c2_218, %c0_219, %c0_220] : memref<9x16x16xbf16, #tpu.memory_space<vmem>>, vector<1x16x16xbf16>
    %197 = vector.shape_cast %196 : vector<1x16x16xbf16> to vector<16x16xbf16>
    %cst_221 = arith.constant dense<0.000000e+00> : vector<32x16xf32>
    %198 = tpu.matmul %195, %197, %cst_221 {dimension_numbers = #tpu.dot_dimension_numbers<[1], [0], [0], [1], [0, 0, 1, 1], [], []>} : vector<32x16xbf16>, vector<16x16xbf16>, vector<32x16xf32> -> vector<32x16xf32>
    %199 = arith.addf %193, %198 : vector<32x16xf32>
    %c0_222 = arith.constant 0 : index
    %c1_223 = arith.constant 1 : index
    %c0_224 = arith.constant 0 : index
    %c0_225 = arith.constant 0 : index
    %200 = vector.load %arg23[%c0_222, %c1_223, %c0_224, %c0_225] : memref<2x6x6x16xbf16, #tpu.memory_space<vmem>>, vector<2x4x4x16xbf16>
    %201 = vector.shape_cast %200 : vector<2x4x4x16xbf16> to vector<32x16xbf16>
    %c3_226 = arith.constant 3 : index
    %c0_227 = arith.constant 0 : index
    %c0_228 = arith.constant 0 : index
    %202 = vector.load %arg18[%c3_226, %c0_227, %c0_228] : memref<9x16x16xbf16, #tpu.memory_space<vmem>>, vector<1x16x16xbf16>
    %203 = vector.shape_cast %202 : vector<1x16x16xbf16> to vector<16x16xbf16>
    %cst_229 = arith.constant dense<0.000000e+00> : vector<32x16xf32>
    %204 = tpu.matmul %201, %203, %cst_229 {dimension_numbers = #tpu.dot_dimension_numbers<[1], [0], [0], [1], [0, 0, 1, 1], [], []>} : vector<32x16xbf16>, vector<16x16xbf16>, vector<32x16xf32> -> vector<32x16xf32>
    %205 = arith.addf %199, %204 : vector<32x16xf32>
    %c0_230 = arith.constant 0 : index
    %c1_231 = arith.constant 1 : index
    %c1_232 = arith.constant 1 : index
    %c0_233 = arith.constant 0 : index
    %206 = vector.load %arg23[%c0_230, %c1_231, %c1_232, %c0_233] : memref<2x6x6x16xbf16, #tpu.memory_space<vmem>>, vector<2x4x4x16xbf16>
    %207 = vector.shape_cast %206 : vector<2x4x4x16xbf16> to vector<32x16xbf16>
    %c4_234 = arith.constant 4 : index
    %c0_235 = arith.constant 0 : index
    %c0_236 = arith.constant 0 : index
    %208 = vector.load %arg18[%c4_234, %c0_235, %c0_236] : memref<9x16x16xbf16, #tpu.memory_space<vmem>>, vector<1x16x16xbf16>
    %209 = vector.shape_cast %208 : vector<1x16x16xbf16> to vector<16x16xbf16>
    %cst_237 = arith.constant dense<0.000000e+00> : vector<32x16xf32>
    %210 = tpu.matmul %207, %209, %cst_237 {dimension_numbers = #tpu.dot_dimension_numbers<[1], [0], [0], [1], [0, 0, 1, 1], [], []>} : vector<32x16xbf16>, vector<16x16xbf16>, vector<32x16xf32> -> vector<32x16xf32>
    %211 = arith.addf %205, %210 : vector<32x16xf32>
    %c0_238 = arith.constant 0 : index
    %c1_239 = arith.constant 1 : index
    %c2_240 = arith.constant 2 : index
    %c0_241 = arith.constant 0 : index
    %212 = vector.load %arg23[%c0_238, %c1_239, %c2_240, %c0_241] : memref<2x6x6x16xbf16, #tpu.memory_space<vmem>>, vector<2x4x4x16xbf16>
    %213 = vector.shape_cast %212 : vector<2x4x4x16xbf16> to vector<32x16xbf16>
    %c5_242 = arith.constant 5 : index
    %c0_243 = arith.constant 0 : index
    %c0_244 = arith.constant 0 : index
    %214 = vector.load %arg18[%c5_242, %c0_243, %c0_244] : memref<9x16x16xbf16, #tpu.memory_space<vmem>>, vector<1x16x16xbf16>
    %215 = vector.shape_cast %214 : vector<1x16x16xbf16> to vector<16x16xbf16>
    %cst_245 = arith.constant dense<0.000000e+00> : vector<32x16xf32>
    %216 = tpu.matmul %213, %215, %cst_245 {dimension_numbers = #tpu.dot_dimension_numbers<[1], [0], [0], [1], [0, 0, 1, 1], [], []>} : vector<32x16xbf16>, vector<16x16xbf16>, vector<32x16xf32> -> vector<32x16xf32>
    %217 = arith.addf %211, %216 : vector<32x16xf32>
    %c0_246 = arith.constant 0 : index
    %c2_247 = arith.constant 2 : index
    %c0_248 = arith.constant 0 : index
    %c0_249 = arith.constant 0 : index
    %218 = vector.load %arg23[%c0_246, %c2_247, %c0_248, %c0_249] : memref<2x6x6x16xbf16, #tpu.memory_space<vmem>>, vector<2x4x4x16xbf16>
    %219 = vector.shape_cast %218 : vector<2x4x4x16xbf16> to vector<32x16xbf16>
    %c6_250 = arith.constant 6 : index
    %c0_251 = arith.constant 0 : index
    %c0_252 = arith.constant 0 : index
    %220 = vector.load %arg18[%c6_250, %c0_251, %c0_252] : memref<9x16x16xbf16, #tpu.memory_space<vmem>>, vector<1x16x16xbf16>
    %221 = vector.shape_cast %220 : vector<1x16x16xbf16> to vector<16x16xbf16>
    %cst_253 = arith.constant dense<0.000000e+00> : vector<32x16xf32>
    %222 = tpu.matmul %219, %221, %cst_253 {dimension_numbers = #tpu.dot_dimension_numbers<[1], [0], [0], [1], [0, 0, 1, 1], [], []>} : vector<32x16xbf16>, vector<16x16xbf16>, vector<32x16xf32> -> vector<32x16xf32>
    %223 = arith.addf %217, %222 : vector<32x16xf32>
    %c0_254 = arith.constant 0 : index
    %c2_255 = arith.constant 2 : index
    %c1_256 = arith.constant 1 : index
    %c0_257 = arith.constant 0 : index
    %224 = vector.load %arg23[%c0_254, %c2_255, %c1_256, %c0_257] : memref<2x6x6x16xbf16, #tpu.memory_space<vmem>>, vector<2x4x4x16xbf16>
    %225 = vector.shape_cast %224 : vector<2x4x4x16xbf16> to vector<32x16xbf16>
    %c7_258 = arith.constant 7 : index
    %c0_259 = arith.constant 0 : index
    %c0_260 = arith.constant 0 : index
    %226 = vector.load %arg18[%c7_258, %c0_259, %c0_260] : memref<9x16x16xbf16, #tpu.memory_space<vmem>>, vector<1x16x16xbf16>
    %227 = vector.shape_cast %226 : vector<1x16x16xbf16> to vector<16x16xbf16>
    %cst_261 = arith.constant dense<0.000000e+00> : vector<32x16xf32>
    %228 = tpu.matmul %225, %227, %cst_261 {dimension_numbers = #tpu.dot_dimension_numbers<[1], [0], [0], [1], [0, 0, 1, 1], [], []>} : vector<32x16xbf16>, vector<16x16xbf16>, vector<32x16xf32> -> vector<32x16xf32>
    %229 = arith.addf %223, %228 : vector<32x16xf32>
    %c0_262 = arith.constant 0 : index
    %c2_263 = arith.constant 2 : index
    %c2_264 = arith.constant 2 : index
    %c0_265 = arith.constant 0 : index
    %230 = vector.load %arg23[%c0_262, %c2_263, %c2_264, %c0_265] : memref<2x6x6x16xbf16, #tpu.memory_space<vmem>>, vector<2x4x4x16xbf16>
    %231 = vector.shape_cast %230 : vector<2x4x4x16xbf16> to vector<32x16xbf16>
    %c8_266 = arith.constant 8 : index
    %c0_267 = arith.constant 0 : index
    %c0_268 = arith.constant 0 : index
    %232 = vector.load %arg18[%c8_266, %c0_267, %c0_268] : memref<9x16x16xbf16, #tpu.memory_space<vmem>>, vector<1x16x16xbf16>
    %233 = vector.shape_cast %232 : vector<1x16x16xbf16> to vector<16x16xbf16>
    %cst_269 = arith.constant dense<0.000000e+00> : vector<32x16xf32>
    %234 = tpu.matmul %231, %233, %cst_269 {dimension_numbers = #tpu.dot_dimension_numbers<[1], [0], [0], [1], [0, 0, 1, 1], [], []>} : vector<32x16xbf16>, vector<16x16xbf16>, vector<32x16xf32> -> vector<32x16xf32>
    %235 = arith.addf %229, %234 : vector<32x16xf32>
    %c0_270 = arith.constant 0 : index
    %c0_271 = arith.constant 0 : index
    %236 = vector.load %arg19[%c0_270, %c0_271] : memref<1x16xf32, #tpu.memory_space<vmem>>, vector<1x16xf32>
    %237 = vector.broadcast %236 : vector<1x16xf32> to vector<32x16xf32>
    %238 = arith.addf %235, %237 : vector<32x16xf32>
    %cst_272 = arith.constant 0.000000e+00 : f32
    %239 = vector.broadcast %cst_272 : f32 to vector<32x16xf32>
    %240 = arith.maximumf %238, %239 : vector<32x16xf32>
    %241 = arith.truncf %240 : vector<32x16xf32> to vector<32x16xbf16>
    %c0_273 = arith.constant 0 : index
    %c0_274 = arith.constant 0 : index
    %242 = vector.load %arg20[%c0_273, %c0_274] : memref<16x64xbf16, #tpu.memory_space<vmem>>, vector<16x64xbf16>
    %cst_275 = arith.constant dense<0.000000e+00> : vector<32x64xf32>
    %243 = tpu.matmul %241, %242, %cst_275 {dimension_numbers = #tpu.dot_dimension_numbers<[1], [0], [0], [1], [0, 0, 1, 1], [], []>} : vector<32x16xbf16>, vector<16x64xbf16>, vector<32x64xf32> -> vector<32x64xf32>
    %c0_276 = arith.constant 0 : index
    %c0_277 = arith.constant 0 : index
    %244 = vector.load %arg21[%c0_276, %c0_277] : memref<1x64xf32, #tpu.memory_space<vmem>>, vector<1x64xf32>
    %245 = vector.broadcast %244 : vector<1x64xf32> to vector<32x64xf32>
    %246 = arith.addf %243, %245 : vector<32x64xf32>
    %247 = arith.addf %246, %170 : vector<32x64xf32>
    %cst_278 = arith.constant 0.000000e+00 : f32
    %248 = vector.broadcast %cst_278 : f32 to vector<32x64xf32>
    %249 = arith.maximumf %247, %248 : vector<32x64xf32>
    %250 = vector.shape_cast %249 : vector<32x64xf32> to vector<2x16x64xf32>
    %c0_279 = arith.constant 0 : index
    %c0_280 = arith.constant 0 : index
    %c0_281 = arith.constant 0 : index
    %251 = vector.load %arg22[%c0_279, %c0_280, %c0_281] : memref<2x16x64xf32, #tpu.memory_space<vmem>>, vector<2x16x64xf32>
    tpu.vector_store %arg22[%c0_279, %c0_280, %c0_281], %250 {strides = array<i32>} : memref<2x16x64xf32, #tpu.memory_space<vmem>>, vector<2x16x64xf32>,
    return
  }
  func.func @transform_0(%arg0: i32) -> (i32, i32, i32) {
    %c0_i32 = arith.constant 0 : i32
    %c0_i32_0 = arith.constant 0 : i32
    %c0_i32_1 = arith.constant 0 : i32
    return %arg0, %c0_i32, %c0_i32_0 : i32, i32, i32
  }
  func.func @transform_1(%arg0: i32) -> (i32, i32) {
    %c0_i32 = arith.constant 0 : i32
    %c0_i32_0 = arith.constant 0 : i32
    %c0_i32_1 = arith.constant 0 : i32
    return %c0_i32, %c0_i32_0 : i32, i32
  }
  func.func @transform_2(%arg0: i32) -> (i32, i32) {
    %c0_i32 = arith.constant 0 : i32
    %c0_i32_0 = arith.constant 0 : i32
    %c0_i32_1 = arith.constant 0 : i32
    return %c0_i32, %c0_i32_0 : i32, i32
  }
  func.func @transform_3(%arg0: i32) -> (i32, i32, i32) {
    %c0_i32 = arith.constant 0 : i32
    %c0_i32_0 = arith.constant 0 : i32
    %c0_i32_1 = arith.constant 0 : i32
    %c0_i32_2 = arith.constant 0 : i32
    return %c0_i32, %c0_i32_0, %c0_i32_1 : i32, i32, i32
  }
  func.func @transform_4(%arg0: i32) -> (i32, i32) {
    %c0_i32 = arith.constant 0 : i32
    %c0_i32_0 = arith.constant 0 : i32
    %c0_i32_1 = arith.constant 0 : i32
    return %c0_i32, %c0_i32_0 : i32, i32
  }
  func.func @transform_5(%arg0: i32) -> (i32, i32) {
    %c0_i32 = arith.constant 0 : i32
    %c0_i32_0 = arith.constant 0 : i32
    %c0_i32_1 = arith.constant 0 : i32
    return %c0_i32, %c0_i32_0 : i32, i32
  }
  func.func @transform_6(%arg0: i32) -> (i32, i32) {
    %c0_i32 = arith.constant 0 : i32
    %c0_i32_0 = arith.constant 0 : i32
    %c0_i32_1 = arith.constant 0 : i32
    return %c0_i32, %c0_i32_0 : i32, i32
  }
  func.func @transform_7(%arg0: i32) -> (i32, i32) {
    %c0_i32 = arith.constant 0 : i32
    %c0_i32_0 = arith.constant 0 : i32
    %c0_i32_1 = arith.constant 0 : i32
    return %c0_i32, %c0_i32_0 : i32, i32
  }
  func.func @transform_8(%arg0: i32) -> (i32, i32) {
    %c0_i32 = arith.constant 0 : i32
    %c0_i32_0 = arith.constant 0 : i32
    %c0_i32_1 = arith.constant 0 : i32
    return %c0_i32, %c0_i32_0 : i32, i32
  }
  func.func @transform_9(%arg0: i32) -> (i32, i32) {
    %c0_i32 = arith.constant 0 : i32
    %c0_i32_0 = arith.constant 0 : i32
    %c0_i32_1 = arith.constant 0 : i32
    return %c0_i32, %c0_i32_0 : i32, i32
  }
  func.func @transform_10(%arg0: i32) -> (i32, i32) {
    %c0_i32 = arith.constant 0 : i32
    %c0_i32_0 = arith.constant 0 : i32
    %c0_i32_1 = arith.constant 0 : i32
    return %c0_i32, %c0_i32_0 : i32, i32
  }
  func.func @transform_11(%arg0: i32) -> (i32, i32, i32) {
    %c0_i32 = arith.constant 0 : i32
    %c0_i32_0 = arith.constant 0 : i32
    %c0_i32_1 = arith.constant 0 : i32
    %c0_i32_2 = arith.constant 0 : i32
    return %c0_i32, %c0_i32_0, %c0_i32_1 : i32, i32, i32
  }
  func.func @transform_12(%arg0: i32) -> (i32, i32) {
    %c0_i32 = arith.constant 0 : i32
    %c0_i32_0 = arith.constant 0 : i32
    %c0_i32_1 = arith.constant 0 : i32
    return %c0_i32, %c0_i32_0 : i32, i32
  }
  func.func @transform_13(%arg0: i32) -> (i32, i32) {
    %c0_i32 = arith.constant 0 : i32
    %c0_i32_0 = arith.constant 0 : i32
    %c0_i32_1 = arith.constant 0 : i32
    return %c0_i32, %c0_i32_0 : i32, i32
  }
  func.func @transform_14(%arg0: i32) -> (i32, i32) {
    %c0_i32 = arith.constant 0 : i32
    %c0_i32_0 = arith.constant 0 : i32
    %c0_i32_1 = arith.constant 0 : i32
    return %c0_i32, %c0_i32_0 : i32, i32
  }
  func.func @transform_15(%arg0: i32) -> (i32, i32) {
    %c0_i32 = arith.constant 0 : i32
    %c0_i32_0 = arith.constant 0 : i32
    %c0_i32_1 = arith.constant 0 : i32
    return %c0_i32, %c0_i32_0 : i32, i32
  }
  func.func @transform_16(%arg0: i32) -> (i32, i32) {
    %c0_i32 = arith.constant 0 : i32
    %c0_i32_0 = arith.constant 0 : i32
    %c0_i32_1 = arith.constant 0 : i32
    return %c0_i32, %c0_i32_0 : i32, i32
  }
  func.func @transform_17(%arg0: i32) -> (i32, i32, i32) {
    %c0_i32 = arith.constant 0 : i32
    %c0_i32_0 = arith.constant 0 : i32
    %c0_i32_1 = arith.constant 0 : i32
    %c0_i32_2 = arith.constant 0 : i32
    return %c0_i32, %c0_i32_0, %c0_i32_1 : i32, i32, i32
  }
  func.func @transform_18(%arg0: i32) -> (i32, i32) {
    %c0_i32 = arith.constant 0 : i32
    %c0_i32_0 = arith.constant 0 : i32
    %c0_i32_1 = arith.constant 0 : i32
    return %c0_i32, %c0_i32_0 : i32, i32
  }
  func.func @transform_19(%arg0: i32) -> (i32, i32) {
    %c0_i32 = arith.constant 0 : i32
    %c0_i32_0 = arith.constant 0 : i32
    %c0_i32_1 = arith.constant 0 : i32
    return %c0_i32, %c0_i32_0 : i32, i32
  }
  func.func @transform_20(%arg0: i32) -> (i32, i32) {
    %c0_i32 = arith.constant 0 : i32
    %c0_i32_0 = arith.constant 0 : i32
    %c0_i32_1 = arith.constant 0 : i32
    return %c0_i32, %c0_i32_0 : i32, i32
  }
  func.func @transform_21(%arg0: i32) -> (i32, i32, i32) {
    %c0_i32 = arith.constant 0 : i32
    %c0_i32_0 = arith.constant 0 : i32
    %c0_i32_1 = arith.constant 0 : i32
    return %arg0, %c0_i32, %c0_i32_0 : i32, i32, i32
  }
}

</mosaic_0001>

<llo_original>
// kernel: forward.2
$region0: #{forward.2}
  #allocation0 [shape = 'u32[]', space=smem, size = 0x4, offset = 0x4, fixed_abs, tag = 'smem constant byte address 0x4 - core index']
  #allocation1 [shape = 'u32[72,128]{1,0:T(1,128)}', space=vmem, size = 0x9000, scoped, tag = 'internal scratch']
  #allocation2 [shape = 's32[1]{0}', space=sflag, size = 0x4, scoped, tag = 'scoped memory for forward.2']
  #allocation3 [shape = 'u8[512]{0}', space=smem, size = 0x200, scoped, tag = 'prefetched SMEM operand 0']
  %s0 = inlined_call_operand.vmem [shape: s32[4], index: 0, kind: input, shape index: {}]
  %s1 = inlined_call_operand.vmem [shape: f32[4,80,256], index: 1, kind: input, shape index: {}]
  %s2 = inlined_call_operand.vmem [shape: f32[2,256,32], index: 2, kind: input, shape index: {}]
  %s3 = inlined_call_operand.hbm [shape: f32[4,64,32], index: 3, kind: output, shape index: {0}]
  %s4 = inlined_call_operand.vmem [shape: bf16[4,16,32], index: 4, kind: output, shape index: {1}]
  %5 = xla_tuple %s3, %s4
  %s6 = sld [smem:[#allocation0]]
  $region49: #{forward.2} parent=0
    _
  %s8 = ssub.s32 1, %s6
  %s9 = scalar_select 0, %s8, %s6
  %s11 = sshll.u32 %s0, 4
  %s12 = int_to_ptr.vmem [resolvable:$true] %s11
  %14 = dma.vmem_to_smem %s12, 16, [#allocation3], [#allocation2]
  %16 = dma.done [#allocation2], 16
  %17 = sfence
  $region1: #{forward.2} parent=0
    #allocation4 [shape = 'u8[65536]{0}', space=vmem, size = 0x10000, scoped, tag = 'output window, operand 0']
    #allocation5 [shape = 's32[2]{0}', space=sflag, size = 0x8, scoped, tag = 'scoped memory for forward.2']
    %18 = vsyncpa [#allocation5], 0
    %s19 = scalar_lea.sflag [#allocation5], 1
    %20 = vsyncpa %s19, 0
    loop: start=0, step=1, limit=6
    $region2: #{forward.2} parent=1 // loop_pre_header
      _
    $region3: #{forward.2} parent=1 // loop_header
      %s22 = sphi 0, %s26
      %p23 = scmp.ge.s32.totalorder %s22, 6
      %s32 = sphi 0, %s34
      %s35 = sphi 0, %s32
      %s36 = sphi 0, %s35
      %s52 = sphi 0, %s36
      %s60 = sphi 0, %s62
      %s63 = sphi 0, %s60
      %s64 = sphi 0, %s63
      %s80 = sphi 0, %s64
      %s86 = sphi 0, %s88
      %s89 = sphi 0, %s86
      %s90 = sphi 0, %s89
      %s106 = sphi 0, %s90
      %s112 = sphi 0, %s114
      %s115 = sphi 0, %s112
      %s116 = sphi 0, %s115
      %s132 = sphi 0, %s116
    $region4: #{forward.2} parent=1 // loop_header_branch
      %25 = sbr.rel (%p23) target = $region8
    $region5: #{forward.2} parent=1 // loop_body
      %s27 = ssub.s32 %s22, 1
      %s28 = ssub.s32 %s22, 2
      %s29 = sadd.s32 %s22, 1
      %s30 = ssub.s32 %s22, %s29
      %p31 = scmp.eq.s32.totalorder %s30, 0
      %s33 = sadd.s32 %s32, 1
      %s34 = scalar_select %p31, %s32, %s33
      %p37 = pneg %p31
      %p38 = scmp.eq.s32.totalorder %s22, 3
      %p39 = por %p37, %p38
      %p40 = scmp.ne.s32.totalorder %s32, %s35
      %p41 = scmp.eq.s32.totalorder %s22, 0
      %p42 = por %p40, %p41
      %p43 = scmp.ne.s32.totalorder %s32, %s35
      %p44 = scmp.eq.s32.totalorder %s27, 3
      %p45 = por %p43, %p44
      %p46 = scmp.ne.s32.totalorder %s35, %s36
      %p47 = scmp.eq.s32.totalorder %s27, 0
      %p48 = por %p46, %p47
      %p49 = scmp.ne.s32.totalorder %s35, %s36
      %p50 = scmp.eq.s32.totalorder %s28, 3
      %p51 = por %p49, %p50
      %p53 = scmp.ne.s32.totalorder %s36, %s52
      %p54 = scmp.eq.s32.totalorder %s28, 0
      %p55 = por %p53, %p54
      %s56 = sld [smem:[#allocation3 + %s22]]
      %s57 = sld [smem:[#allocation3 + %s29]]
      %s58 = ssub.s32 %s56, %s57
      %p59 = scmp.eq.s32.totalorder %s58, 0
      %s61 = sadd.s32 %s60, 1
      %s62 = scalar_select %p59, %s60, %s61
      %p65 = pneg %p59
      %p66 = scmp.eq.s32.totalorder %s22, 3
      %p67 = por %p65, %p66
      %p68 = scmp.ne.s32.totalorder %s60, %s63
      %p69 = scmp.eq.s32.totalorder %s22, 0
      %p70 = por %p68, %p69
      %p71 = scmp.ne.s32.totalorder %s60, %s63
      %p72 = scmp.eq.s32.totalorder %s27, 3
      %p73 = por %p71, %p72
      %p74 = scmp.ne.s32.totalorder %s63, %s64
      %p75 = scmp.eq.s32.totalorder %s27, 0
      %p76 = por %p74, %p75
      %p77 = scmp.ne.s32.totalorder %s63, %s64
      %p78 = scmp.eq.s32.totalorder %s28, 3
      %p79 = por %p77, %p78
      %p81 = scmp.ne.s32.totalorder %s64, %s80
      %p82 = scmp.eq.s32.totalorder %s28, 0
      %p83 = por %p81, %p82
      %s84 = ssub.s32 %s22, %s29
      %p85 = scmp.eq.s32.totalorder %s84, 0
      %s87 = sadd.s32 %s86, 1
      %s88 = scalar_select %p85, %s86, %s87
      %p91 = pneg %p85
      %p92 = scmp.eq.s32.totalorder %s22, 3
      %p93 = por %p91, %p92
      %p94 = scmp.ne.s32.totalorder %s86, %s89
      %p95 = scmp.eq.s32.totalorder %s22, 0
      %p96 = por %p94, %p95
      %p97 = scmp.ne.s32.totalorder %s86, %s89
      %p98 = scmp.eq.s32.totalorder %s27, 3
      %p99 = por %p97, %p98
      %p100 = scmp.ne.s32.totalorder %s89, %s90
      %p101 = scmp.eq.s32.totalorder %s27, 0
      %p102 = por %p100, %p101
      %p103 = scmp.ne.s32.totalorder %s89, %s90
      %p104 = scmp.eq.s32.totalorder %s28, 3
      %p105 = por %p103, %p104
      %p107 = scmp.ne.s32.totalorder %s90, %s106
      %p108 = scmp.eq.s32.totalorder %s28, 0
      %p109 = por %p107, %p108
      %s110 = ssub.s32 %s22, %s29
      %p111 = scmp.eq.s32.totalorder %s110, 0
      %s113 = sadd.s32 %s112, 1
      %s114 = scalar_select %p111, %s112, %s113
      %p117 = pneg %p111
      %p118 = scmp.eq.s32.totalorder %s22, 3
      %p119 = por %p117, %p118
      %p120 = scmp.ne.s32.totalorder %s112, %s115
      %p121 = scmp.eq.s32.totalorder %s22, 0
      %p122 = por %p120, %p121
      %p123 = scmp.ne.s32.totalorder %s112, %s115
      %p124 = scmp.eq.s32.totalorder %s27, 3
      %p125 = por %p123, %p124
      %p126 = scmp.ne.s32.totalorder %s115, %s116
      %p127 = scmp.eq.s32.totalorder %s27, 0
      %p128 = por %p126, %p127
      %p129 = scmp.ne.s32.totalorder %s115, %s116
      %p130 = scmp.eq.s32.totalorder %s28, 3
      %p131 = por %p129, %p130
      %p133 = scmp.ne.s32.totalorder %s116, %s132
      %p134 = scmp.eq.s32.totalorder %s28, 0
      %p135 = por %p133, %p134
      %p136 = scmp.le.s32.totalorder 1, %s22
      %p137 = scmp.lt.s32.totalorder %s22, 5
      %p138 = pnand %p136, %p137
      %p139 = pneg %p138
      // Predicated region
      $region9: #{forward.2} parent=5 // pred_check
        _
      $region10: #{forward.2} parent=5 // pred_check_branch
        %141 = sbr.rel (%p138) target = $region12
      $region11: #{forward.2} parent=5 // pred_region
        %s142 = ssub.s32 %s22, 1
      $region12: #{forward.2} parent=5 // pred_fallthru
        _
      %p143 = scmp.lt.s32.totalorder %s22, 4
      // Predicated region
      $region13: #{forward.2} parent=5 // pred_check
        %p144 = pneg %p143
      $region14: #{forward.2} parent=5 // pred_check_branch
        %146 = sbr.rel (%p144) target = $region16
      $region15: #{forward.2} parent=5 // pred_region
        // Predicated region
        $region17: #{forward.2} parent=15 // pred_check
          %p147 = pneg %p42
        $region18: #{forward.2} parent=15 // pred_check_branch
          %149 = sbr.rel (%p147) target = $region20
        $region19: #{forward.2} parent=15 // pred_region
          %p150 = scmp.lt.s32.totalorder %s22, 3
          %s151 = scalar_select %p150, %s22, 3
          %s152 = smul.addr %s151, 20
          %s153 = smul.addr %s152, 8
          %s154 = scalar_lea.vmem %s1, %s153
        $region20: #{forward.2} parent=15 // pred_fallthru
          _
        // Predicated region
        $region21: #{forward.2} parent=15 // pred_check
          %p155 = pneg %p70
        $region22: #{forward.2} parent=15 // pred_check_branch
          %157 = sbr.rel (%p155) target = $region24
        $region23: #{forward.2} parent=15 // pred_region
          %s158 = sld [smem:[#allocation3 + %s22]]
          %p159 = scmp.lt.s32.totalorder %s158, 1
          %s160 = scalar_select %p159, %s158, 1
          %s161 = smul.addr %s160, 32
          %s162 = smul.addr %s161, 8
          %s163 = scalar_lea.vmem %s2, %s162
          %s164 = sld [smem:[#allocation3 + %s22]]
        $region24: #{forward.2} parent=15 // pred_fallthru
          _
      $region16: #{forward.2} parent=5 // pred_fallthru
        _
      %p165 = scmp.le.s32.totalorder 1, %s22
      %p166 = scmp.lt.s32.totalorder %s22, 5
      %p167 = pnand %p165, %p166
      %p168 = pneg %p167
      // Predicated region
      $region25: #{forward.2} parent=5 // pred_check
        _
      $region26: #{forward.2} parent=5 // pred_check_branch
        %170 = sbr.rel (%p167) target = $region28
      $region27: #{forward.2} parent=5 // pred_region
        %s171 = ssub.s32 %s22, 1
        %p172 = scmp.lt.s32.totalorder %s27, 3
        %s173 = scalar_select %p172, %s27, 3
        %s174 = smul.addr %s173, 20
        %s175 = smul.addr %s174, 8
        %s176 = scalar_lea.vmem %s1, %s175
        %p177 = pneg %p48
        %p178 = pneg %p45
        %s179 = sld [smem:[#allocation3 + %s27]]
        %p180 = scmp.lt.s32.totalorder %s179, 1
        %s181 = scalar_select %p180, %s179, 1
        %s182 = smul.addr %s181, 32
        %s183 = smul.addr %s182, 8
        %s184 = scalar_lea.vmem %s2, %s183
        %p185 = pneg %p76
        %p186 = pneg %p73
        %p187 = pneg %p102
        %p188 = pneg %p99
        %s189 = sand.u32 %s89, 1
        %s190 = scalar_lea.sflag [#allocation5], %s189
        %s191 = sand.u32 %s89, 1
        %s192 = smul.addr %s191, 64
        %s193 = scalar_lea.vmem [#allocation4], %s192
        %p194 = pneg %p128
        %p195 = pneg %p125
        %p196 = scmp.lt.s32.totalorder %s27, 3
        %s197 = scalar_select %p196, %s27, 3
        %s198 = smul.addr %s197, 2
        %s199 = smul.addr %s198, 4
        %s200 = scalar_lea.vmem %s4, %s199
        %p201 = scmp.lt.s32.totalorder %s27, 3
        %s202 = scalar_select %p201, %s27, 3
        %s203 = smul.addr %s202, 20
        %s204 = smul.addr %s203, 8
        %s205 = scalar_lea.vmem %s1, %s204
        %s206 = sld [smem:[#allocation3 + %s27]]
        %p207 = scmp.lt.s32.totalorder %s206, 1
        %s208 = scalar_select %p207, %s206, 1
        %s209 = smul.addr %s208, 32
        %s210 = smul.addr %s209, 8
        %s211 = scalar_lea.vmem %s2, %s210
        %s212 = sld [smem:[#allocation3 + %s27]]
        %p213 = scmp.lt.s32.totalorder %s27, 3
        %s214 = scalar_select %p213, %s27, 3
        %s215 = smul.addr %s214, 2
        %s216 = smul.addr %s215, 4
        %s217 = scalar_lea.vmem %s4, %s216
        %v218 = vld [vmem:[%s205] sm:$0xff]
        %v219 = vld [vmem:[%s205 + $0x8] sm:$0xff]
        %v220 = vld [vmem:[%s205 + $0x10] sm:$0xff]
        %v221 = vld [vmem:[%s205 + $0x18] sm:$0xff]
        %v222 = vld [vmem:[%s205 + $0x20] sm:$0xff]
        %v223 = vld [vmem:[%s205 + $0x28] sm:$0xff]
        %v224 = vld [vmem:[%s205 + $0x30] sm:$0xff]
        %v225 = vld [vmem:[%s205 + $0x38] sm:$0xff]
        %v226 = vld [vmem:[%s205 + $0x40] sm:$0xff]
        %v227 = vld [vmem:[%s205 + $0x48] sm:$0xff]
        %v228 = vld [vmem:[%s205 + $0x50] sm:$0xff]
        %v229 = vld [vmem:[%s205 + $0x58] sm:$0xff]
        %v230 = vld [vmem:[%s205 + $0x60] sm:$0xff]
        %v231 = vld [vmem:[%s205 + $0x68] sm:$0xff]
        %v232 = vld [vmem:[%s205 + $0x70] sm:$0xff]
        %v233 = vld [vmem:[%s205 + $0x78] sm:$0xff]
        %v234 = vld [vmem:[%s205 + $0x80] sm:$0xff]
        %v235 = vld [vmem:[%s205 + $0x88] sm:$0xff]
        %v236 = vld [vmem:[%s205 + $0x90] sm:$0xff]
        %v237 = vld [vmem:[%s205 + $0x98] sm:$0xff]
        %v238 = vld [vmem:[%s211] sm:$0xff]
        %v239 = vld [vmem:[%s211 + $0x8] sm:$0xff]
        %v240 = vld [vmem:[%s211 + $0x10] sm:$0xff]
        %v241 = vld [vmem:[%s211 + $0x18] sm:$0xff]
        %v242 = vld [vmem:[%s211 + $0x20] sm:$0xff]
        %v243 = vld [vmem:[%s211 + $0x28] sm:$0xff]
        %v244 = vld [vmem:[%s211 + $0x30] sm:$0xff]
        %v245 = vld [vmem:[%s211 + $0x38] sm:$0xff]
        %v246 = vld [vmem:[%s211 + $0x40] sm:$0xff]
        %v247 = vld [vmem:[%s211 + $0x48] sm:$0xff]
        %v248 = vld [vmem:[%s211 + $0x50] sm:$0xff]
        %v249 = vld [vmem:[%s211 + $0x58] sm:$0xff]
        %v250 = vld [vmem:[%s211 + $0x60] sm:$0xff]
        %v251 = vld [vmem:[%s211 + $0x68] sm:$0xff]
        %v252 = vld [vmem:[%s211 + $0x70] sm:$0xff]
        %v253 = vld [vmem:[%s211 + $0x78] sm:$0xff]
        %v254 = vld [vmem:[%s211 + $0x80] sm:$0xff]
        %v255 = vld [vmem:[%s211 + $0x88] sm:$0xff]
        %v256 = vld [vmem:[%s211 + $0x90] sm:$0xff]
        %v257 = vld [vmem:[%s211 + $0x98] sm:$0xff]
        %v258 = vld [vmem:[%s211 + $0xa0] sm:$0xff]
        %v259 = vld [vmem:[%s211 + $0xa8] sm:$0xff]
        %v260 = vld [vmem:[%s211 + $0xb0] sm:$0xff]
        %v261 = vld [vmem:[%s211 + $0xb8] sm:$0xff]
        %v262 = vld [vmem:[%s211 + $0xc0] sm:$0xff]
        %v263 = vld [vmem:[%s211 + $0xc8] sm:$0xff]
        %v264 = vld [vmem:[%s211 + $0xd0] sm:$0xff]
        %v265 = vld [vmem:[%s211 + $0xd8] sm:$0xff]
        %v266 = vld [vmem:[%s211 + $0xe0] sm:$0xff]
        %v267 = vld [vmem:[%s211 + $0xe8] sm:$0xff]
        %v268 = vld [vmem:[%s211 + $0xf0] sm:$0xff]
        %v269 = vld [vmem:[%s211 + $0xf8] sm:$0xff]
        %270 = vmatpush.msra.mxu0 %v253
        %271 = vmatpush.msra.mxu0 %v252
        %272 = vmatpush.msra.mxu0 %v251
        %273 = vmatpush.msra.mxu0 %v250
        %274 = vmatpush.msra.mxu0 %v249
        %275 = vmatpush.msra.mxu0 %v248
        %276 = vmatpush.msra.mxu0 %v247
        %277 = vmatpush.msra.mxu0 %v246
        %278 = vmatpush.msra.mxu0 %v245
        %279 = vmatpush.msra.mxu0 %v244
        %280 = vmatpush.msra.mxu0 %v243
        %281 = vmatpush.msra.mxu0 %v242
        %282 = vmatpush.msra.mxu0 %v241
        %283 = vmatpush.msra.mxu0 %v240
        %284 = vmatpush.msra.mxu0 %v239
        %285 = vmatpush.msra.mxu0 %v238
        %286 = vmatmul.f32.gmra.mxu0 %v218
        %v287 = vpop.f32.mrf.mxu0
        %v288 = vadd.f32 0.0, %v287
        %289 = vmatmul.f32.gmra.mxu0 %v220
        %v290 = vpop.f32.mrf.mxu0
        %v291 = vadd.f32 0.0, %v290
        %292 = vmatmul.f32.gmra.mxu0 %v222
        %v293 = vpop.f32.mrf.mxu0
        %v294 = vadd.f32 0.0, %v293
        %295 = vmatmul.f32.gmra.mxu0 %v224
        %v296 = vpop.f32.mrf.mxu0
        %v297 = vadd.f32 0.0, %v296
        %298 = vmatmul.f32.gmra.mxu0 %v226
        %v299 = vpop.f32.mrf.mxu0
        %v300 = vadd.f32 0.0, %v299
        %301 = vmatmul.f32.gmra.mxu0 %v228
        %v302 = vpop.f32.mrf.mxu0
        %v303 = vadd.f32 0.0, %v302
        %304 = vmatmul.f32.gmra.mxu0 %v230
        %v305 = vpop.f32.mrf.mxu0
        %v306 = vadd.f32 0.0, %v305
        %307 = vmatmul.f32.gmra.mxu0 %v232
        %v308 = vpop.f32.mrf.mxu0
        %v309 = vadd.f32 0.0, %v308
        %310 = vmatmul.f32.gmra.mxu0 %v234
        %v311 = vpop.f32.mrf.mxu0
        %v312 = vadd.f32 0.0, %v311
        %313 = vmatmul.f32.gmra.mxu0 %v236
        %v314 = vpop.f32.mrf.mxu0
        %v315 = vadd.f32 0.0, %v314
        %316 = vdwg.mxu0
        %317 = vmatpush.msra.mxu0 %v269
        %318 = vmatpush.msra.mxu0 %v268
        %319 = vmatpush.msra.mxu0 %v267
        %320 = vmatpush.msra.mxu0 %v266
        %321 = vmatpush.msra.mxu0 %v265
        %322 = vmatpush.msra.mxu0 %v264
        %323 = vmatpush.msra.mxu0 %v263
        %324 = vmatpush.msra.mxu0 %v262
        %325 = vmatpush.msra.mxu0 %v261
        %326 = vmatpush.msra.mxu0 %v260
        %327 = vmatpush.msra.mxu0 %v259
        %328 = vmatpush.msra.mxu0 %v258
        %329 = vmatpush.msra.mxu0 %v257
        %330 = vmatpush.msra.mxu0 %v256
        %331 = vmatpush.msra.mxu0 %v255
        %332 = vmatpush.msra.mxu0 %v254
        %333 = vmatmul.f32.gmra.mxu0 %v219
        %v334 = vpop.f32.mrf.mxu0
        %v335 = vadd.f32 %v288, %v334
        %336 = vmatmul.f32.gmra.mxu0 %v221
        %v337 = vpop.f32.mrf.mxu0
        %v338 = vadd.f32 %v291, %v337
        %339 = vmatmul.f32.gmra.mxu0 %v223
        %v340 = vpop.f32.mrf.mxu0
        %v341 = vadd.f32 %v294, %v340
        %342 = vmatmul.f32.gmra.mxu0 %v225
        %v343 = vpop.f32.mrf.mxu0
        %v344 = vadd.f32 %v297, %v343
        %345 = vmatmul.f32.gmra.mxu0 %v227
        %v346 = vpop.f32.mrf.mxu0
        %v347 = vadd.f32 %v300, %v346
        %348 = vmatmul.f32.gmra.mxu0 %v229
        %v349 = vpop.f32.mrf.mxu0
        %v350 = vadd.f32 %v303, %v349
        %351 = vmatmul.f32.gmra.mxu0 %v231
        %v352 = vpop.f32.mrf.mxu0
        %v353 = vadd.f32 %v306, %v352
        %354 = vmatmul.f32.gmra.mxu0 %v233
        %v355 = vpop.f32.mrf.mxu0
        %v356 = vadd.f32 %v309, %v355
        %357 = vmatmul.f32.gmra.mxu0 %v235
        %v358 = vpop.f32.mrf.mxu0
        %v359 = vadd.f32 %v312, %v358
        %360 = vmatmul.f32.gmra.mxu0 %v237
        %v361 = vpop.f32.mrf.mxu0
        %v362 = vadd.f32 %v315, %v361
        %363 = vdwg.mxu0
        %vm364 = vcmask 261120
        %365 = vst.msk [vmem:[%s193] sm:$0xff] %vm364, %v335
        %366 = vst.msk [vmem:[%s193 + $0x8] sm:$0xff] %vm364, %v338
        %367 = vst.msk [vmem:[%s193 + $0x10] sm:$0xff] %vm364, %v341
        %368 = vst.msk [vmem:[%s193 + $0x18] sm:$0xff] %vm364, %v344
        %369 = vst.msk [vmem:[%s193 + $0x20] sm:$0xff] %vm364, %v347
        %370 = vst.msk [vmem:[%s193 + $0x28] sm:$0xff] %vm364, %v350
        %371 = vst.msk [vmem:[%s193 + $0x30] sm:$0xff] %vm364, %v353
        %372 = vst.msk [vmem:[%s193 + $0x38] sm:$0xff] %vm364, %v356
        %v373 = vpack.c.bf16 %v359, %v359
        %v374 = vpack.c.bf16 %v362, %v362
        %vm375 = vcmask 257024
        %376 = vst.msk [vmem:[%s217] sm:$0xf] %vm375, %v373
        %377 = vst.msk [vmem:[%s217 + $0x4] sm:$0xf] %vm375, %v374
        %s378 = sand.u32 %s89, 1
        %s379 = scalar_lea.sflag [#allocation5], %s378
        %s380 = sand.u32 %s89, 1
        %s381 = smul.addr %s380, 64
        %s382 = scalar_lea.vmem [#allocation4], %s381
        %p383 = scmp.lt.s32.totalorder %s27, 3
        %s384 = scalar_select %p383, %s27, 3
        %s385 = smul.addr %s384, 2
        %s386 = smul.addr %s385, 4
        %s387 = scalar_lea.vmem %s4, %s386
        // Predicated region
        $region29: #{forward.2} parent=27 // pred_check
          %p388 = pneg %p99
        $region30: #{forward.2} parent=27 // pred_check_branch
          %390 = sbr.rel (%p388) target = $region32
        $region31: #{forward.2} parent=27 // pred_region
          %392 = vsyncadd %s379, 0
          %s393 = smul.addr %s27, 8
          %s394 = smul.addr %s393, 8
          %s395 = scalar_lea.hbm %s3, %s394
          %s396 = sshll.u32 %s382, 4
          %s397 = int_to_ptr.vmem [resolvable:$true] %s396
          %s398 = sshll.u32 %s395, 4
          %s399 = int_to_ptr.hbm [resolvable:$true] %s398
          %404 = dma.vmem_to_hbm [thread:$0]  %s397, 1024, %s399, %s379, 128, 128, 8
        $region32: #{forward.2} parent=27 // pred_fallthru
          _
        // Predicated region
        $region33: #{forward.2} parent=27 // pred_check
          %p405 = pneg %p125
        $region34: #{forward.2} parent=27 // pred_check_branch
          %407 = sbr.rel (%p405) target = $region36
        $region35: #{forward.2} parent=27 // pred_region
          _
        $region36: #{forward.2} parent=27 // pred_fallthru
          _
      $region28: #{forward.2} parent=5 // pred_fallthru
        _
      %p408 = scmp.le.s32.totalorder 2, %s22
      // Predicated region
      $region37: #{forward.2} parent=5 // pred_check
        %p409 = pneg %p408
      $region38: #{forward.2} parent=5 // pred_check_branch
        %411 = sbr.rel (%p409) target = $region40
      $region39: #{forward.2} parent=5 // pred_region
        %s412 = ssub.s32 %s22, 2
        // Predicated region
        $region41: #{forward.2} parent=39 // pred_check
          %p413 = pneg %p105
        $region42: #{forward.2} parent=39 // pred_check_branch
          %415 = sbr.rel (%p413) target = $region44
        $region43: #{forward.2} parent=39 // pred_region
          %s416 = sand.u32 %s90, 1
          %s417 = scalar_lea.sflag [#allocation5], %s416
          %s418 = sand.u32 %s90, 1
          %s419 = smul.addr %s418, 64
          %s420 = scalar_lea.vmem [#allocation4], %s419
          %422 = dma.done %s417, 1024
        $region44: #{forward.2} parent=39 // pred_fallthru
          _
        // Predicated region
        $region45: #{forward.2} parent=39 // pred_check
          %p423 = pneg %p131
        $region46: #{forward.2} parent=39 // pred_check_branch
          %425 = sbr.rel (%p423) target = $region48
        $region47: #{forward.2} parent=39 // pred_region
          %p426 = scmp.lt.s32.totalorder %s28, 3
          %s427 = scalar_select %p426, %s28, 3
          %s428 = smul.addr %s427, 2
          %s429 = smul.addr %s428, 4
          %s430 = scalar_lea.vmem %s4, %s429
        $region48: #{forward.2} parent=39 // pred_fallthru
          _
      $region40: #{forward.2} parent=5 // pred_fallthru
        _
    $region6: #{forward.2} parent=1 // loop_footer
      %s26 = sadd.s32 1, %s22
    $region7: #{forward.2} parent=1 // loop_footer_branch
      %21 = sbr.rel target = $region3
    $region8: #{forward.2} parent=1 // loop_exit
      _
    %431 = vsyncpa [#allocation5], 1
    %s432 = scalar_lea.sflag [#allocation5], 1
    %433 = vsyncpa %s432, 1

// kernel: forward.3
$region0: #{forward.3}
  #allocation0 [shape = 'u32[]', space=smem, size = 0x4, offset = 0x4, fixed_abs, tag = 'smem constant byte address 0x4 - core index']
  #allocation1 [shape = 'u32[72,128]{1,0:T(1,128)}', space=vmem, size = 0x9000, scoped, tag = 'internal scratch']
  #allocation2 [shape = 'bf16[2,6,6,16]{3,2,1,0:T(8,128)(2,1)}', space=vmem, size = 0x6000, scoped, tag = 'scratch operand']
  %s0 = inlined_call_operand.vmem [shape: bf16[4,16,32], index: 0, kind: input, shape index: {}]
  %s1 = inlined_call_operand.vmem [shape: bf16[32,16], index: 1, kind: input, shape index: {}]
  %s2 = inlined_call_operand.vmem [shape: f32[1,16], index: 2, kind: input, shape index: {}]
  %s3 = inlined_call_operand.vmem [shape: bf16[9,16,16], index: 3, kind: input, shape index: {}]
  %s4 = inlined_call_operand.vmem [shape: f32[1,16], index: 4, kind: input, shape index: {}]
  %s5 = inlined_call_operand.vmem [shape: bf16[16,64], index: 5, kind: input, shape index: {}]
  %s6 = inlined_call_operand.vmem [shape: f32[1,64], index: 6, kind: input, shape index: {}]
  %s7 = inlined_call_operand.vmem [shape: bf16[32,64], index: 7, kind: input, shape index: {}]
  %s8 = inlined_call_operand.vmem [shape: f32[1,64], index: 8, kind: input, shape index: {}]
  %s9 = inlined_call_operand.vmem [shape: bf16[64,16], index: 9, kind: input, shape index: {}]
  %s10 = inlined_call_operand.vmem [shape: f32[1,16], index: 10, kind: input, shape index: {}]
  %s11 = inlined_call_operand.vmem [shape: bf16[9,16,16], index: 11, kind: input, shape index: {}]
  %s12 = inlined_call_operand.vmem [shape: f32[1,16], index: 12, kind: input, shape index: {}]
  %s13 = inlined_call_operand.vmem [shape: bf16[16,64], index: 13, kind: input, shape index: {}]
  %s14 = inlined_call_operand.vmem [shape: f32[1,64], index: 14, kind: input, shape index: {}]
  %s15 = inlined_call_operand.vmem [shape: bf16[64,16], index: 15, kind: input, shape index: {}]
  %s16 = inlined_call_operand.vmem [shape: f32[1,16], index: 16, kind: input, shape index: {}]
  %s17 = inlined_call_operand.vmem [shape: bf16[9,16,16], index: 17, kind: input, shape index: {}]
  %s18 = inlined_call_operand.vmem [shape: f32[1,16], index: 18, kind: input, shape index: {}]
  %s19 = inlined_call_operand.vmem [shape: bf16[16,64], index: 19, kind: input, shape index: {}]
  %s20 = inlined_call_operand.vmem [shape: f32[1,64], index: 20, kind: input, shape index: {}]
  %s21 = inlined_call_operand.hbm [shape: f32[4,16,64], index: 21, kind: output, shape index: {}]
  %s22 = sld [smem:[#allocation0]]
  $region117: #{forward.3} parent=0
    _
  %s24 = ssub.s32 1, %s22
  %s25 = scalar_select 0, %s24, %s22
  $region1: #{forward.3} parent=0
    #allocation3 [shape = 'u8[32768]{0}', space=vmem, size = 0x8000, scoped, tag = 'output window, operand 0']
    #allocation4 [shape = 's32[2]{0}', space=sflag, size = 0x8, scoped, tag = 'scoped memory for forward.3']
    %26 = vsyncpa [#allocation4], 0
    %s27 = scalar_lea.sflag [#allocation4], 1
    %28 = vsyncpa %s27, 0
    loop: start=0, step=1, limit=4
    $region2: #{forward.3} parent=1 // loop_pre_header
      _
    $region3: #{forward.3} parent=1 // loop_header
      %s30 = sphi 0, %s34
      %p31 = scmp.ge.s32.totalorder %s30, 4
      %s40 = sphi 0, %s42
      %s43 = sphi 0, %s40
      %s44 = sphi 0, %s43
      %s60 = sphi 0, %s44
      %s64 = sphi 0, %s64
      %s66 = sphi 0, %s64
      %s67 = sphi 0, %s66
      %s81 = sphi 0, %s67
      %s85 = sphi 0, %s85
      %s87 = sphi 0, %s85
      %s88 = sphi 0, %s87
      %s102 = sphi 0, %s88
      %s106 = sphi 0, %s106
      %s108 = sphi 0, %s106
      %s109 = sphi 0, %s108
      %s123 = sphi 0, %s109
      %s127 = sphi 0, %s127
      %s129 = sphi 0, %s127
      %s130 = sphi 0, %s129
      %s144 = sphi 0, %s130
      %s148 = sphi 0, %s148
      %s150 = sphi 0, %s148
      %s151 = sphi 0, %s150
      %s165 = sphi 0, %s151
      %s169 = sphi 0, %s169
      %s171 = sphi 0, %s169
      %s172 = sphi 0, %s171
      %s186 = sphi 0, %s172
      %s190 = sphi 0, %s190
      %s192 = sphi 0, %s190
      %s193 = sphi 0, %s192
      %s207 = sphi 0, %s193
      %s211 = sphi 0, %s211
      %s213 = sphi 0, %s211
      %s214 = sphi 0, %s213
      %s228 = sphi 0, %s214
      %s232 = sphi 0, %s232
      %s234 = sphi 0, %s232
      %s235 = sphi 0, %s234
      %s249 = sphi 0, %s235
      %s253 = sphi 0, %s253
      %s255 = sphi 0, %s253
      %s256 = sphi 0, %s255
      %s270 = sphi 0, %s256
      %s274 = sphi 0, %s274
      %s276 = sphi 0, %s274
      %s277 = sphi 0, %s276
      %s291 = sphi 0, %s277
      %s295 = sphi 0, %s295
      %s297 = sphi 0, %s295
      %s298 = sphi 0, %s297
      %s312 = sphi 0, %s298
      %s316 = sphi 0, %s316
      %s318 = sphi 0, %s316
      %s319 = sphi 0, %s318
      %s333 = sphi 0, %s319
      %s337 = sphi 0, %s337
      %s339 = sphi 0, %s337
      %s340 = sphi 0, %s339
      %s354 = sphi 0, %s340
      %s358 = sphi 0, %s358
      %s360 = sphi 0, %s358
      %s361 = sphi 0, %s360
      %s375 = sphi 0, %s361
      %s379 = sphi 0, %s379
      %s381 = sphi 0, %s379
      %s382 = sphi 0, %s381
      %s396 = sphi 0, %s382
      %s400 = sphi 0, %s400
      %s402 = sphi 0, %s400
      %s403 = sphi 0, %s402
      %s417 = sphi 0, %s403
      %s421 = sphi 0, %s421
      %s423 = sphi 0, %s421
      %s424 = sphi 0, %s423
      %s438 = sphi 0, %s424
      %s442 = sphi 0, %s442
      %s444 = sphi 0, %s442
      %s445 = sphi 0, %s444
      %s459 = sphi 0, %s445
      %s463 = sphi 0, %s463
      %s465 = sphi 0, %s463
      %s466 = sphi 0, %s465
      %s480 = sphi 0, %s466
      %s486 = sphi 0, %s488
      %s489 = sphi 0, %s486
      %s490 = sphi 0, %s489
      %s506 = sphi 0, %s490
    $region4: #{forward.3} parent=1 // loop_header_branch
      %33 = sbr.rel (%p31) target = $region8
    $region5: #{forward.3} parent=1 // loop_body
      %s35 = ssub.s32 %s30, 1
      %s36 = ssub.s32 %s30, 2
      %s37 = sadd.s32 %s30, 1
      %s38 = ssub.s32 %s30, %s37
      %p39 = scmp.eq.s32.totalorder %s38, 0
      %s41 = sadd.s32 %s40, 1
      %s42 = scalar_select %p39, %s40, %s41
      %p45 = pneg %p39
      %p46 = scmp.eq.s32.totalorder %s30, 1
      %p47 = por %p45, %p46
      %p48 = scmp.ne.s32.totalorder %s40, %s43
      %p49 = scmp.eq.s32.totalorder %s30, 0
      %p50 = por %p48, %p49
      %p51 = scmp.ne.s32.totalorder %s40, %s43
      %p52 = scmp.eq.s32.totalorder %s35, 1
      %p53 = por %p51, %p52
      %p54 = scmp.ne.s32.totalorder %s43, %s44
      %p55 = scmp.eq.s32.totalorder %s35, 0
      %p56 = por %p54, %p55
      %p57 = scmp.ne.s32.totalorder %s43, %s44
      %p58 = scmp.eq.s32.totalorder %s36, 1
      %p59 = por %p57, %p58
      %p61 = scmp.ne.s32.totalorder %s44, %s60
      %p62 = scmp.eq.s32.totalorder %s36, 0
      %p63 = por %p61, %p62
      %s65 = sadd.s32 %s64, 1
      %p68 = scmp.eq.s32.totalorder %s30, 1
      %p69 = scmp.ne.s32.totalorder %s64, %s66
      %p70 = scmp.eq.s32.totalorder %s30, 0
      %p71 = por %p69, %p70
      %p72 = scmp.ne.s32.totalorder %s64, %s66
      %p73 = scmp.eq.s32.totalorder %s35, 1
      %p74 = por %p72, %p73
      %p75 = scmp.ne.s32.totalorder %s66, %s67
      %p76 = scmp.eq.s32.totalorder %s35, 0
      %p77 = por %p75, %p76
      %p78 = scmp.ne.s32.totalorder %s66, %s67
      %p79 = scmp.eq.s32.totalorder %s36, 1
      %p80 = por %p78, %p79
      %p82 = scmp.ne.s32.totalorder %s67, %s81
      %p83 = scmp.eq.s32.totalorder %s36, 0
      %p84 = por %p82, %p83
      %s86 = sadd.s32 %s85, 1
      %p89 = scmp.eq.s32.totalorder %s30, 1
      %p90 = scmp.ne.s32.totalorder %s85, %s87
      %p91 = scmp.eq.s32.totalorder %s30, 0
      %p92 = por %p90, %p91
      %p93 = scmp.ne.s32.totalorder %s85, %s87
      %p94 = scmp.eq.s32.totalorder %s35, 1
      %p95 = por %p93, %p94
      %p96 = scmp.ne.s32.totalorder %s87, %s88
      %p97 = scmp.eq.s32.totalorder %s35, 0
      %p98 = por %p96, %p97
      %p99 = scmp.ne.s32.totalorder %s87, %s88
      %p100 = scmp.eq.s32.totalorder %s36, 1
      %p101 = por %p99, %p100
      %p103 = scmp.ne.s32.totalorder %s88, %s102
      %p104 = scmp.eq.s32.totalorder %s36, 0
      %p105 = por %p103, %p104
      %s107 = sadd.s32 %s106, 1
      %p110 = scmp.eq.s32.totalorder %s30, 1
      %p111 = scmp.ne.s32.totalorder %s106, %s108
      %p112 = scmp.eq.s32.totalorder %s30, 0
      %p113 = por %p111, %p112
      %p114 = scmp.ne.s32.totalorder %s106, %s108
      %p115 = scmp.eq.s32.totalorder %s35, 1
      %p116 = por %p114, %p115
      %p117 = scmp.ne.s32.totalorder %s108, %s109
      %p118 = scmp.eq.s32.totalorder %s35, 0
      %p119 = por %p117, %p118
      %p120 = scmp.ne.s32.totalorder %s108, %s109
      %p121 = scmp.eq.s32.totalorder %s36, 1
      %p122 = por %p120, %p121
      %p124 = scmp.ne.s32.totalorder %s109, %s123
      %p125 = scmp.eq.s32.totalorder %s36, 0
      %p126 = por %p124, %p125
      %s128 = sadd.s32 %s127, 1
      %p131 = scmp.eq.s32.totalorder %s30, 1
      %p132 = scmp.ne.s32.totalorder %s127, %s129
      %p133 = scmp.eq.s32.totalorder %s30, 0
      %p134 = por %p132, %p133
      %p135 = scmp.ne.s32.totalorder %s127, %s129
      %p136 = scmp.eq.s32.totalorder %s35, 1
      %p137 = por %p135, %p136
      %p138 = scmp.ne.s32.totalorder %s129, %s130
      %p139 = scmp.eq.s32.totalorder %s35, 0
      %p140 = por %p138, %p139
      %p141 = scmp.ne.s32.totalorder %s129, %s130
      %p142 = scmp.eq.s32.totalorder %s36, 1
      %p143 = por %p141, %p142
      %p145 = scmp.ne.s32.totalorder %s130, %s144
      %p146 = scmp.eq.s32.totalorder %s36, 0
      %p147 = por %p145, %p146
      %s149 = sadd.s32 %s148, 1
      %p152 = scmp.eq.s32.totalorder %s30, 1
      %p153 = scmp.ne.s32.totalorder %s148, %s150
      %p154 = scmp.eq.s32.totalorder %s30, 0
      %p155 = por %p153, %p154
      %p156 = scmp.ne.s32.totalorder %s148, %s150
      %p157 = scmp.eq.s32.totalorder %s35, 1
      %p158 = por %p156, %p157
      %p159 = scmp.ne.s32.totalorder %s150, %s151
      %p160 = scmp.eq.s32.totalorder %s35, 0
      %p161 = por %p159, %p160
      %p162 = scmp.ne.s32.totalorder %s150, %s151
      %p163 = scmp.eq.s32.totalorder %s36, 1
      %p164 = por %p162, %p163
      %p166 = scmp.ne.s32.totalorder %s151, %s165
      %p167 = scmp.eq.s32.totalorder %s36, 0
      %p168 = por %p166, %p167
      %s170 = sadd.s32 %s169, 1
      %p173 = scmp.eq.s32.totalorder %s30, 1
      %p174 = scmp.ne.s32.totalorder %s169, %s171
      %p175 = scmp.eq.s32.totalorder %s30, 0
      %p176 = por %p174, %p175
      %p177 = scmp.ne.s32.totalorder %s169, %s171
      %p178 = scmp.eq.s32.totalorder %s35, 1
      %p179 = por %p177, %p178
      %p180 = scmp.ne.s32.totalorder %s171, %s172
      %p181 = scmp.eq.s32.totalorder %s35, 0
      %p182 = por %p180, %p181
      %p183 = scmp.ne.s32.totalorder %s171, %s172
      %p184 = scmp.eq.s32.totalorder %s36, 1
      %p185 = por %p183, %p184
      %p187 = scmp.ne.s32.totalorder %s172, %s186
      %p188 = scmp.eq.s32.totalorder %s36, 0
      %p189 = por %p187, %p188
      %s191 = sadd.s32 %s190, 1
      %p194 = scmp.eq.s32.totalorder %s30, 1
      %p195 = scmp.ne.s32.totalorder %s190, %s192
      %p196 = scmp.eq.s32.totalorder %s30, 0
      %p197 = por %p195, %p196
      %p198 = scmp.ne.s32.totalorder %s190, %s192
      %p199 = scmp.eq.s32.totalorder %s35, 1
      %p200 = por %p198, %p199
      %p201 = scmp.ne.s32.totalorder %s192, %s193
      %p202 = scmp.eq.s32.totalorder %s35, 0
      %p203 = por %p201, %p202
      %p204 = scmp.ne.s32.totalorder %s192, %s193
      %p205 = scmp.eq.s32.totalorder %s36, 1
      %p206 = por %p204, %p205
      %p208 = scmp.ne.s32.totalorder %s193, %s207
      %p209 = scmp.eq.s32.totalorder %s36, 0
      %p210 = por %p208, %p209
      %s212 = sadd.s32 %s211, 1
      %p215 = scmp.eq.s32.totalorder %s30, 1
      %p216 = scmp.ne.s32.totalorder %s211, %s213
      %p217 = scmp.eq.s32.totalorder %s30, 0
      %p218 = por %p216, %p217
      %p219 = scmp.ne.s32.totalorder %s211, %s213
      %p220 = scmp.eq.s32.totalorder %s35, 1
      %p221 = por %p219, %p220
      %p222 = scmp.ne.s32.totalorder %s213, %s214
      %p223 = scmp.eq.s32.totalorder %s35, 0
      %p224 = por %p222, %p223
      %p225 = scmp.ne.s32.totalorder %s213, %s214
      %p226 = scmp.eq.s32.totalorder %s36, 1
      %p227 = por %p225, %p226
      %p229 = scmp.ne.s32.totalorder %s214, %s228
      %p230 = scmp.eq.s32.totalorder %s36, 0
      %p231 = por %p229, %p230
      %s233 = sadd.s32 %s232, 1
      %p236 = scmp.eq.s32.totalorder %s30, 1
      %p237 = scmp.ne.s32.totalorder %s232, %s234
      %p238 = scmp.eq.s32.totalorder %s30, 0
      %p239 = por %p237, %p238
      %p240 = scmp.ne.s32.totalorder %s232, %s234
      %p241 = scmp.eq.s32.totalorder %s35, 1
      %p242 = por %p240, %p241
      %p243 = scmp.ne.s32.totalorder %s234, %s235
      %p244 = scmp.eq.s32.totalorder %s35, 0
      %p245 = por %p243, %p244
      %p246 = scmp.ne.s32.totalorder %s234, %s235
      %p247 = scmp.eq.s32.totalorder %s36, 1
      %p248 = por %p246, %p247
      %p250 = scmp.ne.s32.totalorder %s235, %s249
      %p251 = scmp.eq.s32.totalorder %s36, 0
      %p252 = por %p250, %p251
      %s254 = sadd.s32 %s253, 1
      %p257 = scmp.eq.s32.totalorder %s30, 1
      %p258 = scmp.ne.s32.totalorder %s253, %s255
      %p259 = scmp.eq.s32.totalorder %s30, 0
      %p260 = por %p258, %p259
      %p261 = scmp.ne.s32.totalorder %s253, %s255
      %p262 = scmp.eq.s32.totalorder %s35, 1
      %p263 = por %p261, %p262
      %p264 = scmp.ne.s32.totalorder %s255, %s256
      %p265 = scmp.eq.s32.totalorder %s35, 0
      %p266 = por %p264, %p265
      %p267 = scmp.ne.s32.totalorder %s255, %s256
      %p268 = scmp.eq.s32.totalorder %s36, 1
      %p269 = por %p267, %p268
      %p271 = scmp.ne.s32.totalorder %s256, %s270
      %p272 = scmp.eq.s32.totalorder %s36, 0
      %p273 = por %p271, %p272
      %s275 = sadd.s32 %s274, 1
      %p278 = scmp.eq.s32.totalorder %s30, 1
      %p279 = scmp.ne.s32.totalorder %s274, %s276
      %p280 = scmp.eq.s32.totalorder %s30, 0
      %p281 = por %p279, %p280
      %p282 = scmp.ne.s32.totalorder %s274, %s276
      %p283 = scmp.eq.s32.totalorder %s35, 1
      %p284 = por %p282, %p283
      %p285 = scmp.ne.s32.totalorder %s276, %s277
      %p286 = scmp.eq.s32.totalorder %s35, 0
      %p287 = por %p285, %p286
      %p288 = scmp.ne.s32.totalorder %s276, %s277
      %p289 = scmp.eq.s32.totalorder %s36, 1
      %p290 = por %p288, %p289
      %p292 = scmp.ne.s32.totalorder %s277, %s291
      %p293 = scmp.eq.s32.totalorder %s36, 0
      %p294 = por %p292, %p293
      %s296 = sadd.s32 %s295, 1
      %p299 = scmp.eq.s32.totalorder %s30, 1
      %p300 = scmp.ne.s32.totalorder %s295, %s297
      %p301 = scmp.eq.s32.totalorder %s30, 0
      %p302 = por %p300, %p301
      %p303 = scmp.ne.s32.totalorder %s295, %s297
      %p304 = scmp.eq.s32.totalorder %s35, 1
      %p305 = por %p303, %p304
      %p306 = scmp.ne.s32.totalorder %s297, %s298
      %p307 = scmp.eq.s32.totalorder %s35, 0
      %p308 = por %p306, %p307
      %p309 = scmp.ne.s32.totalorder %s297, %s298
      %p310 = scmp.eq.s32.totalorder %s36, 1
      %p311 = por %p309, %p310
      %p313 = scmp.ne.s32.totalorder %s298, %s312
      %p314 = scmp.eq.s32.totalorder %s36, 0
      %p315 = por %p313, %p314
      %s317 = sadd.s32 %s316, 1
      %p320 = scmp.eq.s32.totalorder %s30, 1
      %p321 = scmp.ne.s32.totalorder %s316, %s318
      %p322 = scmp.eq.s32.totalorder %s30, 0
      %p323 = por %p321, %p322
      %p324 = scmp.ne.s32.totalorder %s316, %s318
      %p325 = scmp.eq.s32.totalorder %s35, 1
      %p326 = por %p324, %p325
      %p327 = scmp.ne.s32.totalorder %s318, %s319
      %p328 = scmp.eq.s32.totalorder %s35, 0
      %p329 = por %p327, %p328
      %p330 = scmp.ne.s32.totalorder %s318, %s319
      %p331 = scmp.eq.s32.totalorder %s36, 1
      %p332 = por %p330, %p331
      %p334 = scmp.ne.s32.totalorder %s319, %s333
      %p335 = scmp.eq.s32.totalorder %s36, 0
      %p336 = por %p334, %p335
      %s338 = sadd.s32 %s337, 1
      %p341 = scmp.eq.s32.totalorder %s30, 1
      %p342 = scmp.ne.s32.totalorder %s337, %s339
      %p343 = scmp.eq.s32.totalorder %s30, 0
      %p344 = por %p342, %p343
      %p345 = scmp.ne.s32.totalorder %s337, %s339
      %p346 = scmp.eq.s32.totalorder %s35, 1
      %p347 = por %p345, %p346
      %p348 = scmp.ne.s32.totalorder %s339, %s340
      %p349 = scmp.eq.s32.totalorder %s35, 0
      %p350 = por %p348, %p349
      %p351 = scmp.ne.s32.totalorder %s339, %s340
      %p352 = scmp.eq.s32.totalorder %s36, 1
      %p353 = por %p351, %p352
      %p355 = scmp.ne.s32.totalorder %s340, %s354
      %p356 = scmp.eq.s32.totalorder %s36, 0
      %p357 = por %p355, %p356
      %s359 = sadd.s32 %s358, 1
      %p362 = scmp.eq.s32.totalorder %s30, 1
      %p363 = scmp.ne.s32.totalorder %s358, %s360
      %p364 = scmp.eq.s32.totalorder %s30, 0
      %p365 = por %p363, %p364
      %p366 = scmp.ne.s32.totalorder %s358, %s360
      %p367 = scmp.eq.s32.totalorder %s35, 1
      %p368 = por %p366, %p367
      %p369 = scmp.ne.s32.totalorder %s360, %s361
      %p370 = scmp.eq.s32.totalorder %s35, 0
      %p371 = por %p369, %p370
      %p372 = scmp.ne.s32.totalorder %s360, %s361
      %p373 = scmp.eq.s32.totalorder %s36, 1
      %p374 = por %p372, %p373
      %p376 = scmp.ne.s32.totalorder %s361, %s375
      %p377 = scmp.eq.s32.totalorder %s36, 0
      %p378 = por %p376, %p377
      %s380 = sadd.s32 %s379, 1
      %p383 = scmp.eq.s32.totalorder %s30, 1
      %p384 = scmp.ne.s32.totalorder %s379, %s381
      %p385 = scmp.eq.s32.totalorder %s30, 0
      %p386 = por %p384, %p385
      %p387 = scmp.ne.s32.totalorder %s379, %s381
      %p388 = scmp.eq.s32.totalorder %s35, 1
      %p389 = por %p387, %p388
      %p390 = scmp.ne.s32.totalorder %s381, %s382
      %p391 = scmp.eq.s32.totalorder %s35, 0
      %p392 = por %p390, %p391
      %p393 = scmp.ne.s32.totalorder %s381, %s382
      %p394 = scmp.eq.s32.totalorder %s36, 1
      %p395 = por %p393, %p394
      %p397 = scmp.ne.s32.totalorder %s382, %s396
      %p398 = scmp.eq.s32.totalorder %s36, 0
      %p399 = por %p397, %p398
      %s401 = sadd.s32 %s400, 1
      %p404 = scmp.eq.s32.totalorder %s30, 1
      %p405 = scmp.ne.s32.totalorder %s400, %s402
      %p406 = scmp.eq.s32.totalorder %s30, 0
      %p407 = por %p405, %p406
      %p408 = scmp.ne.s32.totalorder %s400, %s402
      %p409 = scmp.eq.s32.totalorder %s35, 1
      %p410 = por %p408, %p409
      %p411 = scmp.ne.s32.totalorder %s402, %s403
      %p412 = scmp.eq.s32.totalorder %s35, 0
      %p413 = por %p411, %p412
      %p414 = scmp.ne.s32.totalorder %s402, %s403
      %p415 = scmp.eq.s32.totalorder %s36, 1
      %p416 = por %p414, %p415
      %p418 = scmp.ne.s32.totalorder %s403, %s417
      %p419 = scmp.eq.s32.totalorder %s36, 0
      %p420 = por %p418, %p419
      %s422 = sadd.s32 %s421, 1
      %p425 = scmp.eq.s32.totalorder %s30, 1
      %p426 = scmp.ne.s32.totalorder %s421, %s423
      %p427 = scmp.eq.s32.totalorder %s30, 0
      %p428 = por %p426, %p427
      %p429 = scmp.ne.s32.totalorder %s421, %s423
      %p430 = scmp.eq.s32.totalorder %s35, 1
      %p431 = por %p429, %p430
      %p432 = scmp.ne.s32.totalorder %s423, %s424
      %p433 = scmp.eq.s32.totalorder %s35, 0
      %p434 = por %p432, %p433
      %p435 = scmp.ne.s32.totalorder %s423, %s424
      %p436 = scmp.eq.s32.totalorder %s36, 1
      %p437 = por %p435, %p436
      %p439 = scmp.ne.s32.totalorder %s424, %s438
      %p440 = scmp.eq.s32.totalorder %s36, 0
      %p441 = por %p439, %p440
      %s443 = sadd.s32 %s442, 1
      %p446 = scmp.eq.s32.totalorder %s30, 1
      %p447 = scmp.ne.s32.totalorder %s442, %s444
      %p448 = scmp.eq.s32.totalorder %s30, 0
      %p449 = por %p447, %p448
      %p450 = scmp.ne.s32.totalorder %s442, %s444
      %p451 = scmp.eq.s32.totalorder %s35, 1
      %p452 = por %p450, %p451
      %p453 = scmp.ne.s32.totalorder %s444, %s445
      %p454 = scmp.eq.s32.totalorder %s35, 0
      %p455 = por %p453, %p454
      %p456 = scmp.ne.s32.totalorder %s444, %s445
      %p457 = scmp.eq.s32.totalorder %s36, 1
      %p458 = por %p456, %p457
      %p460 = scmp.ne.s32.totalorder %s445, %s459
      %p461 = scmp.eq.s32.totalorder %s36, 0
      %p462 = por %p460, %p461
      %s464 = sadd.s32 %s463, 1
      %p467 = scmp.eq.s32.totalorder %s30, 1
      %p468 = scmp.ne.s32.totalorder %s463, %s465
      %p469 = scmp.eq.s32.totalorder %s30, 0
      %p470 = por %p468, %p469
      %p471 = scmp.ne.s32.totalorder %s463, %s465
      %p472 = scmp.eq.s32.totalorder %s35, 1
      %p473 = por %p471, %p472
      %p474 = scmp.ne.s32.totalorder %s465, %s466
      %p475 = scmp.eq.s32.totalorder %s35, 0
      %p476 = por %p474, %p475
      %p477 = scmp.ne.s32.totalorder %s465, %s466
      %p478 = scmp.eq.s32.totalorder %s36, 1
      %p479 = por %p477, %p478
      %p481 = scmp.ne.s32.totalorder %s466, %s480
      %p482 = scmp.eq.s32.totalorder %s36, 0
      %p483 = por %p481, %p482
      %s484 = ssub.s32 %s30, %s37
      %p485 = scmp.eq.s32.totalorder %s484, 0
      %s487 = sadd.s32 %s486, 1
      %s488 = scalar_select %p485, %s486, %s487
      %p491 = pneg %p485
      %p492 = scmp.eq.s32.totalorder %s30, 1
      %p493 = por %p491, %p492
      %p494 = scmp.ne.s32.totalorder %s486, %s489
      %p495 = scmp.eq.s32.totalorder %s30, 0
      %p496 = por %p494, %p495
      %p497 = scmp.ne.s32.totalorder %s486, %s489
      %p498 = scmp.eq.s32.totalorder %s35, 1
      %p499 = por %p497, %p498
      %p500 = scmp.ne.s32.totalorder %s489, %s490
      %p501 = scmp.eq.s32.totalorder %s35, 0
      %p502 = por %p500, %p501
      %p503 = scmp.ne.s32.totalorder %s489, %s490
      %p504 = scmp.eq.s32.totalorder %s36, 1
      %p505 = por %p503, %p504
      %p507 = scmp.ne.s32.totalorder %s490, %s506
      %p508 = scmp.eq.s32.totalorder %s36, 0
      %p509 = por %p507, %p508
      %p510 = scmp.le.s32.totalorder 1, %s30
      %p511 = scmp.lt.s32.totalorder %s30, 3
      %p512 = pnand %p510, %p511
      %p513 = pneg %p512
      // Predicated region
      $region9: #{forward.3} parent=5 // pred_check
        _
      $region10: #{forward.3} parent=5 // pred_check_branch
        %515 = sbr.rel (%p512) target = $region12
      $region11: #{forward.3} parent=5 // pred_region
        %s516 = ssub.s32 %s30, 1
        // Predicated region
        $region13: #{forward.3} parent=11 // pred_check
          %p517 = pneg %p77
        $region14: #{forward.3} parent=11 // pred_check_branch
          %519 = sbr.rel (%p517) target = $region16
        $region15: #{forward.3} parent=11 // pred_region
          _
        $region16: #{forward.3} parent=11 // pred_fallthru
          _
        // Predicated region
        $region17: #{forward.3} parent=11 // pred_check
          %p520 = pneg %p98
        $region18: #{forward.3} parent=11 // pred_check_branch
          %522 = sbr.rel (%p520) target = $region20
        $region19: #{forward.3} parent=11 // pred_region
          _
        $region20: #{forward.3} parent=11 // pred_fallthru
          _
        // Predicated region
        $region21: #{forward.3} parent=11 // pred_check
          %p523 = pneg %p119
        $region22: #{forward.3} parent=11 // pred_check_branch
          %525 = sbr.rel (%p523) target = $region24
        $region23: #{forward.3} parent=11 // pred_region
          _
        $region24: #{forward.3} parent=11 // pred_fallthru
          _
        // Predicated region
        $region25: #{forward.3} parent=11 // pred_check
          %p526 = pneg %p140
        $region26: #{forward.3} parent=11 // pred_check_branch
          %528 = sbr.rel (%p526) target = $region28
        $region27: #{forward.3} parent=11 // pred_region
          _
        $region28: #{forward.3} parent=11 // pred_fallthru
          _
        // Predicated region
        $region29: #{forward.3} parent=11 // pred_check
          %p529 = pneg %p161
        $region30: #{forward.3} parent=11 // pred_check_branch
          %531 = sbr.rel (%p529) target = $region32
        $region31: #{forward.3} parent=11 // pred_region
          _
        $region32: #{forward.3} parent=11 // pred_fallthru
          _
        // Predicated region
        $region33: #{forward.3} parent=11 // pred_check
          %p532 = pneg %p182
        $region34: #{forward.3} parent=11 // pred_check_branch
          %534 = sbr.rel (%p532) target = $region36
        $region35: #{forward.3} parent=11 // pred_region
          _
        $region36: #{forward.3} parent=11 // pred_fallthru
          _
        // Predicated region
        $region37: #{forward.3} parent=11 // pred_check
          %p535 = pneg %p203
        $region38: #{forward.3} parent=11 // pred_check_branch
          %537 = sbr.rel (%p535) target = $region40
        $region39: #{forward.3} parent=11 // pred_region
          _
        $region40: #{forward.3} parent=11 // pred_fallthru
          _
        // Predicated region
        $region41: #{forward.3} parent=11 // pred_check
          %p538 = pneg %p224
        $region42: #{forward.3} parent=11 // pred_check_branch
          %540 = sbr.rel (%p538) target = $region44
        $region43: #{forward.3} parent=11 // pred_region
          _
        $region44: #{forward.3} parent=11 // pred_fallthru
          _
        // Predicated region
        $region45: #{forward.3} parent=11 // pred_check
          %p541 = pneg %p245
        $region46: #{forward.3} parent=11 // pred_check_branch
          %543 = sbr.rel (%p541) target = $region48
        $region47: #{forward.3} parent=11 // pred_region
          _
        $region48: #{forward.3} parent=11 // pred_fallthru
          _
        // Predicated region
        $region49: #{forward.3} parent=11 // pred_check
          %p544 = pneg %p266
        $region50: #{forward.3} parent=11 // pred_check_branch
          %546 = sbr.rel (%p544) target = $region52
        $region51: #{forward.3} parent=11 // pred_region
          _
        $region52: #{forward.3} parent=11 // pred_fallthru
          _
        // Predicated region
        $region53: #{forward.3} parent=11 // pred_check
          %p547 = pneg %p287
        $region54: #{forward.3} parent=11 // pred_check_branch
          %549 = sbr.rel (%p547) target = $region56
        $region55: #{forward.3} parent=11 // pred_region
          _
        $region56: #{forward.3} parent=11 // pred_fallthru
          _
        // Predicated region
        $region57: #{forward.3} parent=11 // pred_check
          %p550 = pneg %p308
        $region58: #{forward.3} parent=11 // pred_check_branch
          %552 = sbr.rel (%p550) target = $region60
        $region59: #{forward.3} parent=11 // pred_region
          _
        $region60: #{forward.3} parent=11 // pred_fallthru
          _
        // Predicated region
        $region61: #{forward.3} parent=11 // pred_check
          %p553 = pneg %p329
        $region62: #{forward.3} parent=11 // pred_check_branch
          %555 = sbr.rel (%p553) target = $region64
        $region63: #{forward.3} parent=11 // pred_region
          _
        $region64: #{forward.3} parent=11 // pred_fallthru
          _
        // Predicated region
        $region65: #{forward.3} parent=11 // pred_check
          %p556 = pneg %p350
        $region66: #{forward.3} parent=11 // pred_check_branch
          %558 = sbr.rel (%p556) target = $region68
        $region67: #{forward.3} parent=11 // pred_region
          _
        $region68: #{forward.3} parent=11 // pred_fallthru
          _
        // Predicated region
        $region69: #{forward.3} parent=11 // pred_check
          %p559 = pneg %p371
        $region70: #{forward.3} parent=11 // pred_check_branch
          %561 = sbr.rel (%p559) target = $region72
        $region71: #{forward.3} parent=11 // pred_region
          _
        $region72: #{forward.3} parent=11 // pred_fallthru
          _
        // Predicated region
        $region73: #{forward.3} parent=11 // pred_check
          %p562 = pneg %p392
        $region74: #{forward.3} parent=11 // pred_check_branch
          %564 = sbr.rel (%p562) target = $region76
        $region75: #{forward.3} parent=11 // pred_region
          _
        $region76: #{forward.3} parent=11 // pred_fallthru
          _
        // Predicated region
        $region77: #{forward.3} parent=11 // pred_check
          %p565 = pneg %p413
        $region78: #{forward.3} parent=11 // pred_check_branch
          %567 = sbr.rel (%p565) target = $region80
        $region79: #{forward.3} parent=11 // pred_region
          _
        $region80: #{forward.3} parent=11 // pred_fallthru
          _
        // Predicated region
        $region81: #{forward.3} parent=11 // pred_check
          %p568 = pneg %p434
        $region82: #{forward.3} parent=11 // pred_check_branch
          %570 = sbr.rel (%p568) target = $region84
        $region83: #{forward.3} parent=11 // pred_region
          _
        $region84: #{forward.3} parent=11 // pred_fallthru
          _
        // Predicated region
        $region85: #{forward.3} parent=11 // pred_check
          %p571 = pneg %p455
        $region86: #{forward.3} parent=11 // pred_check_branch
          %573 = sbr.rel (%p571) target = $region88
        $region87: #{forward.3} parent=11 // pred_region
          _
        $region88: #{forward.3} parent=11 // pred_fallthru
          _
        // Predicated region
        $region89: #{forward.3} parent=11 // pred_check
          %p574 = pneg %p476
        $region90: #{forward.3} parent=11 // pred_check_branch
          %576 = sbr.rel (%p574) target = $region92
        $region91: #{forward.3} parent=11 // pred_region
          _
        $region92: #{forward.3} parent=11 // pred_fallthru
          _
      $region12: #{forward.3} parent=5 // pred_fallthru
        _
      %p577 = scmp.lt.s32.totalorder %s30, 2
      // Predicated region
      $region93: #{forward.3} parent=5 // pred_check
        %p578 = pneg %p577
      $region94: #{forward.3} parent=5 // pred_check_branch
        %580 = sbr.rel (%p578) target = $region96
      $region95: #{forward.3} parent=5 // pred_region
        // Predicated region
        $region97: #{forward.3} parent=95 // pred_check
          %p581 = pneg %p50
        $region98: #{forward.3} parent=95 // pred_check_branch
          %583 = sbr.rel (%p581) target = $region100
        $region99: #{forward.3} parent=95 // pred_region
          %s584 = smul.u32 2, %s30
          %p585 = scmp.lt.s32.totalorder %s584, 3
          %s586 = scalar_select %p585, %s584, 3
          %s587 = smul.addr %s586, 2
          %s588 = smul.addr %s587, 4
          %s589 = scalar_lea.vmem %s0, %s588
          %s590 = smul.u32 2, %s30
        $region100: #{forward.3} parent=95 // pred_fallthru
          _
      $region96: #{forward.3} parent=5 // pred_fallthru
        _
      %p591 = scmp.le.s32.totalorder 1, %s30
      %p592 = scmp.lt.s32.totalorder %s30, 3
      %p593 = pnand %p591, %p592
      %p594 = pneg %p593
      // Predicated region
      $region101: #{forward.3} parent=5 // pred_check
        _
      $region102: #{forward.3} parent=5 // pred_check_branch
        %596 = sbr.rel (%p593) target = $region104
      $region103: #{forward.3} parent=5 // pred_region
        %s597 = ssub.s32 %s30, 1
        %s598 = smul.u32 2, %s35
        %p599 = scmp.lt.s32.totalorder %s598, 3
        %s600 = scalar_select %p599, %s598, 3
        %s601 = smul.addr %s600, 2
        %s602 = smul.addr %s601, 4
        %s603 = scalar_lea.vmem %s0, %s602
        %p604 = pneg %p56
        %p605 = pneg %p53
        %p606 = pneg %p77
        %p607 = pneg %p74
        %p608 = pneg %p98
        %p609 = pneg %p95
        %p610 = pneg %p119
        %p611 = pneg %p116
        %p612 = pneg %p140
        %p613 = pneg %p137
        %p614 = pneg %p161
        %p615 = pneg %p158
        %p616 = pneg %p182
        %p617 = pneg %p179
        %p618 = pneg %p203
        %p619 = pneg %p200
        %p620 = pneg %p224
        %p621 = pneg %p221
        %p622 = pneg %p245
        %p623 = pneg %p242
        %p624 = pneg %p266
        %p625 = pneg %p263
        %p626 = pneg %p287
        %p627 = pneg %p284
        %p628 = pneg %p308
        %p629 = pneg %p305
        %p630 = pneg %p329
        %p631 = pneg %p326
        %p632 = pneg %p350
        %p633 = pneg %p347
        %p634 = pneg %p371
        %p635 = pneg %p368
        %p636 = pneg %p392
        %p637 = pneg %p389
        %p638 = pneg %p413
        %p639 = pneg %p410
        %p640 = pneg %p434
        %p641 = pneg %p431
        %p642 = pneg %p455
        %p643 = pneg %p452
        %p644 = pneg %p476
        %p645 = pneg %p473
        %p646 = pneg %p502
        %p647 = pneg %p499
        %s648 = sand.u32 %s489, 1
        %s649 = scalar_lea.sflag [#allocation4], %s648
        %s650 = sand.u32 %s489, 1
        %s651 = smul.addr %s650, 32
        %s652 = scalar_lea.vmem [#allocation3], %s651
        %s653 = smul.u32 2, %s35
        %p654 = scmp.lt.s32.totalorder %s653, 3
        %s655 = scalar_select %p654, %s653, 3
        %s656 = smul.addr %s655, 2
        %s657 = smul.addr %s656, 4
        %s658 = scalar_lea.vmem %s0, %s657
        %s659 = smul.u32 2, %s35
        %s660 = smul.u32 2, %s35
        %vm662 = vcmask 124928
        %663 = vst.msk [vmem:[#allocation2] sm:$0x7] %vm662, 0
        %664 = vst.msk [vmem:[#allocation2 + $0x4] sm:$0x7] %vm662, 0
        %665 = vst.msk [vmem:[#allocation2 + $0x8] sm:$0x7] %vm662, 0
        %666 = vst.msk [vmem:[#allocation2 + $0xc] sm:$0x7] %vm662, 0
        %667 = vst.msk [vmem:[#allocation2 + $0x10] sm:$0x7] %vm662, 0
        %668 = vst.msk [vmem:[#allocation2 + $0x14] sm:$0x7] %vm662, 0
        %669 = vst.msk [vmem:[#allocation2 + $0x18] sm:$0x7] %vm662, 0
        %670 = vst.msk [vmem:[#allocation2 + $0x1c] sm:$0x7] %vm662, 0
        %671 = vst.msk [vmem:[#allocation2 + $0x20] sm:$0x7] %vm662, 0
        %672 = vst.msk [vmem:[#allocation2 + $0x24] sm:$0x7] %vm662, 0
        %673 = vst.msk [vmem:[#allocation2 + $0x28] sm:$0x7] %vm662, 0
        %674 = vst.msk [vmem:[#allocation2 + $0x2c] sm:$0x7] %vm662, 0
        %v675 = vld [vmem:[%s658] sm:$0xf]
        %v676 = vld [vmem:[%s658 + $0x4] sm:$0xf]
        %v677 = vld [vmem:[%s658 + $0x8] sm:$0xf]
        %v678 = vld [vmem:[%s658 + $0xc] sm:$0xf]
        %v679 = vld [vmem:[%s7] sm:$0xf]
        %v680 = vld [vmem:[%s7 + $0x4] sm:$0xf]
        %v681 = vld [vmem:[%s7 + $0x8] sm:$0xf]
        %v682 = vld [vmem:[%s7 + $0xc] sm:$0xf]
        %v683 = vld [vmem:[%s8] sm:$0x1]
        %v685 = vperm.slane %v683, 0
        %v691 = vunpack.c.l.b16 %v675
        %v692 = vunpack.c.l.b16 %v676
        %v693 = vunpack.c.l.b16 %v677
        %v694 = vunpack.c.l.b16 %v678
        %v695 = vpack.c.b16 %v692, %v691
        %v696 = vpack.c.b16 %v694, %v693
        %v701 = vunpack.c.l.b16 %v679
        %v702 = vunpack.c.l.b16 %v680
        %v703 = vunpack.c.l.b16 %v681
        %v704 = vunpack.c.l.b16 %v682
        %v705 = vpack.c.b16 %v702, %v701
        %v706 = vpack.c.b16 %v704, %v703
        %vm709 = vcmask 261120
        %v711 = vsel %vm709, %v695, 0
        %v714 = vsel %vm709, %v696, 0
        %716 = vmatpush.bf16.msra.mxu0 0
        %717 = vmatpush.bf16.msra.mxu0 0
        %718 = vmatpush.bf16.msra.mxu0 0
        %719 = vmatpush.bf16.msra.mxu0 0
        %720 = vmatpush.bf16.msra.mxu0 0
        %721 = vmatpush.bf16.msra.mxu0 0
        %722 = vmatpush.bf16.msra.mxu0 %v706
        %723 = vmatpush.bf16.msra.mxu0 %v705
        %724 = vmatmul.bf16.gmra.mxu0 %v711
        %v725 = vpop.f32.mrf.mxu0
        %v726 = vadd.f32 %v685, %v725
        %v727 = vpop.f32.mrf.mxu0
        %v728 = vadd.f32 %v685, %v727
        %729 = vmatmul.bf16.gmra.mxu0 %v714
        %v730 = vpop.f32.mrf.mxu0
        %v731 = vadd.f32 %v685, %v730
        %v732 = vpop.f32.mrf.mxu0
        %v733 = vadd.f32 %v685, %v732
        %734 = vdwg.mxu0
        %v735 = vld [vmem:[%s1] sm:$0xf]
        %v736 = vld [vmem:[%s1 + $0x4] sm:$0xf]
        %v737 = vld [vmem:[%s1 + $0x8] sm:$0xf]
        %v738 = vld [vmem:[%s1 + $0xc] sm:$0xf]
        %v739 = vld [vmem:[%s2] sm:$0x1]
        %v741 = vperm.slane %v739, 0
        %v747 = vunpack.c.l.b16 %v735
        %v748 = vunpack.c.l.b16 %v736
        %v749 = vunpack.c.l.b16 %v737
        %v750 = vunpack.c.l.b16 %v738
        %v751 = vpack.c.b16 %v748, %v747
        %v752 = vpack.c.b16 %v750, %v749
        %755 = vmatpush.bf16.msra.mxu0 0
        %756 = vmatpush.bf16.msra.mxu0 0
        %757 = vmatpush.bf16.msra.mxu0 0
        %758 = vmatpush.bf16.msra.mxu0 0
        %759 = vmatpush.bf16.msra.mxu0 0
        %760 = vmatpush.bf16.msra.mxu0 0
        %761 = vmatpush.bf16.msra.mxu0 %v752
        %762 = vmatpush.bf16.msra.mxu0 %v751
        %763 = vmatmul.bf16.gmra.mxu0 %v711
        %v764 = vpop.f32.mrf.mxu0
        %v765 = vadd.f32 %v741, %v764
        %v766 = vpop.f32.mrf.mxu0
        %v767 = vadd.f32 %v741, %v766
        %768 = vmatmul.bf16.gmra.mxu0 %v714
        %v769 = vpop.f32.mrf.mxu0
        %v770 = vadd.f32 %v741, %v769
        %v771 = vpop.f32.mrf.mxu0
        %v772 = vadd.f32 %v741, %v771
        %773 = vdwg.mxu0
        %v774 = vmax.f32 %v765, 0.0
        %v775 = vmax.f32 %v767, 0.0
        %v776 = vmax.f32 %v770, 0.0
        %v777 = vmax.f32 %v772, 0.0
        %v778 = vpack.c.bf16 %v774, %v774
        %v779 = vpack.c.bf16 %v775, %v775
        %v780 = vpack.c.bf16 %v776, %v776
        %v781 = vpack.c.bf16 %v777, %v777
        %v786 = vrot.slane %v778, 2
        %v787 = vrot.slane %v779, 2
        %v788 = vrot.slane %v780, 2
        %v789 = vrot.slane %v781, 2
        %vm790 = vcmask 1041408
        %v793 = vsel %vm790, %v778, %v786
        %vm794 = vcmask 1043458
        %v795 = vsel %vm794, %v778, %v786
        %v797 = vrot.slane %v795, 2
        %v800 = vsel %vm790, %v779, %v787
        %v801 = vsel %vm794, %v779, %v787
        %v803 = vrot.slane %v801, 2
        %v806 = vsel %vm790, %v780, %v788
        %v807 = vsel %vm794, %v780, %v788
        %v809 = vrot.slane %v807, 2
        %v812 = vsel %vm790, %v781, %v789
        %v813 = vsel %vm794, %v781, %v789
        %v815 = vrot.slane %v813, 2
        %816 = vst [vmem:[#allocation1] ss:$2 sm:$0xff] %v793
        %v817 = vld.sshfl [vmem:[#allocation1] sm:$0xff pattern:$0x75643120]
        %s819 = scalar_lea.vmem [#allocation1], 16
        %820 = vst [vmem:[%s819] ss:$2 sm:$0xff] %v797
        %v821 = vld.sshfl [vmem:[#allocation1 + $0x10] sm:$0xff pattern:$0x75643120]
        %s822 = scalar_lea.vmem [#allocation1], 32
        %823 = vst [vmem:[%s822] ss:$2 sm:$0xff] %v800
        %v824 = vld.sshfl [vmem:[#allocation1 + $0x20] sm:$0xff pattern:$0x75643120]
        %s826 = scalar_lea.vmem [#allocation1], 48
        %827 = vst [vmem:[%s826] ss:$2 sm:$0xff] %v803
        %v828 = vld.sshfl [vmem:[#allocation1 + $0x30] sm:$0xff pattern:$0x75643120]
        %829 = vst [vmem:[#allocation1] ss:$2 sm:$0xff] %v806
        %v830 = vld.sshfl [vmem:[#allocation1] sm:$0xff pattern:$0x75643120]
        %832 = vst [vmem:[%s819] ss:$2 sm:$0xff] %v809
        %v833 = vld.sshfl [vmem:[#allocation1 + $0x10] sm:$0xff pattern:$0x75643120]
        %834 = vst [vmem:[%s822] ss:$2 sm:$0xff] %v812
        %v835 = vld.sshfl [vmem:[#allocation1 + $0x20] sm:$0xff pattern:$0x75643120]
        %837 = vst [vmem:[%s826] ss:$2 sm:$0xff] %v815
        %v838 = vld.sshfl [vmem:[#allocation1 + $0x30] sm:$0xff pattern:$0x75643120]
        %v839 = vshrl.u32 %v817, 16
        %v841 = vrot.slane %v839, 7
        %v842 = vshll.u32 %v817, 16
        %v844 = vor.u32 %v841, %v842
        %v845 = vshrl.u32 %v821, 16
        %v847 = vrot.slane %v845, 7
        %v848 = vshll.u32 %v821, 16
        %v850 = vor.u32 %v847, %v848
        %v851 = vshrl.u32 %v824, 16
        %v853 = vrot.slane %v851, 7
        %v854 = vshll.u32 %v824, 16
        %v856 = vor.u32 %v853, %v854
        %v857 = vshrl.u32 %v828, 16
        %v859 = vrot.slane %v857, 7
        %v860 = vshll.u32 %v828, 16
        %v862 = vor.u32 %v859, %v860
        %v863 = vshrl.u32 %v830, 16
        %v865 = vrot.slane %v863, 7
        %v866 = vshll.u32 %v830, 16
        %v868 = vor.u32 %v865, %v866
        %v869 = vshrl.u32 %v833, 16
        %v871 = vrot.slane %v869, 7
        %v872 = vshll.u32 %v833, 16
        %v874 = vor.u32 %v871, %v872
        %v875 = vshrl.u32 %v835, 16
        %v877 = vrot.slane %v875, 7
        %v878 = vshll.u32 %v835, 16
        %v880 = vor.u32 %v877, %v878
        %v881 = vshrl.u32 %v838, 16
        %v883 = vrot.slane %v881, 7
        %v884 = vshll.u32 %v838, 16
        %v886 = vor.u32 %v883, %v884
        %s895 = scalar_lea.vmem [#allocation2], 4
        %vm896 = vcmask 124928
        %vm897 = vsmask.f32 2306
        %vm898 = vmand %vm896, %vm897
        %v899 = vld [vmem:[%s895] sm:$0x7]
        %v900 = vsel %vm898, %v844, %v899
        %901 = vst [vmem:[%s895] sm:$0x7] %v900
        %v902 = vld [vmem:[%s895 + $0x4] sm:$0x7]
        %v903 = vsel %vm898, %v850, %v902
        %904 = vst [vmem:[%s895 + $0x4] sm:$0x7] %v903
        %v905 = vld [vmem:[%s895 + $0x8] sm:$0x7]
        %v906 = vsel %vm898, %v856, %v905
        %907 = vst [vmem:[%s895 + $0x8] sm:$0x7] %v906
        %v908 = vld [vmem:[%s895 + $0xc] sm:$0x7]
        %v909 = vsel %vm898, %v862, %v908
        %910 = vst [vmem:[%s895 + $0xc] sm:$0x7] %v909
        %v911 = vld [vmem:[%s895 + $0x18] sm:$0x7]
        %v912 = vsel %vm898, %v868, %v911
        %913 = vst [vmem:[%s895 + $0x18] sm:$0x7] %v912
        %v914 = vld [vmem:[%s895 + $0x1c] sm:$0x7]
        %v915 = vsel %vm898, %v874, %v914
        %916 = vst [vmem:[%s895 + $0x1c] sm:$0x7] %v915
        %v917 = vld [vmem:[%s895 + $0x20] sm:$0x7]
        %v918 = vsel %vm898, %v880, %v917
        %919 = vst [vmem:[%s895 + $0x20] sm:$0x7] %v918
        %v920 = vld [vmem:[%s895 + $0x24] sm:$0x7]
        %v921 = vsel %vm898, %v886, %v920
        %922 = vst [vmem:[%s895 + $0x24] sm:$0x7] %v921
        %v923 = vld [vmem:[#allocation2] sm:$0x3]
        %v924 = vld [vmem:[#allocation2 + $0x4] sm:$0x3]
        %v925 = vld [vmem:[#allocation2 + $0x8] sm:$0x3]
        %v926 = vld [vmem:[#allocation2 + $0xc] sm:$0x3]
        %v927 = vld [vmem:[#allocation2 + $0x18] sm:$0x3]
        %v928 = vld [vmem:[#allocation2 + $0x1c] sm:$0x3]
        %v929 = vld [vmem:[#allocation2 + $0x20] sm:$0x3]
        %v930 = vld [vmem:[#allocation2 + $0x24] sm:$0x3]
        %v931 = vld [vmem:[%s3] sm:$0xf]
        %v932 = vld [vmem:[%s3 + $0x4] sm:$0xf]
        %v933 = vld [vmem:[#allocation2] sm:$0x7]
        %v934 = vld [vmem:[#allocation2 + $0x4] sm:$0x7]
        %v935 = vld [vmem:[#allocation2 + $0x8] sm:$0x7]
        %v936 = vld [vmem:[#allocation2 + $0xc] sm:$0x7]
        %v937 = vld [vmem:[#allocation2 + $0x18] sm:$0x7]
        %v938 = vld [vmem:[#allocation2 + $0x1c] sm:$0x7]
        %v939 = vld [vmem:[#allocation2 + $0x20] sm:$0x7]
        %v940 = vld [vmem:[#allocation2 + $0x24] sm:$0x7]
        %v949 = vrot.slane %v933, 2
        %v950 = vrot.slane %v934, 2
        %v951 = vrot.slane %v935, 2
        %v952 = vrot.slane %v936, 2
        %v953 = vrot.slane %v937, 2
        %v954 = vrot.slane %v938, 2
        %v955 = vrot.slane %v939, 2
        %v956 = vrot.slane %v940, 2
        %v959 = vsel %vm790, %v933, %v949
        %v960 = vsel %vm794, %v933, %v949
        %v962 = vrot.slane %v960, 2
        %v965 = vsel %vm790, %v934, %v950
        %v966 = vsel %vm794, %v934, %v950
        %v968 = vrot.slane %v966, 2
        %v971 = vsel %vm790, %v935, %v951
        %v972 = vsel %vm794, %v935, %v951
        %v974 = vrot.slane %v972, 2
        %v977 = vsel %vm790, %v936, %v952
        %v978 = vsel %vm794, %v936, %v952
        %v980 = vrot.slane %v978, 2
        %v983 = vsel %vm790, %v937, %v953
        %v984 = vsel %vm794, %v937, %v953
        %v986 = vrot.slane %v984, 2
        %v989 = vsel %vm790, %v938, %v954
        %v990 = vsel %vm794, %v938, %v954
        %v992 = vrot.slane %v990, 2
        %v995 = vsel %vm790, %v939, %v955
        %v996 = vsel %vm794, %v939, %v955
        %v998 = vrot.slane %v996, 2
        %v1001 = vsel %vm790, %v940, %v956
        %v1002 = vsel %vm794, %v940, %v956
        %v1004 = vrot.slane %v1002, 2
        %vm1005 = vsmask.f32 1280
        %vm1006 = vsmask.f32 3336
        %vm1007 = vmor %vm1005, %vm1006
        %vm1008 = vsmask.f32 5392
        %vm1009 = vmor %vm1007, %vm1008
        %vm1010 = vsmask.f32 7448
        %vm1011 = vmor %vm1009, %vm1010
        %v1012 = vshrl.u32 %v959, 16
        %v1014 = vrot.slane %v1012, 6
        %v1015 = vshll.u32 %v959, 16
        %v1017 = vrot.slane %v1015, 7
        %v1018 = vor.u32 %v1014, %v1017
        %v1019 = vrot.slane %v1018, 2
        %v1021 = vshll.u32 %v962, 16
        %v1023 = vrot.slane %v1021, 7
        %v1024 = vsel %vm1011, %v1019, %v1023
        %v1025 = vshrl.u32 %v965, 16
        %v1027 = vrot.slane %v1025, 6
        %v1028 = vshll.u32 %v965, 16
        %v1030 = vrot.slane %v1028, 7
        %v1031 = vor.u32 %v1027, %v1030
        %v1032 = vrot.slane %v1031, 2
        %v1034 = vshll.u32 %v968, 16
        %v1036 = vrot.slane %v1034, 7
        %v1037 = vsel %vm1011, %v1032, %v1036
        %v1038 = vshrl.u32 %v971, 16
        %v1040 = vrot.slane %v1038, 6
        %v1041 = vshll.u32 %v971, 16
        %v1043 = vrot.slane %v1041, 7
        %v1044 = vor.u32 %v1040, %v1043
        %v1045 = vrot.slane %v1044, 2
        %v1047 = vshll.u32 %v974, 16
        %v1049 = vrot.slane %v1047, 7
        %v1050 = vsel %vm1011, %v1045, %v1049
        %v1051 = vshrl.u32 %v977, 16
        %v1053 = vrot.slane %v1051, 6
        %v1054 = vshll.u32 %v977, 16
        %v1056 = vrot.slane %v1054, 7
        %v1057 = vor.u32 %v1053, %v1056
        %v1058 = vrot.slane %v1057, 2
        %v1060 = vshll.u32 %v980, 16
        %v1062 = vrot.slane %v1060, 7
        %v1063 = vsel %vm1011, %v1058, %v1062
        %v1064 = vshrl.u32 %v983, 16
        %v1066 = vrot.slane %v1064, 6
        %v1067 = vshll.u32 %v983, 16
        %v1069 = vrot.slane %v1067, 7
        %v1070 = vor.u32 %v1066, %v1069
        %v1071 = vrot.slane %v1070, 2
        %v1073 = vshll.u32 %v986, 16
        %v1075 = vrot.slane %v1073, 7
        %v1076 = vsel %vm1011, %v1071, %v1075
        %v1077 = vshrl.u32 %v989, 16
        %v1079 = vrot.slane %v1077, 6
        %v1080 = vshll.u32 %v989, 16
        %v1082 = vrot.slane %v1080, 7
        %v1083 = vor.u32 %v1079, %v1082
        %v1084 = vrot.slane %v1083, 2
        %v1086 = vshll.u32 %v992, 16
        %v1088 = vrot.slane %v1086, 7
        %v1089 = vsel %vm1011, %v1084, %v1088
        %v1090 = vshrl.u32 %v995, 16
        %v1092 = vrot.slane %v1090, 6
        %v1093 = vshll.u32 %v995, 16
        %v1095 = vrot.slane %v1093, 7
        %v1096 = vor.u32 %v1092, %v1095
        %v1097 = vrot.slane %v1096, 2
        %v1099 = vshll.u32 %v998, 16
        %v1101 = vrot.slane %v1099, 7
        %v1102 = vsel %vm1011, %v1097, %v1101
        %v1103 = vshrl.u32 %v1001, 16
        %v1105 = vrot.slane %v1103, 6
        %v1106 = vshll.u32 %v1001, 16
        %v1108 = vrot.slane %v1106, 7
        %v1109 = vor.u32 %v1105, %v1108
        %v1110 = vrot.slane %v1109, 2
        %v1112 = vshll.u32 %v1004, 16
        %v1114 = vrot.slane %v1112, 7
        %v1115 = vsel %vm1011, %v1110, %v1114
        %s1116 = scalar_lea.vmem %s3, 8
        %v1117 = vld [vmem:[%s1116] sm:$0xf]
        %v1118 = vld [vmem:[%s1116 + $0x4] sm:$0xf]
        %1120 = vst [vmem:[#allocation1] ss:$4 sm:$0xff] %v1024
        %s1122 = scalar_lea.vmem [#allocation1], 1
        %1123 = vst [vmem:[%s1122] ss:$4 sm:$0xff] %v1037
        %s1125 = scalar_lea.vmem [#allocation1], 2
        %1126 = vst [vmem:[%s1125] ss:$4 sm:$0xff] %v1050
        %s1128 = scalar_lea.vmem [#allocation1], 3
        %1129 = vst [vmem:[%s1128] ss:$4 sm:$0xff] %v1063
        %s1131 = scalar_lea.vmem [#allocation1], 32
        %1132 = vst [vmem:[%s1131] ss:$4 sm:$0xff] %v1076
        %s1134 = scalar_lea.vmem [#allocation1], 33
        %1135 = vst [vmem:[%s1134] ss:$4 sm:$0xff] %v1089
        %s1137 = scalar_lea.vmem [#allocation1], 34
        %1138 = vst [vmem:[%s1137] ss:$4 sm:$0xff] %v1102
        %s1140 = scalar_lea.vmem [#allocation1], 35
        %1141 = vst [vmem:[%s1140] ss:$4 sm:$0xff] %v1115
        %v1142 = vld.sshfl [vmem:[#allocation1] sm:$0xff pattern:$0x73625140]
        %v1143 = vld.sshfl [vmem:[#allocation1 + $0x20] sm:$0xff pattern:$0x73625140]
        %v1146 = vunpack.c.l.b16 %v1117
        %v1147 = vunpack.c.l.b16 %v1118
        %v1148 = vpack.c.b16 %v1147, %v1146
        %vm1150 = vcmask 130048
        %v1151 = vsel %vm1150, %v1142, 0
        %v1153 = vsel %vm1150, %v1143, 0
        %1155 = vmatpush.bf16.msra.mxu0 0
        %1156 = vmatpush.bf16.msra.mxu0 0
        %1157 = vmatpush.bf16.msra.mxu0 0
        %1158 = vmatpush.bf16.msra.mxu0 0
        %1159 = vmatpush.bf16.msra.mxu0 0
        %1160 = vmatpush.bf16.msra.mxu0 0
        %1161 = vmatpush.bf16.msra.mxu0 0
        %1162 = vmatpush.bf16.msra.mxu0 %v1148
        %1163 = vmatmul.bf16.gmra.mxu0 %v1151
        %v1164 = vpop.f32.mrf.mxu0
        %v1165 = vadd.f32 0.0, %v1164
        %v1166 = vpop.f32.mrf.mxu0
        %v1167 = vadd.f32 0.0, %v1166
        %1168 = vmatmul.bf16.gmra.mxu0 %v1153
        %v1169 = vpop.f32.mrf.mxu0
        %v1170 = vadd.f32 0.0, %v1169
        %v1171 = vpop.f32.mrf.mxu0
        %v1172 = vadd.f32 0.0, %v1171
        %1173 = vdwg.mxu0
        %1175 = vst [vmem:[#allocation1] ss:$4 sm:$0xff] %v923
        %s1177 = scalar_lea.vmem [#allocation1], 1
        %1178 = vst [vmem:[%s1177] ss:$4 sm:$0xff] %v924
        %s1180 = scalar_lea.vmem [#allocation1], 2
        %1181 = vst [vmem:[%s1180] ss:$4 sm:$0xff] %v925
        %s1183 = scalar_lea.vmem [#allocation1], 3
        %1184 = vst [vmem:[%s1183] ss:$4 sm:$0xff] %v926
        %s1186 = scalar_lea.vmem [#allocation1], 32
        %1187 = vst [vmem:[%s1186] ss:$4 sm:$0xff] %v927
        %s1189 = scalar_lea.vmem [#allocation1], 33
        %1190 = vst [vmem:[%s1189] ss:$4 sm:$0xff] %v928
        %s1192 = scalar_lea.vmem [#allocation1], 34
        %1193 = vst [vmem:[%s1192] ss:$4 sm:$0xff] %v929
        %s1195 = scalar_lea.vmem [#allocation1], 35
        %1196 = vst [vmem:[%s1195] ss:$4 sm:$0xff] %v930
        %v1197 = vld.sshfl [vmem:[#allocation1] sm:$0xff pattern:$0x73625140]
        %v1198 = vld.sshfl [vmem:[#allocation1 + $0x20] sm:$0xff pattern:$0x73625140]
        %v1201 = vunpack.c.l.b16 %v931
        %v1202 = vunpack.c.l.b16 %v932
        %v1203 = vpack.c.b16 %v1202, %v1201
        %v1205 = vsel %vm1150, %v1197, 0
        %v1207 = vsel %vm1150, %v1198, 0
        %1209 = vmatpush.bf16.msra.mxu0 0
        %1210 = vmatpush.bf16.msra.mxu0 0
        %1211 = vmatpush.bf16.msra.mxu0 0
        %1212 = vmatpush.bf16.msra.mxu0 0
        %1213 = vmatpush.bf16.msra.mxu0 0
        %1214 = vmatpush.bf16.msra.mxu0 0
        %1215 = vmatpush.bf16.msra.mxu0 0
        %1216 = vmatpush.bf16.msra.mxu0 %v1203
        %1217 = vmatmul.bf16.gmra.mxu0 %v1205
        %v1218 = vpop.f32.mrf.mxu0
        %v1219 = vadd.f32 %v1165, %v1218
        %v1220 = vpop.f32.mrf.mxu0
        %v1221 = vadd.f32 %v1167, %v1220
        %1222 = vmatmul.bf16.gmra.mxu0 %v1207
        %v1223 = vpop.f32.mrf.mxu0
        %v1224 = vadd.f32 %v1170, %v1223
        %v1225 = vpop.f32.mrf.mxu0
        %v1226 = vadd.f32 %v1172, %v1225
        %1227 = vdwg.mxu0
        %v1228 = vld [vmem:[#allocation2] sm:$0x6]
        %v1229 = vld [vmem:[#allocation2 + $0x4] sm:$0x6]
        %v1230 = vld [vmem:[#allocation2 + $0x8] sm:$0x6]
        %v1231 = vld [vmem:[#allocation2 + $0xc] sm:$0x6]
        %v1232 = vld [vmem:[#allocation2 + $0x18] sm:$0x6]
        %v1233 = vld [vmem:[#allocation2 + $0x1c] sm:$0x6]
        %v1234 = vld [vmem:[#allocation2 + $0x20] sm:$0x6]
        %v1235 = vld [vmem:[#allocation2 + $0x24] sm:$0x6]
        %v1244 = vrot.slane %v1228, 2
        %v1245 = vrot.slane %v1229, 2
        %v1246 = vrot.slane %v1230, 2
        %v1247 = vrot.slane %v1231, 2
        %v1248 = vrot.slane %v1232, 2
        %v1249 = vrot.slane %v1233, 2
        %v1250 = vrot.slane %v1234, 2
        %v1251 = vrot.slane %v1235, 2
        %v1254 = vsel %vm790, %v1228, %v1244
        %v1256 = vsel %vm794, %v1228, %v1244
        %v1258 = vrot.slane %v1256, 2
        %v1261 = vsel %vm790, %v1229, %v1245
        %v1263 = vsel %vm794, %v1229, %v1245
        %v1265 = vrot.slane %v1263, 2
        %v1268 = vsel %vm790, %v1230, %v1246
        %v1270 = vsel %vm794, %v1230, %v1246
        %v1272 = vrot.slane %v1270, 2
        %v1275 = vsel %vm790, %v1231, %v1247
        %v1277 = vsel %vm794, %v1231, %v1247
        %v1279 = vrot.slane %v1277, 2
        %v1282 = vsel %vm790, %v1232, %v1248
        %v1284 = vsel %vm794, %v1232, %v1248
        %v1286 = vrot.slane %v1284, 2
        %v1289 = vsel %vm790, %v1233, %v1249
        %v1291 = vsel %vm794, %v1233, %v1249
        %v1293 = vrot.slane %v1291, 2
        %v1296 = vsel %vm790, %v1234, %v1250
        %v1298 = vsel %vm794, %v1234, %v1250
        %v1300 = vrot.slane %v1298, 2
        %v1303 = vsel %vm790, %v1235, %v1251
        %v1305 = vsel %vm794, %v1235, %v1251
        %v1307 = vrot.slane %v1305, 2
        %vm1308 = vcmask 1040384
        %vm1309 = vcmask 1042434
        %vm1310 = vmor %vm1308, %vm1309
        %vm1311 = vcmask 1044484
        %vm1312 = vmor %vm1310, %vm1311
        %vm1313 = vcmask 1046534
        %vm1314 = vmor %vm1312, %vm1313
        %v1315 = vrot.slane %v1254, 7
        %v1316 = vrot.slane %v1315, 2
        %v1317 = vrot.slane %v1258, 7
        %v1318 = vsel %vm1314, %v1316, %v1317
        %v1319 = vrot.slane %v1261, 7
        %v1320 = vrot.slane %v1319, 2
        %v1321 = vrot.slane %v1265, 7
        %v1322 = vsel %vm1314, %v1320, %v1321
        %v1323 = vrot.slane %v1268, 7
        %v1324 = vrot.slane %v1323, 2
        %v1325 = vrot.slane %v1272, 7
        %v1326 = vsel %vm1314, %v1324, %v1325
        %v1327 = vrot.slane %v1275, 7
        %v1328 = vrot.slane %v1327, 2
        %v1329 = vrot.slane %v1279, 7
        %v1330 = vsel %vm1314, %v1328, %v1329
        %v1331 = vrot.slane %v1282, 7
        %v1332 = vrot.slane %v1331, 2
        %v1333 = vrot.slane %v1286, 7
        %v1334 = vsel %vm1314, %v1332, %v1333
        %v1335 = vrot.slane %v1289, 7
        %v1336 = vrot.slane %v1335, 2
        %v1337 = vrot.slane %v1293, 7
        %v1338 = vsel %vm1314, %v1336, %v1337
        %v1339 = vrot.slane %v1296, 7
        %v1340 = vrot.slane %v1339, 2
        %v1341 = vrot.slane %v1300, 7
        %v1342 = vsel %vm1314, %v1340, %v1341
        %v1343 = vrot.slane %v1303, 7
        %v1344 = vrot.slane %v1343, 2
        %v1345 = vrot.slane %v1307, 7
        %v1346 = vsel %vm1314, %v1344, %v1345
        %s1347 = scalar_lea.vmem %s3, 16
        %v1348 = vld [vmem:[%s1347] sm:$0xf]
        %v1349 = vld [vmem:[%s1347 + $0x4] sm:$0xf]
        %1351 = vst [vmem:[#allocation1] ss:$4 sm:$0xff] %v1318
        %s1353 = scalar_lea.vmem [#allocation1], 1
        %1354 = vst [vmem:[%s1353] ss:$4 sm:$0xff] %v1322
        %s1356 = scalar_lea.vmem [#allocation1], 2
        %1357 = vst [vmem:[%s1356] ss:$4 sm:$0xff] %v1326
        %s1359 = scalar_lea.vmem [#allocation1], 3
        %1360 = vst [vmem:[%s1359] ss:$4 sm:$0xff] %v1330
        %s1362 = scalar_lea.vmem [#allocation1], 32
        %1363 = vst [vmem:[%s1362] ss:$4 sm:$0xff] %v1334
        %s1365 = scalar_lea.vmem [#allocation1], 33
        %1366 = vst [vmem:[%s1365] ss:$4 sm:$0xff] %v1338
        %s1368 = scalar_lea.vmem [#allocation1], 34
        %1369 = vst [vmem:[%s1368] ss:$4 sm:$0xff] %v1342
        %s1371 = scalar_lea.vmem [#allocation1], 35
        %1372 = vst [vmem:[%s1371] ss:$4 sm:$0xff] %v1346
        %v1373 = vld.sshfl [vmem:[#allocation1] sm:$0xff pattern:$0x73625140]
        %v1374 = vld.sshfl [vmem:[#allocation1 + $0x20] sm:$0xff pattern:$0x73625140]
        %v1377 = vunpack.c.l.b16 %v1348
        %v1378 = vunpack.c.l.b16 %v1349
        %v1379 = vpack.c.b16 %v1378, %v1377
        %v1381 = vsel %vm1150, %v1373, 0
        %v1383 = vsel %vm1150, %v1374, 0
        %1385 = vmatpush.bf16.msra.mxu0 0
        %1386 = vmatpush.bf16.msra.mxu0 0
        %1387 = vmatpush.bf16.msra.mxu0 0
        %1388 = vmatpush.bf16.msra.mxu0 0
        %1389 = vmatpush.bf16.msra.mxu0 0
        %1390 = vmatpush.bf16.msra.mxu0 0
        %1391 = vmatpush.bf16.msra.mxu0 0
        %1392 = vmatpush.bf16.msra.mxu0 %v1379
        %1393 = vmatmul.bf16.gmra.mxu0 %v1381
        %v1394 = vpop.f32.mrf.mxu0
        %v1395 = vadd.f32 0.0, %v1394
        %v1396 = vpop.f32.mrf.mxu0
        %v1397 = vadd.f32 0.0, %v1396
        %1398 = vmatmul.bf16.gmra.mxu0 %v1383
        %v1399 = vpop.f32.mrf.mxu0
        %v1400 = vadd.f32 0.0, %v1399
        %v1401 = vpop.f32.mrf.mxu0
        %v1402 = vadd.f32 0.0, %v1401
        %1403 = vdwg.mxu0
        %v1404 = vadd.f32 %v1219, %v1395
        %v1405 = vadd.f32 %v1221, %v1397
        %v1406 = vadd.f32 %v1224, %v1400
        %v1407 = vadd.f32 %v1226, %v1402
        %v1408 = vld [vmem:[%s895] sm:$0x3]
        %v1409 = vld [vmem:[%s895 + $0x4] sm:$0x3]
        %v1410 = vld [vmem:[%s895 + $0x8] sm:$0x3]
        %v1411 = vld [vmem:[%s895 + $0xc] sm:$0x3]
        %v1412 = vld [vmem:[%s895 + $0x18] sm:$0x3]
        %v1413 = vld [vmem:[%s895 + $0x1c] sm:$0x3]
        %v1414 = vld [vmem:[%s895 + $0x20] sm:$0x3]
        %v1415 = vld [vmem:[%s895 + $0x24] sm:$0x3]
        %s1416 = scalar_lea.vmem %s3, 24
        %v1417 = vld [vmem:[%s1416] sm:$0xf]
        %v1418 = vld [vmem:[%s1416 + $0x4] sm:$0xf]
        %1420 = vst [vmem:[#allocation1] ss:$4 sm:$0xff] %v1408
        %s1422 = scalar_lea.vmem [#allocation1], 1
        %1423 = vst [vmem:[%s1422] ss:$4 sm:$0xff] %v1409
        %s1425 = scalar_lea.vmem [#allocation1], 2
        %1426 = vst [vmem:[%s1425] ss:$4 sm:$0xff] %v1410
        %s1428 = scalar_lea.vmem [#allocation1], 3
        %1429 = vst [vmem:[%s1428] ss:$4 sm:$0xff] %v1411
        %s1431 = scalar_lea.vmem [#allocation1], 32
        %1432 = vst [vmem:[%s1431] ss:$4 sm:$0xff] %v1412
        %s1434 = scalar_lea.vmem [#allocation1], 33
        %1435 = vst [vmem:[%s1434] ss:$4 sm:$0xff] %v1413
        %s1437 = scalar_lea.vmem [#allocation1], 34
        %1438 = vst [vmem:[%s1437] ss:$4 sm:$0xff] %v1414
        %s1440 = scalar_lea.vmem [#allocation1], 35
        %1441 = vst [vmem:[%s1440] ss:$4 sm:$0xff] %v1415
        %v1442 = vld.sshfl [vmem:[#allocation1] sm:$0xff pattern:$0x73625140]
        %v1443 = vld.sshfl [vmem:[#allocation1 + $0x20] sm:$0xff pattern:$0x73625140]
        %v1446 = vunpack.c.l.b16 %v1417
        %v1447 = vunpack.c.l.b16 %v1418
        %v1448 = vpack.c.b16 %v1447, %v1446
        %v1450 = vsel %vm1150, %v1442, 0
        %v1452 = vsel %vm1150, %v1443, 0
        %1454 = vmatpush.bf16.msra.mxu0 0
        %1455 = vmatpush.bf16.msra.mxu0 0
        %1456 = vmatpush.bf16.msra.mxu0 0
        %1457 = vmatpush.bf16.msra.mxu0 0
        %1458 = vmatpush.bf16.msra.mxu0 0
        %1459 = vmatpush.bf16.msra.mxu0 0
        %1460 = vmatpush.bf16.msra.mxu0 0
        %1461 = vmatpush.bf16.msra.mxu0 %v1448
        %1462 = vmatmul.bf16.gmra.mxu0 %v1450
        %v1463 = vpop.f32.mrf.mxu0
        %v1464 = vadd.f32 0.0, %v1463
        %v1465 = vpop.f32.mrf.mxu0
        %v1466 = vadd.f32 0.0, %v1465
        %1467 = vmatmul.bf16.gmra.mxu0 %v1452
        %v1468 = vpop.f32.mrf.mxu0
        %v1469 = vadd.f32 0.0, %v1468
        %v1470 = vpop.f32.mrf.mxu0
        %v1471 = vadd.f32 0.0, %v1470
        %1472 = vdwg.mxu0
        %v1473 = vadd.f32 %v1404, %v1464
        %v1474 = vadd.f32 %v1405, %v1466
        %v1475 = vadd.f32 %v1406, %v1469
        %v1476 = vadd.f32 %v1407, %v1471
        %v1477 = vld [vmem:[%s895] sm:$0x7]
        %v1478 = vld [vmem:[%s895 + $0x4] sm:$0x7]
        %v1479 = vld [vmem:[%s895 + $0x8] sm:$0x7]
        %v1480 = vld [vmem:[%s895 + $0xc] sm:$0x7]
        %v1481 = vld [vmem:[%s895 + $0x18] sm:$0x7]
        %v1482 = vld [vmem:[%s895 + $0x1c] sm:$0x7]
        %v1483 = vld [vmem:[%s895 + $0x20] sm:$0x7]
        %v1484 = vld [vmem:[%s895 + $0x24] sm:$0x7]
        %v1493 = vrot.slane %v1477, 2
        %v1494 = vrot.slane %v1478, 2
        %v1495 = vrot.slane %v1479, 2
        %v1496 = vrot.slane %v1480, 2
        %v1497 = vrot.slane %v1481, 2
        %v1498 = vrot.slane %v1482, 2
        %v1499 = vrot.slane %v1483, 2
        %v1500 = vrot.slane %v1484, 2
        %v1503 = vsel %vm790, %v1477, %v1493
        %v1504 = vsel %vm794, %v1477, %v1493
        %v1506 = vrot.slane %v1504, 2
        %v1509 = vsel %vm790, %v1478, %v1494
        %v1510 = vsel %vm794, %v1478, %v1494
        %v1512 = vrot.slane %v1510, 2
        %v1515 = vsel %vm790, %v1479, %v1495
        %v1516 = vsel %vm794, %v1479, %v1495
        %v1518 = vrot.slane %v1516, 2
        %v1521 = vsel %vm790, %v1480, %v1496
        %v1522 = vsel %vm794, %v1480, %v1496
        %v1524 = vrot.slane %v1522, 2
        %v1527 = vsel %vm790, %v1481, %v1497
        %v1528 = vsel %vm794, %v1481, %v1497
        %v1530 = vrot.slane %v1528, 2
        %v1533 = vsel %vm790, %v1482, %v1498
        %v1534 = vsel %vm794, %v1482, %v1498
        %v1536 = vrot.slane %v1534, 2
        %v1539 = vsel %vm790, %v1483, %v1499
        %v1540 = vsel %vm794, %v1483, %v1499
        %v1542 = vrot.slane %v1540, 2
        %v1545 = vsel %vm790, %v1484, %v1500
        %v1546 = vsel %vm794, %v1484, %v1500
        %v1548 = vrot.slane %v1546, 2
        %v1549 = vshrl.u32 %v1503, 16
        %v1551 = vrot.slane %v1549, 6
        %v1552 = vshll.u32 %v1503, 16
        %v1554 = vrot.slane %v1552, 7
        %v1555 = vor.u32 %v1551, %v1554
        %v1556 = vrot.slane %v1555, 2
        %v1558 = vshll.u32 %v1506, 16
        %v1560 = vrot.slane %v1558, 7
        %v1561 = vsel %vm1011, %v1556, %v1560
        %v1562 = vshrl.u32 %v1509, 16
        %v1564 = vrot.slane %v1562, 6
        %v1565 = vshll.u32 %v1509, 16
        %v1567 = vrot.slane %v1565, 7
        %v1568 = vor.u32 %v1564, %v1567
        %v1569 = vrot.slane %v1568, 2
        %v1571 = vshll.u32 %v1512, 16
        %v1573 = vrot.slane %v1571, 7
        %v1574 = vsel %vm1011, %v1569, %v1573
        %v1575 = vshrl.u32 %v1515, 16
        %v1577 = vrot.slane %v1575, 6
        %v1578 = vshll.u32 %v1515, 16
        %v1580 = vrot.slane %v1578, 7
        %v1581 = vor.u32 %v1577, %v1580
        %v1582 = vrot.slane %v1581, 2
        %v1584 = vshll.u32 %v1518, 16
        %v1586 = vrot.slane %v1584, 7
        %v1587 = vsel %vm1011, %v1582, %v1586
        %v1588 = vshrl.u32 %v1521, 16
        %v1590 = vrot.slane %v1588, 6
        %v1591 = vshll.u32 %v1521, 16
        %v1593 = vrot.slane %v1591, 7
        %v1594 = vor.u32 %v1590, %v1593
        %v1595 = vrot.slane %v1594, 2
        %v1597 = vshll.u32 %v1524, 16
        %v1599 = vrot.slane %v1597, 7
        %v1600 = vsel %vm1011, %v1595, %v1599
        %v1601 = vshrl.u32 %v1527, 16
        %v1603 = vrot.slane %v1601, 6
        %v1604 = vshll.u32 %v1527, 16
        %v1606 = vrot.slane %v1604, 7
        %v1607 = vor.u32 %v1603, %v1606
        %v1608 = vrot.slane %v1607, 2
        %v1610 = vshll.u32 %v1530, 16
        %v1612 = vrot.slane %v1610, 7
        %v1613 = vsel %vm1011, %v1608, %v1612
        %v1614 = vshrl.u32 %v1533, 16
        %v1616 = vrot.slane %v1614, 6
        %v1617 = vshll.u32 %v1533, 16
        %v1619 = vrot.slane %v1617, 7
        %v1620 = vor.u32 %v1616, %v1619
        %v1621 = vrot.slane %v1620, 2
        %v1623 = vshll.u32 %v1536, 16
        %v1625 = vrot.slane %v1623, 7
        %v1626 = vsel %vm1011, %v1621, %v1625
        %v1627 = vshrl.u32 %v1539, 16
        %v1629 = vrot.slane %v1627, 6
        %v1630 = vshll.u32 %v1539, 16
        %v1632 = vrot.slane %v1630, 7
        %v1633 = vor.u32 %v1629, %v1632
        %v1634 = vrot.slane %v1633, 2
        %v1636 = vshll.u32 %v1542, 16
        %v1638 = vrot.slane %v1636, 7
        %v1639 = vsel %vm1011, %v1634, %v1638
        %v1640 = vshrl.u32 %v1545, 16
        %v1642 = vrot.slane %v1640, 6
        %v1643 = vshll.u32 %v1545, 16
        %v1645 = vrot.slane %v1643, 7
        %v1646 = vor.u32 %v1642, %v1645
        %v1647 = vrot.slane %v1646, 2
        %v1649 = vshll.u32 %v1548, 16
        %v1651 = vrot.slane %v1649, 7
        %v1652 = vsel %vm1011, %v1647, %v1651
        %s1653 = scalar_lea.vmem %s3, 32
        %v1654 = vld [vmem:[%s1653] sm:$0xf]
        %v1655 = vld [vmem:[%s1653 + $0x4] sm:$0xf]
        %1657 = vst [vmem:[#allocation1] ss:$4 sm:$0xff] %v1561
        %s1659 = scalar_lea.vmem [#allocation1], 1
        %1660 = vst [vmem:[%s1659] ss:$4 sm:$0xff] %v1574
        %s1662 = scalar_lea.vmem [#allocation1], 2
        %1663 = vst [vmem:[%s1662] ss:$4 sm:$0xff] %v1587
        %s1665 = scalar_lea.vmem [#allocation1], 3
        %1666 = vst [vmem:[%s1665] ss:$4 sm:$0xff] %v1600
        %s1668 = scalar_lea.vmem [#allocation1], 32
        %1669 = vst [vmem:[%s1668] ss:$4 sm:$0xff] %v1613
        %s1671 = scalar_lea.vmem [#allocation1], 33
        %1672 = vst [vmem:[%s1671] ss:$4 sm:$0xff] %v1626
        %s1674 = scalar_lea.vmem [#allocation1], 34
        %1675 = vst [vmem:[%s1674] ss:$4 sm:$0xff] %v1639
        %s1677 = scalar_lea.vmem [#allocation1], 35
        %1678 = vst [vmem:[%s1677] ss:$4 sm:$0xff] %v1652
        %v1679 = vld.sshfl [vmem:[#allocation1] sm:$0xff pattern:$0x73625140]
        %v1680 = vld.sshfl [vmem:[#allocation1 + $0x20] sm:$0xff pattern:$0x73625140]
        %v1683 = vunpack.c.l.b16 %v1654
        %v1684 = vunpack.c.l.b16 %v1655
        %v1685 = vpack.c.b16 %v1684, %v1683
        %v1687 = vsel %vm1150, %v1679, 0
        %v1689 = vsel %vm1150, %v1680, 0
        %1691 = vmatpush.bf16.msra.mxu0 0
        %1692 = vmatpush.bf16.msra.mxu0 0
        %1693 = vmatpush.bf16.msra.mxu0 0
        %1694 = vmatpush.bf16.msra.mxu0 0
        %1695 = vmatpush.bf16.msra.mxu0 0
        %1696 = vmatpush.bf16.msra.mxu0 0
        %1697 = vmatpush.bf16.msra.mxu0 0
        %1698 = vmatpush.bf16.msra.mxu0 %v1685
        %1699 = vmatmul.bf16.gmra.mxu0 %v1687
        %v1700 = vpop.f32.mrf.mxu0
        %v1701 = vadd.f32 0.0, %v1700
        %v1702 = vpop.f32.mrf.mxu0
        %v1703 = vadd.f32 0.0, %v1702
        %1704 = vmatmul.bf16.gmra.mxu0 %v1689
        %v1705 = vpop.f32.mrf.mxu0
        %v1706 = vadd.f32 0.0, %v1705
        %v1707 = vpop.f32.mrf.mxu0
        %v1708 = vadd.f32 0.0, %v1707
        %1709 = vdwg.mxu0
        %v1710 = vadd.f32 %v1473, %v1701
        %v1711 = vadd.f32 %v1474, %v1703
        %v1712 = vadd.f32 %v1475, %v1706
        %v1713 = vadd.f32 %v1476, %v1708
        %v1714 = vld [vmem:[%s895] sm:$0x6]
        %v1715 = vld [vmem:[%s895 + $0x4] sm:$0x6]
        %v1716 = vld [vmem:[%s895 + $0x8] sm:$0x6]
        %v1717 = vld [vmem:[%s895 + $0xc] sm:$0x6]
        %v1718 = vld [vmem:[%s895 + $0x18] sm:$0x6]
        %v1719 = vld [vmem:[%s895 + $0x1c] sm:$0x6]
        %v1720 = vld [vmem:[%s895 + $0x20] sm:$0x6]
        %v1721 = vld [vmem:[%s895 + $0x24] sm:$0x6]
        %v1730 = vrot.slane %v1714, 2
        %v1731 = vrot.slane %v1715, 2
        %v1732 = vrot.slane %v1716, 2
        %v1733 = vrot.slane %v1717, 2
        %v1734 = vrot.slane %v1718, 2
        %v1735 = vrot.slane %v1719, 2
        %v1736 = vrot.slane %v1720, 2
        %v1737 = vrot.slane %v1721, 2
        %v1740 = vsel %vm790, %v1714, %v1730
        %v1742 = vsel %vm794, %v1714, %v1730
        %v1744 = vrot.slane %v1742, 2
        %v1747 = vsel %vm790, %v1715, %v1731
        %v1749 = vsel %vm794, %v1715, %v1731
        %v1751 = vrot.slane %v1749, 2
        %v1754 = vsel %vm790, %v1716, %v1732
        %v1756 = vsel %vm794, %v1716, %v1732
        %v1758 = vrot.slane %v1756, 2
        %v1761 = vsel %vm790, %v1717, %v1733
        %v1763 = vsel %vm794, %v1717, %v1733
        %v1765 = vrot.slane %v1763, 2
        %v1768 = vsel %vm790, %v1718, %v1734
        %v1770 = vsel %vm794, %v1718, %v1734
        %v1772 = vrot.slane %v1770, 2
        %v1775 = vsel %vm790, %v1719, %v1735
        %v1777 = vsel %vm794, %v1719, %v1735
        %v1779 = vrot.slane %v1777, 2
        %v1782 = vsel %vm790, %v1720, %v1736
        %v1784 = vsel %vm794, %v1720, %v1736
        %v1786 = vrot.slane %v1784, 2
        %v1789 = vsel %vm790, %v1721, %v1737
        %v1791 = vsel %vm794, %v1721, %v1737
        %v1793 = vrot.slane %v1791, 2
        %v1794 = vrot.slane %v1740, 7
        %v1795 = vrot.slane %v1794, 2
        %v1796 = vrot.slane %v1744, 7
        %v1797 = vsel %vm1314, %v1795, %v1796
        %v1798 = vrot.slane %v1747, 7
        %v1799 = vrot.slane %v1798, 2
        %v1800 = vrot.slane %v1751, 7
        %v1801 = vsel %vm1314, %v1799, %v1800
        %v1802 = vrot.slane %v1754, 7
        %v1803 = vrot.slane %v1802, 2
        %v1804 = vrot.slane %v1758, 7
        %v1805 = vsel %vm1314, %v1803, %v1804
        %v1806 = vrot.slane %v1761, 7
        %v1807 = vrot.slane %v1806, 2
        %v1808 = vrot.slane %v1765, 7
        %v1809 = vsel %vm1314, %v1807, %v1808
        %v1810 = vrot.slane %v1768, 7
        %v1811 = vrot.slane %v1810, 2
        %v1812 = vrot.slane %v1772, 7
        %v1813 = vsel %vm1314, %v1811, %v1812
        %v1814 = vrot.slane %v1775, 7
        %v1815 = vrot.slane %v1814, 2
        %v1816 = vrot.slane %v1779, 7
        %v1817 = vsel %vm1314, %v1815, %v1816
        %v1818 = vrot.slane %v1782, 7
        %v1819 = vrot.slane %v1818, 2
        %v1820 = vrot.slane %v1786, 7
        %v1821 = vsel %vm1314, %v1819, %v1820
        %v1822 = vrot.slane %v1789, 7
        %v1823 = vrot.slane %v1822, 2
        %v1824 = vrot.slane %v1793, 7
        %v1825 = vsel %vm1314, %v1823, %v1824
        %s1826 = scalar_lea.vmem %s3, 40
        %v1827 = vld [vmem:[%s1826] sm:$0xf]
        %v1828 = vld [vmem:[%s1826 + $0x4] sm:$0xf]
        %1830 = vst [vmem:[#allocation1] ss:$4 sm:$0xff] %v1797
        %s1832 = scalar_lea.vmem [#allocation1], 1
        %1833 = vst [vmem:[%s1832] ss:$4 sm:$0xff] %v1801
        %s1835 = scalar_lea.vmem [#allocation1], 2
        %1836 = vst [vmem:[%s1835] ss:$4 sm:$0xff] %v1805
        %s1838 = scalar_lea.vmem [#allocation1], 3
        %1839 = vst [vmem:[%s1838] ss:$4 sm:$0xff] %v1809
        %s1841 = scalar_lea.vmem [#allocation1], 32
        %1842 = vst [vmem:[%s1841] ss:$4 sm:$0xff] %v1813
        %s1844 = scalar_lea.vmem [#allocation1], 33
        %1845 = vst [vmem:[%s1844] ss:$4 sm:$0xff] %v1817
        %s1847 = scalar_lea.vmem [#allocation1], 34
        %1848 = vst [vmem:[%s1847] ss:$4 sm:$0xff] %v1821
        %s1850 = scalar_lea.vmem [#allocation1], 35
        %1851 = vst [vmem:[%s1850] ss:$4 sm:$0xff] %v1825
        %v1852 = vld.sshfl [vmem:[#allocation1] sm:$0xff pattern:$0x73625140]
        %v1853 = vld.sshfl [vmem:[#allocation1 + $0x20] sm:$0xff pattern:$0x73625140]
        %v1856 = vunpack.c.l.b16 %v1827
        %v1857 = vunpack.c.l.b16 %v1828
        %v1858 = vpack.c.b16 %v1857, %v1856
        %v1860 = vsel %vm1150, %v1852, 0
        %v1862 = vsel %vm1150, %v1853, 0
        %1864 = vmatpush.bf16.msra.mxu0 0
        %1865 = vmatpush.bf16.msra.mxu0 0
        %1866 = vmatpush.bf16.msra.mxu0 0
        %1867 = vmatpush.bf16.msra.mxu0 0
        %1868 = vmatpush.bf16.msra.mxu0 0
        %1869 = vmatpush.bf16.msra.mxu0 0
        %1870 = vmatpush.bf16.msra.mxu0 0
        %1871 = vmatpush.bf16.msra.mxu0 %v1858
        %1872 = vmatmul.bf16.gmra.mxu0 %v1860
        %v1873 = vpop.f32.mrf.mxu0
        %v1874 = vadd.f32 0.0, %v1873
        %v1875 = vpop.f32.mrf.mxu0
        %v1876 = vadd.f32 0.0, %v1875
        %1877 = vmatmul.bf16.gmra.mxu0 %v1862
        %v1878 = vpop.f32.mrf.mxu0
        %v1879 = vadd.f32 0.0, %v1878
        %v1880 = vpop.f32.mrf.mxu0
        %v1881 = vadd.f32 0.0, %v1880
        %1882 = vdwg.mxu0
        %v1883 = vadd.f32 %v1710, %v1874
        %v1884 = vadd.f32 %v1711, %v1876
        %v1885 = vadd.f32 %v1712, %v1879
        %v1886 = vadd.f32 %v1713, %v1881
        %s1887 = scalar_lea.vmem [#allocation2], 8
        %v1888 = vld [vmem:[%s1887] sm:$0x3]
        %v1889 = vld [vmem:[%s1887 + $0x4] sm:$0x3]
        %v1890 = vld [vmem:[%s1887 + $0x8] sm:$0x3]
        %v1891 = vld [vmem:[%s1887 + $0xc] sm:$0x3]
        %v1892 = vld [vmem:[%s1887 + $0x18] sm:$0x3]
        %v1893 = vld [vmem:[%s1887 + $0x1c] sm:$0x3]
        %v1894 = vld [vmem:[%s1887 + $0x20] sm:$0x3]
        %v1895 = vld [vmem:[%s1887 + $0x24] sm:$0x3]
        %s1896 = scalar_lea.vmem %s3, 48
        %v1897 = vld [vmem:[%s1896] sm:$0xf]
        %v1898 = vld [vmem:[%s1896 + $0x4] sm:$0xf]
        %1900 = vst [vmem:[#allocation1] ss:$4 sm:$0xff] %v1888
        %s1902 = scalar_lea.vmem [#allocation1], 1
        %1903 = vst [vmem:[%s1902] ss:$4 sm:$0xff] %v1889
        %s1905 = scalar_lea.vmem [#allocation1], 2
        %1906 = vst [vmem:[%s1905] ss:$4 sm:$0xff] %v1890
        %s1908 = scalar_lea.vmem [#allocation1], 3
        %1909 = vst [vmem:[%s1908] ss:$4 sm:$0xff] %v1891
        %s1911 = scalar_lea.vmem [#allocation1], 32
        %1912 = vst [vmem:[%s1911] ss:$4 sm:$0xff] %v1892
        %s1914 = scalar_lea.vmem [#allocation1], 33
        %1915 = vst [vmem:[%s1914] ss:$4 sm:$0xff] %v1893
        %s1917 = scalar_lea.vmem [#allocation1], 34
        %1918 = vst [vmem:[%s1917] ss:$4 sm:$0xff] %v1894
        %s1920 = scalar_lea.vmem [#allocation1], 35
        %1921 = vst [vmem:[%s1920] ss:$4 sm:$0xff] %v1895
        %v1922 = vld.sshfl [vmem:[#allocation1] sm:$0xff pattern:$0x73625140]
        %v1923 = vld.sshfl [vmem:[#allocation1 + $0x20] sm:$0xff pattern:$0x73625140]
        %v1926 = vunpack.c.l.b16 %v1897
        %v1927 = vunpack.c.l.b16 %v1898
        %v1928 = vpack.c.b16 %v1927, %v1926
        %v1930 = vsel %vm1150, %v1922, 0
        %v1932 = vsel %vm1150, %v1923, 0
        %1934 = vmatpush.bf16.msra.mxu0 0
        %1935 = vmatpush.bf16.msra.mxu0 0
        %1936 = vmatpush.bf16.msra.mxu0 0
        %1937 = vmatpush.bf16.msra.mxu0 0
        %1938 = vmatpush.bf16.msra.mxu0 0
        %1939 = vmatpush.bf16.msra.mxu0 0
        %1940 = vmatpush.bf16.msra.mxu0 0
        %1941 = vmatpush.bf16.msra.mxu0 %v1928
        %1942 = vmatmul.bf16.gmra.mxu0 %v1930
        %v1943 = vpop.f32.mrf.mxu0
        %v1944 = vadd.f32 0.0, %v1943
        %v1945 = vpop.f32.mrf.mxu0
        %v1946 = vadd.f32 0.0, %v1945
        %1947 = vmatmul.bf16.gmra.mxu0 %v1932
        %v1948 = vpop.f32.mrf.mxu0
        %v1949 = vadd.f32 0.0, %v1948
        %v1950 = vpop.f32.mrf.mxu0
        %v1951 = vadd.f32 0.0, %v1950
        %1952 = vdwg.mxu0
        %v1953 = vadd.f32 %v1883, %v1944
        %v1954 = vadd.f32 %v1884, %v1946
        %v1955 = vadd.f32 %v1885, %v1949
        %v1956 = vadd.f32 %v1886, %v1951
        %v1957 = vld [vmem:[%s1887] sm:$0x7]
        %v1958 = vld [vmem:[%s1887 + $0x4] sm:$0x7]
        %v1959 = vld [vmem:[%s1887 + $0x8] sm:$0x7]
        %v1960 = vld [vmem:[%s1887 + $0xc] sm:$0x7]
        %v1961 = vld [vmem:[%s1887 + $0x18] sm:$0x7]
        %v1962 = vld [vmem:[%s1887 + $0x1c] sm:$0x7]
        %v1963 = vld [vmem:[%s1887 + $0x20] sm:$0x7]
        %v1964 = vld [vmem:[%s1887 + $0x24] sm:$0x7]
        %v1973 = vrot.slane %v1957, 2
        %v1974 = vrot.slane %v1958, 2
        %v1975 = vrot.slane %v1959, 2
        %v1976 = vrot.slane %v1960, 2
        %v1977 = vrot.slane %v1961, 2
        %v1978 = vrot.slane %v1962, 2
        %v1979 = vrot.slane %v1963, 2
        %v1980 = vrot.slane %v1964, 2
        %v1983 = vsel %vm790, %v1957, %v1973
        %v1984 = vsel %vm794, %v1957, %v1973
        %v1986 = vrot.slane %v1984, 2
        %v1989 = vsel %vm790, %v1958, %v1974
        %v1990 = vsel %vm794, %v1958, %v1974
        %v1992 = vrot.slane %v1990, 2
        %v1995 = vsel %vm790, %v1959, %v1975
        %v1996 = vsel %vm794, %v1959, %v1975
        %v1998 = vrot.slane %v1996, 2
        %v2001 = vsel %vm790, %v1960, %v1976
        %v2002 = vsel %vm794, %v1960, %v1976
        %v2004 = vrot.slane %v2002, 2
        %v2007 = vsel %vm790, %v1961, %v1977
        %v2008 = vsel %vm794, %v1961, %v1977
        %v2010 = vrot.slane %v2008, 2
        %v2013 = vsel %vm790, %v1962, %v1978
        %v2014 = vsel %vm794, %v1962, %v1978
        %v2016 = vrot.slane %v2014, 2
        %v2019 = vsel %vm790, %v1963, %v1979
        %v2020 = vsel %vm794, %v1963, %v1979
        %v2022 = vrot.slane %v2020, 2
        %v2025 = vsel %vm790, %v1964, %v1980
        %v2026 = vsel %vm794, %v1964, %v1980
        %v2028 = vrot.slane %v2026, 2
        %v2029 = vshrl.u32 %v1983, 16
        %v2031 = vrot.slane %v2029, 6
        %v2032 = vshll.u32 %v1983, 16
        %v2034 = vrot.slane %v2032, 7
        %v2035 = vor.u32 %v2031, %v2034
        %v2036 = vrot.slane %v2035, 2
        %v2038 = vshll.u32 %v1986, 16
        %v2040 = vrot.slane %v2038, 7
        %v2041 = vsel %vm1011, %v2036, %v2040
        %v2042 = vshrl.u32 %v1989, 16
        %v2044 = vrot.slane %v2042, 6
        %v2045 = vshll.u32 %v1989, 16
        %v2047 = vrot.slane %v2045, 7
        %v2048 = vor.u32 %v2044, %v2047
        %v2049 = vrot.slane %v2048, 2
        %v2051 = vshll.u32 %v1992, 16
        %v2053 = vrot.slane %v2051, 7
        %v2054 = vsel %vm1011, %v2049, %v2053
        %v2055 = vshrl.u32 %v1995, 16
        %v2057 = vrot.slane %v2055, 6
        %v2058 = vshll.u32 %v1995, 16
        %v2060 = vrot.slane %v2058, 7
        %v2061 = vor.u32 %v2057, %v2060
        %v2062 = vrot.slane %v2061, 2
        %v2064 = vshll.u32 %v1998, 16
        %v2066 = vrot.slane %v2064, 7
        %v2067 = vsel %vm1011, %v2062, %v2066
        %v2068 = vshrl.u32 %v2001, 16
        %v2070 = vrot.slane %v2068, 6
        %v2071 = vshll.u32 %v2001, 16
        %v2073 = vrot.slane %v2071, 7
        %v2074 = vor.u32 %v2070, %v2073
        %v2075 = vrot.slane %v2074, 2
        %v2077 = vshll.u32 %v2004, 16
        %v2079 = vrot.slane %v2077, 7
        %v2080 = vsel %vm1011, %v2075, %v2079
        %v2081 = vshrl.u32 %v2007, 16
        %v2083 = vrot.slane %v2081, 6
        %v2084 = vshll.u32 %v2007, 16
        %v2086 = vrot.slane %v2084, 7
        %v2087 = vor.u32 %v2083, %v2086
        %v2088 = vrot.slane %v2087, 2
        %v2090 = vshll.u32 %v2010, 16
        %v2092 = vrot.slane %v2090, 7
        %v2093 = vsel %vm1011, %v2088, %v2092
        %v2094 = vshrl.u32 %v2013, 16
        %v2096 = vrot.slane %v2094, 6
        %v2097 = vshll.u32 %v2013, 16
        %v2099 = vrot.slane %v2097, 7
        %v2100 = vor.u32 %v2096, %v2099
        %v2101 = vrot.slane %v2100, 2
        %v2103 = vshll.u32 %v2016, 16
        %v2105 = vrot.slane %v2103, 7
        %v2106 = vsel %vm1011, %v2101, %v2105
        %v2107 = vshrl.u32 %v2019, 16
        %v2109 = vrot.slane %v2107, 6
        %v2110 = vshll.u32 %v2019, 16
        %v2112 = vrot.slane %v2110, 7
        %v2113 = vor.u32 %v2109, %v2112
        %v2114 = vrot.slane %v2113, 2
        %v2116 = vshll.u32 %v2022, 16
        %v2118 = vrot.slane %v2116, 7
        %v2119 = vsel %vm1011, %v2114, %v2118
        %v2120 = vshrl.u32 %v2025, 16
        %v2122 = vrot.slane %v2120, 6
        %v2123 = vshll.u32 %v2025, 16
        %v2125 = vrot.slane %v2123, 7
        %v2126 = vor.u32 %v2122, %v2125
        %v2127 = vrot.slane %v2126, 2
        %v2129 = vshll.u32 %v2028, 16
        %v2131 = vrot.slane %v2129, 7
        %v2132 = vsel %vm1011, %v2127, %v2131
        %s2133 = scalar_lea.vmem %s3, 56
        %v2134 = vld [vmem:[%s2133] sm:$0xf]
        %v2135 = vld [vmem:[%s2133 + $0x4] sm:$0xf]
        %2137 = vst [vmem:[#allocation1] ss:$4 sm:$0xff] %v2041
        %s2139 = scalar_lea.vmem [#allocation1], 1
        %2140 = vst [vmem:[%s2139] ss:$4 sm:$0xff] %v2054
        %s2142 = scalar_lea.vmem [#allocation1], 2
        %2143 = vst [vmem:[%s2142] ss:$4 sm:$0xff] %v2067
        %s2145 = scalar_lea.vmem [#allocation1], 3
        %2146 = vst [vmem:[%s2145] ss:$4 sm:$0xff] %v2080
        %s2148 = scalar_lea.vmem [#allocation1], 32
        %2149 = vst [vmem:[%s2148] ss:$4 sm:$0xff] %v2093
        %s2151 = scalar_lea.vmem [#allocation1], 33
        %2152 = vst [vmem:[%s2151] ss:$4 sm:$0xff] %v2106
        %s2154 = scalar_lea.vmem [#allocation1], 34
        %2155 = vst [vmem:[%s2154] ss:$4 sm:$0xff] %v2119
        %s2157 = scalar_lea.vmem [#allocation1], 35
        %2158 = vst [vmem:[%s2157] ss:$4 sm:$0xff] %v2132
        %v2159 = vld.sshfl [vmem:[#allocation1] sm:$0xff pattern:$0x73625140]
        %v2160 = vld.sshfl [vmem:[#allocation1 + $0x20] sm:$0xff pattern:$0x73625140]
        %v2163 = vunpack.c.l.b16 %v2134
        %v2164 = vunpack.c.l.b16 %v2135
        %v2165 = vpack.c.b16 %v2164, %v2163
        %v2167 = vsel %vm1150, %v2159, 0
        %v2169 = vsel %vm1150, %v2160, 0
        %2171 = vmatpush.bf16.msra.mxu0 0
        %2172 = vmatpush.bf16.msra.mxu0 0
        %2173 = vmatpush.bf16.msra.mxu0 0
        %2174 = vmatpush.bf16.msra.mxu0 0
        %2175 = vmatpush.bf16.msra.mxu0 0
        %2176 = vmatpush.bf16.msra.mxu0 0
        %2177 = vmatpush.bf16.msra.mxu0 0
        %2178 = vmatpush.bf16.msra.mxu0 %v2165
        %2179 = vmatmul.bf16.gmra.mxu0 %v2167
        %v2180 = vpop.f32.mrf.mxu0
        %v2181 = vadd.f32 0.0, %v2180
        %v2182 = vpop.f32.mrf.mxu0
        %v2183 = vadd.f32 0.0, %v2182
        %2184 = vmatmul.bf16.gmra.mxu0 %v2169
        %v2185 = vpop.f32.mrf.mxu0
        %v2186 = vadd.f32 0.0, %v2185
        %v2187 = vpop.f32.mrf.mxu0
        %v2188 = vadd.f32 0.0, %v2187
        %2189 = vdwg.mxu0
        %v2190 = vadd.f32 %v1953, %v2181
        %v2191 = vadd.f32 %v1954, %v2183
        %v2192 = vadd.f32 %v1955, %v2186
        %v2193 = vadd.f32 %v1956, %v2188
        %v2194 = vld [vmem:[%s1887] sm:$0x6]
        %v2195 = vld [vmem:[%s1887 + $0x4] sm:$0x6]
        %v2196 = vld [vmem:[%s1887 + $0x8] sm:$0x6]
        %v2197 = vld [vmem:[%s1887 + $0xc] sm:$0x6]
        %v2198 = vld [vmem:[%s1887 + $0x18] sm:$0x6]
        %v2199 = vld [vmem:[%s1887 + $0x1c] sm:$0x6]
        %v2200 = vld [vmem:[%s1887 + $0x20] sm:$0x6]
        %v2201 = vld [vmem:[%s1887 + $0x24] sm:$0x6]
        %v2210 = vrot.slane %v2194, 2
        %v2211 = vrot.slane %v2195, 2
        %v2212 = vrot.slane %v2196, 2
        %v2213 = vrot.slane %v2197, 2
        %v2214 = vrot.slane %v2198, 2
        %v2215 = vrot.slane %v2199, 2
        %v2216 = vrot.slane %v2200, 2
        %v2217 = vrot.slane %v2201, 2
        %v2220 = vsel %vm790, %v2194, %v2210
        %v2222 = vsel %vm794, %v2194, %v2210
        %v2224 = vrot.slane %v2222, 2
        %v2227 = vsel %vm790, %v2195, %v2211
        %v2229 = vsel %vm794, %v2195, %v2211
        %v2231 = vrot.slane %v2229, 2
        %v2234 = vsel %vm790, %v2196, %v2212
        %v2236 = vsel %vm794, %v2196, %v2212
        %v2238 = vrot.slane %v2236, 2
        %v2241 = vsel %vm790, %v2197, %v2213
        %v2243 = vsel %vm794, %v2197, %v2213
        %v2245 = vrot.slane %v2243, 2
        %v2248 = vsel %vm790, %v2198, %v2214
        %v2250 = vsel %vm794, %v2198, %v2214
        %v2252 = vrot.slane %v2250, 2
        %v2255 = vsel %vm790, %v2199, %v2215
        %v2257 = vsel %vm794, %v2199, %v2215
        %v2259 = vrot.slane %v2257, 2
        %v2262 = vsel %vm790, %v2200, %v2216
        %v2264 = vsel %vm794, %v2200, %v2216
        %v2266 = vrot.slane %v2264, 2
        %v2269 = vsel %vm790, %v2201, %v2217
        %v2271 = vsel %vm794, %v2201, %v2217
        %v2273 = vrot.slane %v2271, 2
        %v2274 = vrot.slane %v2220, 7
        %v2275 = vrot.slane %v2274, 2
        %v2276 = vrot.slane %v2224, 7
        %v2277 = vsel %vm1314, %v2275, %v2276
        %v2278 = vrot.slane %v2227, 7
        %v2279 = vrot.slane %v2278, 2
        %v2280 = vrot.slane %v2231, 7
        %v2281 = vsel %vm1314, %v2279, %v2280
        %v2282 = vrot.slane %v2234, 7
        %v2283 = vrot.slane %v2282, 2
        %v2284 = vrot.slane %v2238, 7
        %v2285 = vsel %vm1314, %v2283, %v2284
        %v2286 = vrot.slane %v2241, 7
        %v2287 = vrot.slane %v2286, 2
        %v2288 = vrot.slane %v2245, 7
        %v2289 = vsel %vm1314, %v2287, %v2288
        %v2290 = vrot.slane %v2248, 7
        %v2291 = vrot.slane %v2290, 2
        %v2292 = vrot.slane %v2252, 7
        %v2293 = vsel %vm1314, %v2291, %v2292
        %v2294 = vrot.slane %v2255, 7
        %v2295 = vrot.slane %v2294, 2
        %v2296 = vrot.slane %v2259, 7
        %v2297 = vsel %vm1314, %v2295, %v2296
        %v2298 = vrot.slane %v2262, 7
        %v2299 = vrot.slane %v2298, 2
        %v2300 = vrot.slane %v2266, 7
        %v2301 = vsel %vm1314, %v2299, %v2300
        %v2302 = vrot.slane %v2269, 7
        %v2303 = vrot.slane %v2302, 2
        %v2304 = vrot.slane %v2273, 7
        %v2305 = vsel %vm1314, %v2303, %v2304
        %s2306 = scalar_lea.vmem %s3, 64
        %v2307 = vld [vmem:[%s2306] sm:$0xf]
        %v2308 = vld [vmem:[%s2306 + $0x4] sm:$0xf]
        %2310 = vst [vmem:[#allocation1] ss:$4 sm:$0xff] %v2277
        %s2312 = scalar_lea.vmem [#allocation1], 1
        %2313 = vst [vmem:[%s2312] ss:$4 sm:$0xff] %v2281
        %s2315 = scalar_lea.vmem [#allocation1], 2
        %2316 = vst [vmem:[%s2315] ss:$4 sm:$0xff] %v2285
        %s2318 = scalar_lea.vmem [#allocation1], 3
        %2319 = vst [vmem:[%s2318] ss:$4 sm:$0xff] %v2289
        %s2321 = scalar_lea.vmem [#allocation1], 32
        %2322 = vst [vmem:[%s2321] ss:$4 sm:$0xff] %v2293
        %s2324 = scalar_lea.vmem [#allocation1], 33
        %2325 = vst [vmem:[%s2324] ss:$4 sm:$0xff] %v2297
        %s2327 = scalar_lea.vmem [#allocation1], 34
        %2328 = vst [vmem:[%s2327] ss:$4 sm:$0xff] %v2301
        %s2330 = scalar_lea.vmem [#allocation1], 35
        %2331 = vst [vmem:[%s2330] ss:$4 sm:$0xff] %v2305
        %v2332 = vld.sshfl [vmem:[#allocation1] sm:$0xff pattern:$0x73625140]
        %v2333 = vld.sshfl [vmem:[#allocation1 + $0x20] sm:$0xff pattern:$0x73625140]
        %v2336 = vunpack.c.l.b16 %v2307
        %v2337 = vunpack.c.l.b16 %v2308
        %v2338 = vpack.c.b16 %v2337, %v2336
        %v2340 = vsel %vm1150, %v2332, 0
        %v2342 = vsel %vm1150, %v2333, 0
        %2344 = vmatpush.bf16.msra.mxu0 0
        %2345 = vmatpush.bf16.msra.mxu0 0
        %2346 = vmatpush.bf16.msra.mxu0 0
        %2347 = vmatpush.bf16.msra.mxu0 0
        %2348 = vmatpush.bf16.msra.mxu0 0
        %2349 = vmatpush.bf16.msra.mxu0 0
        %2350 = vmatpush.bf16.msra.mxu0 0
        %2351 = vmatpush.bf16.msra.mxu0 %v2338
        %2352 = vmatmul.bf16.gmra.mxu0 %v2340
        %v2353 = vpop.f32.mrf.mxu0
        %v2354 = vadd.f32 0.0, %v2353
        %v2355 = vpop.f32.mrf.mxu0
        %v2356 = vadd.f32 0.0, %v2355
        %2357 = vmatmul.bf16.gmra.mxu0 %v2342
        %v2358 = vpop.f32.mrf.mxu0
        %v2359 = vadd.f32 0.0, %v2358
        %v2360 = vpop.f32.mrf.mxu0
        %v2361 = vadd.f32 0.0, %v2360
        %2362 = vdwg.mxu0
        %v2363 = vadd.f32 %v2190, %v2354
        %v2364 = vadd.f32 %v2191, %v2356
        %v2365 = vadd.f32 %v2192, %v2359
        %v2366 = vadd.f32 %v2193, %v2361
        %v2367 = vld [vmem:[%s4] sm:$0x1]
        %v2369 = vperm.slane %v2367, 0
        %v2371 = vadd.f32 %v2363, %v2369
        %v2372 = vadd.f32 %v2364, %v2369
        %v2373 = vadd.f32 %v2365, %v2369
        %v2374 = vadd.f32 %v2366, %v2369
        %v2375 = vmax.f32 %v2371, 0.0
        %v2376 = vmax.f32 %v2372, 0.0
        %v2377 = vmax.f32 %v2373, 0.0
        %v2378 = vmax.f32 %v2374, 0.0
        %v2379 = vpack.c.bf16 %v2376, %v2375
        %v2380 = vpack.c.bf16 %v2378, %v2377
        %v2381 = vld [vmem:[%s5] sm:$0xf]
        %v2382 = vld [vmem:[%s5 + $0x4] sm:$0xf]
        %v2383 = vld [vmem:[%s6] sm:$0x1]
        %v2385 = vperm.slane %v2383, 0
        %v2389 = vunpack.c.l.b16 %v2381
        %v2390 = vunpack.c.l.b16 %v2382
        %v2391 = vpack.c.b16 %v2390, %v2389
        %v2394 = vsel %vm1150, %v2379, 0
        %v2397 = vsel %vm1150, %v2380, 0
        %2399 = vmatpush.bf16.msra.mxu0 0
        %2400 = vmatpush.bf16.msra.mxu0 0
        %2401 = vmatpush.bf16.msra.mxu0 0
        %2402 = vmatpush.bf16.msra.mxu0 0
        %2403 = vmatpush.bf16.msra.mxu0 0
        %2404 = vmatpush.bf16.msra.mxu0 0
        %2405 = vmatpush.bf16.msra.mxu0 0
        %2406 = vmatpush.bf16.msra.mxu0 %v2391
        %2407 = vmatmul.bf16.gmra.mxu0 %v2394
        %v2408 = vpop.f32.mrf.mxu0
        %v2409 = vadd.f32 %v2385, %v2408
        %v2410 = vpop.f32.mrf.mxu0
        %v2411 = vadd.f32 %v2385, %v2410
        %2412 = vmatmul.bf16.gmra.mxu0 %v2397
        %v2413 = vpop.f32.mrf.mxu0
        %v2414 = vadd.f32 %v2385, %v2413
        %v2415 = vpop.f32.mrf.mxu0
        %v2416 = vadd.f32 %v2385, %v2415
        %2417 = vdwg.mxu0
        %v2418 = vadd.f32 %v2409, %v726
        %v2419 = vadd.f32 %v2411, %v728
        %v2420 = vadd.f32 %v2414, %v731
        %v2421 = vadd.f32 %v2416, %v733
        %v2422 = vmax.f32 %v2418, 0.0
        %v2423 = vmax.f32 %v2419, 0.0
        %v2424 = vmax.f32 %v2420, 0.0
        %v2425 = vmax.f32 %v2421, 0.0
        %v2426 = vpack.c.bf16 %v2422, %v2422
        %v2427 = vpack.c.bf16 %v2423, %v2423
        %v2428 = vpack.c.bf16 %v2424, %v2424
        %v2429 = vpack.c.bf16 %v2425, %v2425
        %v2430 = vunpack.c.l.bf16 %v2426
        %v2431 = vunpack.c.l.bf16 %v2427
        %v2432 = vunpack.c.l.bf16 %v2428
        %v2433 = vunpack.c.l.bf16 %v2429
        %v2434 = vld [vmem:[%s9] sm:$0xf]
        %v2435 = vld [vmem:[%s9 + $0x4] sm:$0xf]
        %v2436 = vld [vmem:[%s9 + $0x8] sm:$0xf]
        %v2437 = vld [vmem:[%s9 + $0xc] sm:$0xf]
        %v2438 = vld [vmem:[%s9 + $0x10] sm:$0xf]
        %v2439 = vld [vmem:[%s9 + $0x14] sm:$0xf]
        %v2440 = vld [vmem:[%s9 + $0x18] sm:$0xf]
        %v2441 = vld [vmem:[%s9 + $0x1c] sm:$0xf]
        %v2442 = vld [vmem:[%s10] sm:$0x1]
        %v2444 = vperm.slane %v2442, 0
        %v2450 = vunpack.c.l.b16 %v2426
        %v2451 = vunpack.c.l.b16 %v2427
        %v2452 = vunpack.c.l.b16 %v2428
        %v2453 = vunpack.c.l.b16 %v2429
        %v2454 = vpack.c.b16 %v2451, %v2450
        %v2455 = vpack.c.b16 %v2453, %v2452
        %v2464 = vunpack.c.l.b16 %v2434
        %v2465 = vunpack.c.l.b16 %v2435
        %v2466 = vunpack.c.l.b16 %v2436
        %v2467 = vunpack.c.l.b16 %v2437
        %v2468 = vunpack.c.l.b16 %v2438
        %v2469 = vunpack.c.l.b16 %v2439
        %v2470 = vunpack.c.l.b16 %v2440
        %v2471 = vunpack.c.l.b16 %v2441
        %v2472 = vpack.c.b16 %v2465, %v2464
        %v2473 = vpack.c.b16 %v2467, %v2466
        %v2474 = vpack.c.b16 %v2469, %v2468
        %v2475 = vpack.c.b16 %v2471, %v2470
        %vm2480 = vcmask 523264
        %v2482 = vsel %vm2480, %v2454, 0
        %v2485 = vsel %vm2480, %v2455, 0
        %2487 = vmatpush.bf16.msra.mxu0 0
        %2488 = vmatpush.bf16.msra.mxu0 0
        %2489 = vmatpush.bf16.msra.mxu0 0
        %2490 = vmatpush.bf16.msra.mxu0 0
        %2491 = vmatpush.bf16.msra.mxu0 %v2475
        %2492 = vmatpush.bf16.msra.mxu0 %v2474
        %2493 = vmatpush.bf16.msra.mxu0 %v2473
        %2494 = vmatpush.bf16.msra.mxu0 %v2472
        %2495 = vmatmul.bf16.gmra.mxu0 %v2482
        %v2496 = vpop.f32.mrf.mxu0
        %v2497 = vadd.f32 %v2444, %v2496
        %v2498 = vpop.f32.mrf.mxu0
        %v2499 = vadd.f32 %v2444, %v2498
        %2500 = vmatmul.bf16.gmra.mxu0 %v2485
        %v2501 = vpop.f32.mrf.mxu0
        %v2502 = vadd.f32 %v2444, %v2501
        %v2503 = vpop.f32.mrf.mxu0
        %v2504 = vadd.f32 %v2444, %v2503
        %2505 = vdwg.mxu0
        %v2506 = vmax.f32 %v2497, 0.0
        %v2507 = vmax.f32 %v2499, 0.0
        %v2508 = vmax.f32 %v2502, 0.0
        %v2509 = vmax.f32 %v2504, 0.0
        %v2510 = vpack.c.bf16 %v2506, %v2506
        %v2511 = vpack.c.bf16 %v2507, %v2507
        %v2512 = vpack.c.bf16 %v2508, %v2508
        %v2513 = vpack.c.bf16 %v2509, %v2509
        %v2518 = vrot.slane %v2510, 2
        %v2519 = vrot.slane %v2511, 2
        %v2520 = vrot.slane %v2512, 2
        %v2521 = vrot.slane %v2513, 2
        %v2524 = vsel %vm790, %v2510, %v2518
        %v2525 = vsel %vm794, %v2510, %v2518
        %v2527 = vrot.slane %v2525, 2
        %v2530 = vsel %vm790, %v2511, %v2519
        %v2531 = vsel %vm794, %v2511, %v2519
        %v2533 = vrot.slane %v2531, 2
        %v2536 = vsel %vm790, %v2512, %v2520
        %v2537 = vsel %vm794, %v2512, %v2520
        %v2539 = vrot.slane %v2537, 2
        %v2542 = vsel %vm790, %v2513, %v2521
        %v2543 = vsel %vm794, %v2513, %v2521
        %v2545 = vrot.slane %v2543, 2
        %2546 = vst [vmem:[#allocation1] ss:$2 sm:$0xff] %v2524
        %v2547 = vld.sshfl [vmem:[#allocation1] sm:$0xff pattern:$0x75643120]
        %s2549 = scalar_lea.vmem [#allocation1], 16
        %2550 = vst [vmem:[%s2549] ss:$2 sm:$0xff] %v2527
        %v2551 = vld.sshfl [vmem:[#allocation1 + $0x10] sm:$0xff pattern:$0x75643120]
        %s2552 = scalar_lea.vmem [#allocation1], 32
        %2553 = vst [vmem:[%s2552] ss:$2 sm:$0xff] %v2530
        %v2554 = vld.sshfl [vmem:[#allocation1 + $0x20] sm:$0xff pattern:$0x75643120]
        %s2556 = scalar_lea.vmem [#allocation1], 48
        %2557 = vst [vmem:[%s2556] ss:$2 sm:$0xff] %v2533
        %v2558 = vld.sshfl [vmem:[#allocation1 + $0x30] sm:$0xff pattern:$0x75643120]
        %2559 = vst [vmem:[#allocation1] ss:$2 sm:$0xff] %v2536
        %v2560 = vld.sshfl [vmem:[#allocation1] sm:$0xff pattern:$0x75643120]
        %2562 = vst [vmem:[%s2549] ss:$2 sm:$0xff] %v2539
        %v2563 = vld.sshfl [vmem:[#allocation1 + $0x10] sm:$0xff pattern:$0x75643120]
        %2564 = vst [vmem:[%s2552] ss:$2 sm:$0xff] %v2542
        %v2565 = vld.sshfl [vmem:[#allocation1 + $0x20] sm:$0xff pattern:$0x75643120]
        %2567 = vst [vmem:[%s2556] ss:$2 sm:$0xff] %v2545
        %v2568 = vld.sshfl [vmem:[#allocation1 + $0x30] sm:$0xff pattern:$0x75643120]
        %v2569 = vshrl.u32 %v2547, 16
        %v2571 = vrot.slane %v2569, 7
        %v2572 = vshll.u32 %v2547, 16
        %v2574 = vor.u32 %v2571, %v2572
        %v2575 = vshrl.u32 %v2551, 16
        %v2577 = vrot.slane %v2575, 7
        %v2578 = vshll.u32 %v2551, 16
        %v2580 = vor.u32 %v2577, %v2578
        %v2581 = vshrl.u32 %v2554, 16
        %v2583 = vrot.slane %v2581, 7
        %v2584 = vshll.u32 %v2554, 16
        %v2586 = vor.u32 %v2583, %v2584
        %v2587 = vshrl.u32 %v2558, 16
        %v2589 = vrot.slane %v2587, 7
        %v2590 = vshll.u32 %v2558, 16
        %v2592 = vor.u32 %v2589, %v2590
        %v2593 = vshrl.u32 %v2560, 16
        %v2595 = vrot.slane %v2593, 7
        %v2596 = vshll.u32 %v2560, 16
        %v2598 = vor.u32 %v2595, %v2596
        %v2599 = vshrl.u32 %v2563, 16
        %v2601 = vrot.slane %v2599, 7
        %v2602 = vshll.u32 %v2563, 16
        %v2604 = vor.u32 %v2601, %v2602
        %v2605 = vshrl.u32 %v2565, 16
        %v2607 = vrot.slane %v2605, 7
        %v2608 = vshll.u32 %v2565, 16
        %v2610 = vor.u32 %v2607, %v2608
        %v2611 = vshrl.u32 %v2568, 16
        %v2613 = vrot.slane %v2611, 7
        %v2614 = vshll.u32 %v2568, 16
        %v2616 = vor.u32 %v2613, %v2614
        %v2625 = vld [vmem:[%s895] sm:$0x7]
        %v2626 = vsel %vm898, %v2574, %v2625
        %2627 = vst [vmem:[%s895] sm:$0x7] %v2626
        %v2628 = vld [vmem:[%s895 + $0x4] sm:$0x7]
        %v2629 = vsel %vm898, %v2580, %v2628
        %2630 = vst [vmem:[%s895 + $0x4] sm:$0x7] %v2629
        %v2631 = vld [vmem:[%s895 + $0x8] sm:$0x7]
        %v2632 = vsel %vm898, %v2586, %v2631
        %2633 = vst [vmem:[%s895 + $0x8] sm:$0x7] %v2632
        %v2634 = vld [vmem:[%s895 + $0xc] sm:$0x7]
        %v2635 = vsel %vm898, %v2592, %v2634
        %2636 = vst [vmem:[%s895 + $0xc] sm:$0x7] %v2635
        %v2637 = vld [vmem:[%s895 + $0x18] sm:$0x7]
        %v2638 = vsel %vm898, %v2598, %v2637
        %2639 = vst [vmem:[%s895 + $0x18] sm:$0x7] %v2638
        %v2640 = vld [vmem:[%s895 + $0x1c] sm:$0x7]
        %v2641 = vsel %vm898, %v2604, %v2640
        %2642 = vst [vmem:[%s895 + $0x1c] sm:$0x7] %v2641
        %v2643 = vld [vmem:[%s895 + $0x20] sm:$0x7]
        %v2644 = vsel %vm898, %v2610, %v2643
        %2645 = vst [vmem:[%s895 + $0x20] sm:$0x7] %v2644
        %v2646 = vld [vmem:[%s895 + $0x24] sm:$0x7]
        %v2647 = vsel %vm898, %v2616, %v2646
        %2648 = vst [vmem:[%s895 + $0x24] sm:$0x7] %v2647
        %v2649 = vld [vmem:[#allocation2] sm:$0x3]
        %v2650 = vld [vmem:[#allocation2 + $0x4] sm:$0x3]
        %v2651 = vld [vmem:[#allocation2 + $0x8] sm:$0x3]
        %v2652 = vld [vmem:[#allocation2 + $0xc] sm:$0x3]
        %v2653 = vld [vmem:[#allocation2 + $0x18] sm:$0x3]
        %v2654 = vld [vmem:[#allocation2 + $0x1c] sm:$0x3]
        %v2655 = vld [vmem:[#allocation2 + $0x20] sm:$0x3]
        %v2656 = vld [vmem:[#allocation2 + $0x24] sm:$0x3]
        %v2657 = vld [vmem:[%s11] sm:$0xf]
        %v2658 = vld [vmem:[%s11 + $0x4] sm:$0xf]
        %v2659 = vld [vmem:[#allocation2] sm:$0x7]
        %v2660 = vld [vmem:[#allocation2 + $0x4] sm:$0x7]
        %v2661 = vld [vmem:[#allocation2 + $0x8] sm:$0x7]
        %v2662 = vld [vmem:[#allocation2 + $0xc] sm:$0x7]
        %v2663 = vld [vmem:[#allocation2 + $0x18] sm:$0x7]
        %v2664 = vld [vmem:[#allocation2 + $0x1c] sm:$0x7]
        %v2665 = vld [vmem:[#allocation2 + $0x20] sm:$0x7]
        %v2666 = vld [vmem:[#allocation2 + $0x24] sm:$0x7]
        %v2675 = vrot.slane %v2659, 2
        %v2676 = vrot.slane %v2660, 2
        %v2677 = vrot.slane %v2661, 2
        %v2678 = vrot.slane %v2662, 2
        %v2679 = vrot.slane %v2663, 2
        %v2680 = vrot.slane %v2664, 2
        %v2681 = vrot.slane %v2665, 2
        %v2682 = vrot.slane %v2666, 2
        %v2685 = vsel %vm790, %v2659, %v2675
        %v2686 = vsel %vm794, %v2659, %v2675
        %v2688 = vrot.slane %v2686, 2
        %v2691 = vsel %vm790, %v2660, %v2676
        %v2692 = vsel %vm794, %v2660, %v2676
        %v2694 = vrot.slane %v2692, 2
        %v2697 = vsel %vm790, %v2661, %v2677
        %v2698 = vsel %vm794, %v2661, %v2677
        %v2700 = vrot.slane %v2698, 2
        %v2703 = vsel %vm790, %v2662, %v2678
        %v2704 = vsel %vm794, %v2662, %v2678
        %v2706 = vrot.slane %v2704, 2
        %v2709 = vsel %vm790, %v2663, %v2679
        %v2710 = vsel %vm794, %v2663, %v2679
        %v2712 = vrot.slane %v2710, 2
        %v2715 = vsel %vm790, %v2664, %v2680
        %v2716 = vsel %vm794, %v2664, %v2680
        %v2718 = vrot.slane %v2716, 2
        %v2721 = vsel %vm790, %v2665, %v2681
        %v2722 = vsel %vm794, %v2665, %v2681
        %v2724 = vrot.slane %v2722, 2
        %v2727 = vsel %vm790, %v2666, %v2682
        %v2728 = vsel %vm794, %v2666, %v2682
        %v2730 = vrot.slane %v2728, 2
        %v2731 = vshrl.u32 %v2685, 16
        %v2733 = vrot.slane %v2731, 6
        %v2734 = vshll.u32 %v2685, 16
        %v2736 = vrot.slane %v2734, 7
        %v2737 = vor.u32 %v2733, %v2736
        %v2738 = vrot.slane %v2737, 2
        %v2740 = vshll.u32 %v2688, 16
        %v2742 = vrot.slane %v2740, 7
        %v2743 = vsel %vm1011, %v2738, %v2742
        %v2744 = vshrl.u32 %v2691, 16
        %v2746 = vrot.slane %v2744, 6
        %v2747 = vshll.u32 %v2691, 16
        %v2749 = vrot.slane %v2747, 7
        %v2750 = vor.u32 %v2746, %v2749
        %v2751 = vrot.slane %v2750, 2
        %v2753 = vshll.u32 %v2694, 16
        %v2755 = vrot.slane %v2753, 7
        %v2756 = vsel %vm1011, %v2751, %v2755
        %v2757 = vshrl.u32 %v2697, 16
        %v2759 = vrot.slane %v2757, 6
        %v2760 = vshll.u32 %v2697, 16
        %v2762 = vrot.slane %v2760, 7
        %v2763 = vor.u32 %v2759, %v2762
        %v2764 = vrot.slane %v2763, 2
        %v2766 = vshll.u32 %v2700, 16
        %v2768 = vrot.slane %v2766, 7
        %v2769 = vsel %vm1011, %v2764, %v2768
        %v2770 = vshrl.u32 %v2703, 16
        %v2772 = vrot.slane %v2770, 6
        %v2773 = vshll.u32 %v2703, 16
        %v2775 = vrot.slane %v2773, 7
        %v2776 = vor.u32 %v2772, %v2775
        %v2777 = vrot.slane %v2776, 2
        %v2779 = vshll.u32 %v2706, 16
        %v2781 = vrot.slane %v2779, 7
        %v2782 = vsel %vm1011, %v2777, %v2781
        %v2783 = vshrl.u32 %v2709, 16
        %v2785 = vrot.slane %v2783, 6
        %v2786 = vshll.u32 %v2709, 16
        %v2788 = vrot.slane %v2786, 7
        %v2789 = vor.u32 %v2785, %v2788
        %v2790 = vrot.slane %v2789, 2
        %v2792 = vshll.u32 %v2712, 16
        %v2794 = vrot.slane %v2792, 7
        %v2795 = vsel %vm1011, %v2790, %v2794
        %v2796 = vshrl.u32 %v2715, 16
        %v2798 = vrot.slane %v2796, 6
        %v2799 = vshll.u32 %v2715, 16
        %v2801 = vrot.slane %v2799, 7
        %v2802 = vor.u32 %v2798, %v2801
        %v2803 = vrot.slane %v2802, 2
        %v2805 = vshll.u32 %v2718, 16
        %v2807 = vrot.slane %v2805, 7
        %v2808 = vsel %vm1011, %v2803, %v2807
        %v2809 = vshrl.u32 %v2721, 16
        %v2811 = vrot.slane %v2809, 6
        %v2812 = vshll.u32 %v2721, 16
        %v2814 = vrot.slane %v2812, 7
        %v2815 = vor.u32 %v2811, %v2814
        %v2816 = vrot.slane %v2815, 2
        %v2818 = vshll.u32 %v2724, 16
        %v2820 = vrot.slane %v2818, 7
        %v2821 = vsel %vm1011, %v2816, %v2820
        %v2822 = vshrl.u32 %v2727, 16
        %v2824 = vrot.slane %v2822, 6
        %v2825 = vshll.u32 %v2727, 16
        %v2827 = vrot.slane %v2825, 7
        %v2828 = vor.u32 %v2824, %v2827
        %v2829 = vrot.slane %v2828, 2
        %v2831 = vshll.u32 %v2730, 16
        %v2833 = vrot.slane %v2831, 7
        %v2834 = vsel %vm1011, %v2829, %v2833
        %s2835 = scalar_lea.vmem %s11, 8
        %v2836 = vld [vmem:[%s2835] sm:$0xf]
        %v2837 = vld [vmem:[%s2835 + $0x4] sm:$0xf]
        %2839 = vst [vmem:[#allocation1] ss:$4 sm:$0xff] %v2743
        %s2841 = scalar_lea.vmem [#allocation1], 1
        %2842 = vst [vmem:[%s2841] ss:$4 sm:$0xff] %v2756
        %s2844 = scalar_lea.vmem [#allocation1], 2
        %2845 = vst [vmem:[%s2844] ss:$4 sm:$0xff] %v2769
        %s2847 = scalar_lea.vmem [#allocation1], 3
        %2848 = vst [vmem:[%s2847] ss:$4 sm:$0xff] %v2782
        %s2850 = scalar_lea.vmem [#allocation1], 32
        %2851 = vst [vmem:[%s2850] ss:$4 sm:$0xff] %v2795
        %s2853 = scalar_lea.vmem [#allocation1], 33
        %2854 = vst [vmem:[%s2853] ss:$4 sm:$0xff] %v2808
        %s2856 = scalar_lea.vmem [#allocation1], 34
        %2857 = vst [vmem:[%s2856] ss:$4 sm:$0xff] %v2821
        %s2859 = scalar_lea.vmem [#allocation1], 35
        %2860 = vst [vmem:[%s2859] ss:$4 sm:$0xff] %v2834
        %v2861 = vld.sshfl [vmem:[#allocation1] sm:$0xff pattern:$0x73625140]
        %v2862 = vld.sshfl [vmem:[#allocation1 + $0x20] sm:$0xff pattern:$0x73625140]
        %v2865 = vunpack.c.l.b16 %v2836
        %v2866 = vunpack.c.l.b16 %v2837
        %v2867 = vpack.c.b16 %v2866, %v2865
        %v2869 = vsel %vm1150, %v2861, 0
        %v2871 = vsel %vm1150, %v2862, 0
        %2873 = vmatpush.bf16.msra.mxu0 0
        %2874 = vmatpush.bf16.msra.mxu0 0
        %2875 = vmatpush.bf16.msra.mxu0 0
        %2876 = vmatpush.bf16.msra.mxu0 0
        %2877 = vmatpush.bf16.msra.mxu0 0
        %2878 = vmatpush.bf16.msra.mxu0 0
        %2879 = vmatpush.bf16.msra.mxu0 0
        %2880 = vmatpush.bf16.msra.mxu0 %v2867
        %2881 = vmatmul.bf16.gmra.mxu0 %v2869
        %v2882 = vpop.f32.mrf.mxu0
        %v2883 = vadd.f32 0.0, %v2882
        %v2884 = vpop.f32.mrf.mxu0
        %v2885 = vadd.f32 0.0, %v2884
        %2886 = vmatmul.bf16.gmra.mxu0 %v2871
        %v2887 = vpop.f32.mrf.mxu0
        %v2888 = vadd.f32 0.0, %v2887
        %v2889 = vpop.f32.mrf.mxu0
        %v2890 = vadd.f32 0.0, %v2889
        %2891 = vdwg.mxu0
        %2893 = vst [vmem:[#allocation1] ss:$4 sm:$0xff] %v2649
        %s2895 = scalar_lea.vmem [#allocation1], 1
        %2896 = vst [vmem:[%s2895] ss:$4 sm:$0xff] %v2650
        %s2898 = scalar_lea.vmem [#allocation1], 2
        %2899 = vst [vmem:[%s2898] ss:$4 sm:$0xff] %v2651
        %s2901 = scalar_lea.vmem [#allocation1], 3
        %2902 = vst [vmem:[%s2901] ss:$4 sm:$0xff] %v2652
        %s2904 = scalar_lea.vmem [#allocation1], 32
        %2905 = vst [vmem:[%s2904] ss:$4 sm:$0xff] %v2653
        %s2907 = scalar_lea.vmem [#allocation1], 33
        %2908 = vst [vmem:[%s2907] ss:$4 sm:$0xff] %v2654
        %s2910 = scalar_lea.vmem [#allocation1], 34
        %2911 = vst [vmem:[%s2910] ss:$4 sm:$0xff] %v2655
        %s2913 = scalar_lea.vmem [#allocation1], 35
        %2914 = vst [vmem:[%s2913] ss:$4 sm:$0xff] %v2656
        %v2915 = vld.sshfl [vmem:[#allocation1] sm:$0xff pattern:$0x73625140]
        %v2916 = vld.sshfl [vmem:[#allocation1 + $0x20] sm:$0xff pattern:$0x73625140]
        %v2919 = vunpack.c.l.b16 %v2657
        %v2920 = vunpack.c.l.b16 %v2658
        %v2921 = vpack.c.b16 %v2920, %v2919
        %v2923 = vsel %vm1150, %v2915, 0
        %v2925 = vsel %vm1150, %v2916, 0
        %2927 = vmatpush.bf16.msra.mxu0 0
        %2928 = vmatpush.bf16.msra.mxu0 0
        %2929 = vmatpush.bf16.msra.mxu0 0
        %2930 = vmatpush.bf16.msra.mxu0 0
        %2931 = vmatpush.bf16.msra.mxu0 0
        %2932 = vmatpush.bf16.msra.mxu0 0
        %2933 = vmatpush.bf16.msra.mxu0 0
        %2934 = vmatpush.bf16.msra.mxu0 %v2921
        %2935 = vmatmul.bf16.gmra.mxu0 %v2923
        %v2936 = vpop.f32.mrf.mxu0
        %v2937 = vadd.f32 %v2883, %v2936
        %v2938 = vpop.f32.mrf.mxu0
        %v2939 = vadd.f32 %v2885, %v2938
        %2940 = vmatmul.bf16.gmra.mxu0 %v2925
        %v2941 = vpop.f32.mrf.mxu0
        %v2942 = vadd.f32 %v2888, %v2941
        %v2943 = vpop.f32.mrf.mxu0
        %v2944 = vadd.f32 %v2890, %v2943
        %2945 = vdwg.mxu0
        %v2946 = vld [vmem:[#allocation2] sm:$0x6]
        %v2947 = vld [vmem:[#allocation2 + $0x4] sm:$0x6]
        %v2948 = vld [vmem:[#allocation2 + $0x8] sm:$0x6]
        %v2949 = vld [vmem:[#allocation2 + $0xc] sm:$0x6]
        %v2950 = vld [vmem:[#allocation2 + $0x18] sm:$0x6]
        %v2951 = vld [vmem:[#allocation2 + $0x1c] sm:$0x6]
        %v2952 = vld [vmem:[#allocation2 + $0x20] sm:$0x6]
        %v2953 = vld [vmem:[#allocation2 + $0x24] sm:$0x6]
        %v2962 = vrot.slane %v2946, 2
        %v2963 = vrot.slane %v2947, 2
        %v2964 = vrot.slane %v2948, 2
        %v2965 = vrot.slane %v2949, 2
        %v2966 = vrot.slane %v2950, 2
        %v2967 = vrot.slane %v2951, 2
        %v2968 = vrot.slane %v2952, 2
        %v2969 = vrot.slane %v2953, 2
        %v2972 = vsel %vm790, %v2946, %v2962
        %v2974 = vsel %vm794, %v2946, %v2962
        %v2976 = vrot.slane %v2974, 2
        %v2979 = vsel %vm790, %v2947, %v2963
        %v2981 = vsel %vm794, %v2947, %v2963
        %v2983 = vrot.slane %v2981, 2
        %v2986 = vsel %vm790, %v2948, %v2964
        %v2988 = vsel %vm794, %v2948, %v2964
        %v2990 = vrot.slane %v2988, 2
        %v2993 = vsel %vm790, %v2949, %v2965
        %v2995 = vsel %vm794, %v2949, %v2965
        %v2997 = vrot.slane %v2995, 2
        %v3000 = vsel %vm790, %v2950, %v2966
        %v3002 = vsel %vm794, %v2950, %v2966
        %v3004 = vrot.slane %v3002, 2
        %v3007 = vsel %vm790, %v2951, %v2967
        %v3009 = vsel %vm794, %v2951, %v2967
        %v3011 = vrot.slane %v3009, 2
        %v3014 = vsel %vm790, %v2952, %v2968
        %v3016 = vsel %vm794, %v2952, %v2968
        %v3018 = vrot.slane %v3016, 2
        %v3021 = vsel %vm790, %v2953, %v2969
        %v3023 = vsel %vm794, %v2953, %v2969
        %v3025 = vrot.slane %v3023, 2
        %v3026 = vrot.slane %v2972, 7
        %v3027 = vrot.slane %v3026, 2
        %v3028 = vrot.slane %v2976, 7
        %v3029 = vsel %vm1314, %v3027, %v3028
        %v3030 = vrot.slane %v2979, 7
        %v3031 = vrot.slane %v3030, 2
        %v3032 = vrot.slane %v2983, 7
        %v3033 = vsel %vm1314, %v3031, %v3032
        %v3034 = vrot.slane %v2986, 7
        %v3035 = vrot.slane %v3034, 2
        %v3036 = vrot.slane %v2990, 7
        %v3037 = vsel %vm1314, %v3035, %v3036
        %v3038 = vrot.slane %v2993, 7
        %v3039 = vrot.slane %v3038, 2
        %v3040 = vrot.slane %v2997, 7
        %v3041 = vsel %vm1314, %v3039, %v3040
        %v3042 = vrot.slane %v3000, 7
        %v3043 = vrot.slane %v3042, 2
        %v3044 = vrot.slane %v3004, 7
        %v3045 = vsel %vm1314, %v3043, %v3044
        %v3046 = vrot.slane %v3007, 7
        %v3047 = vrot.slane %v3046, 2
        %v3048 = vrot.slane %v3011, 7
        %v3049 = vsel %vm1314, %v3047, %v3048
        %v3050 = vrot.slane %v3014, 7
        %v3051 = vrot.slane %v3050, 2
        %v3052 = vrot.slane %v3018, 7
        %v3053 = vsel %vm1314, %v3051, %v3052
        %v3054 = vrot.slane %v3021, 7
        %v3055 = vrot.slane %v3054, 2
        %v3056 = vrot.slane %v3025, 7
        %v3057 = vsel %vm1314, %v3055, %v3056
        %s3058 = scalar_lea.vmem %s11, 16
        %v3059 = vld [vmem:[%s3058] sm:$0xf]
        %v3060 = vld [vmem:[%s3058 + $0x4] sm:$0xf]
        %3062 = vst [vmem:[#allocation1] ss:$4 sm:$0xff] %v3029
        %s3064 = scalar_lea.vmem [#allocation1], 1
        %3065 = vst [vmem:[%s3064] ss:$4 sm:$0xff] %v3033
        %s3067 = scalar_lea.vmem [#allocation1], 2
        %3068 = vst [vmem:[%s3067] ss:$4 sm:$0xff] %v3037
        %s3070 = scalar_lea.vmem [#allocation1], 3
        %3071 = vst [vmem:[%s3070] ss:$4 sm:$0xff] %v3041
        %s3073 = scalar_lea.vmem [#allocation1], 32
        %3074 = vst [vmem:[%s3073] ss:$4 sm:$0xff] %v3045
        %s3076 = scalar_lea.vmem [#allocation1], 33
        %3077 = vst [vmem:[%s3076] ss:$4 sm:$0xff] %v3049
        %s3079 = scalar_lea.vmem [#allocation1], 34
        %3080 = vst [vmem:[%s3079] ss:$4 sm:$0xff] %v3053
        %s3082 = scalar_lea.vmem [#allocation1], 35
        %3083 = vst [vmem:[%s3082] ss:$4 sm:$0xff] %v3057
        %v3084 = vld.sshfl [vmem:[#allocation1] sm:$0xff pattern:$0x73625140]
        %v3085 = vld.sshfl [vmem:[#allocation1 + $0x20] sm:$0xff pattern:$0x73625140]
        %v3088 = vunpack.c.l.b16 %v3059
        %v3089 = vunpack.c.l.b16 %v3060
        %v3090 = vpack.c.b16 %v3089, %v3088
        %v3092 = vsel %vm1150, %v3084, 0
        %v3094 = vsel %vm1150, %v3085, 0
        %3096 = vmatpush.bf16.msra.mxu0 0
        %3097 = vmatpush.bf16.msra.mxu0 0
        %3098 = vmatpush.bf16.msra.mxu0 0
        %3099 = vmatpush.bf16.msra.mxu0 0
        %3100 = vmatpush.bf16.msra.mxu0 0
        %3101 = vmatpush.bf16.msra.mxu0 0
        %3102 = vmatpush.bf16.msra.mxu0 0
        %3103 = vmatpush.bf16.msra.mxu0 %v3090
        %3104 = vmatmul.bf16.gmra.mxu0 %v3092
        %v3105 = vpop.f32.mrf.mxu0
        %v3106 = vadd.f32 0.0, %v3105
        %v3107 = vpop.f32.mrf.mxu0
        %v3108 = vadd.f32 0.0, %v3107
        %3109 = vmatmul.bf16.gmra.mxu0 %v3094
        %v3110 = vpop.f32.mrf.mxu0
        %v3111 = vadd.f32 0.0, %v3110
        %v3112 = vpop.f32.mrf.mxu0
        %v3113 = vadd.f32 0.0, %v3112
        %3114 = vdwg.mxu0
        %v3115 = vadd.f32 %v2937, %v3106
        %v3116 = vadd.f32 %v2939, %v3108
        %v3117 = vadd.f32 %v2942, %v3111
        %v3118 = vadd.f32 %v2944, %v3113
        %v3119 = vld [vmem:[%s895] sm:$0x3]
        %v3120 = vld [vmem:[%s895 + $0x4] sm:$0x3]
        %v3121 = vld [vmem:[%s895 + $0x8] sm:$0x3]
        %v3122 = vld [vmem:[%s895 + $0xc] sm:$0x3]
        %v3123 = vld [vmem:[%s895 + $0x18] sm:$0x3]
        %v3124 = vld [vmem:[%s895 + $0x1c] sm:$0x3]
        %v3125 = vld [vmem:[%s895 + $0x20] sm:$0x3]
        %v3126 = vld [vmem:[%s895 + $0x24] sm:$0x3]
        %s3127 = scalar_lea.vmem %s11, 24
        %v3128 = vld [vmem:[%s3127] sm:$0xf]
        %v3129 = vld [vmem:[%s3127 + $0x4] sm:$0xf]
        %3131 = vst [vmem:[#allocation1] ss:$4 sm:$0xff] %v3119
        %s3133 = scalar_lea.vmem [#allocation1], 1
        %3134 = vst [vmem:[%s3133] ss:$4 sm:$0xff] %v3120
        %s3136 = scalar_lea.vmem [#allocation1], 2
        %3137 = vst [vmem:[%s3136] ss:$4 sm:$0xff] %v3121
        %s3139 = scalar_lea.vmem [#allocation1], 3
        %3140 = vst [vmem:[%s3139] ss:$4 sm:$0xff] %v3122
        %s3142 = scalar_lea.vmem [#allocation1], 32
        %3143 = vst [vmem:[%s3142] ss:$4 sm:$0xff] %v3123
        %s3145 = scalar_lea.vmem [#allocation1], 33
        %3146 = vst [vmem:[%s3145] ss:$4 sm:$0xff] %v3124
        %s3148 = scalar_lea.vmem [#allocation1], 34
        %3149 = vst [vmem:[%s3148] ss:$4 sm:$0xff] %v3125
        %s3151 = scalar_lea.vmem [#allocation1], 35
        %3152 = vst [vmem:[%s3151] ss:$4 sm:$0xff] %v3126
        %v3153 = vld.sshfl [vmem:[#allocation1] sm:$0xff pattern:$0x73625140]
        %v3154 = vld.sshfl [vmem:[#allocation1 + $0x20] sm:$0xff pattern:$0x73625140]
        %v3157 = vunpack.c.l.b16 %v3128
        %v3158 = vunpack.c.l.b16 %v3129
        %v3159 = vpack.c.b16 %v3158, %v3157
        %v3161 = vsel %vm1150, %v3153, 0
        %v3163 = vsel %vm1150, %v3154, 0
        %3165 = vmatpush.bf16.msra.mxu0 0
        %3166 = vmatpush.bf16.msra.mxu0 0
        %3167 = vmatpush.bf16.msra.mxu0 0
        %3168 = vmatpush.bf16.msra.mxu0 0
        %3169 = vmatpush.bf16.msra.mxu0 0
        %3170 = vmatpush.bf16.msra.mxu0 0
        %3171 = vmatpush.bf16.msra.mxu0 0
        %3172 = vmatpush.bf16.msra.mxu0 %v3159
        %3173 = vmatmul.bf16.gmra.mxu0 %v3161
        %v3174 = vpop.f32.mrf.mxu0
        %v3175 = vadd.f32 0.0, %v3174
        %v3176 = vpop.f32.mrf.mxu0
        %v3177 = vadd.f32 0.0, %v3176
        %3178 = vmatmul.bf16.gmra.mxu0 %v3163
        %v3179 = vpop.f32.mrf.mxu0
        %v3180 = vadd.f32 0.0, %v3179
        %v3181 = vpop.f32.mrf.mxu0
        %v3182 = vadd.f32 0.0, %v3181
        %3183 = vdwg.mxu0
        %v3184 = vadd.f32 %v3115, %v3175
        %v3185 = vadd.f32 %v3116, %v3177
        %v3186 = vadd.f32 %v3117, %v3180
        %v3187 = vadd.f32 %v3118, %v3182
        %v3188 = vld [vmem:[%s895] sm:$0x7]
        %v3189 = vld [vmem:[%s895 + $0x4] sm:$0x7]
        %v3190 = vld [vmem:[%s895 + $0x8] sm:$0x7]
        %v3191 = vld [vmem:[%s895 + $0xc] sm:$0x7]
        %v3192 = vld [vmem:[%s895 + $0x18] sm:$0x7]
        %v3193 = vld [vmem:[%s895 + $0x1c] sm:$0x7]
        %v3194 = vld [vmem:[%s895 + $0x20] sm:$0x7]
        %v3195 = vld [vmem:[%s895 + $0x24] sm:$0x7]
        %v3204 = vrot.slane %v3188, 2
        %v3205 = vrot.slane %v3189, 2
        %v3206 = vrot.slane %v3190, 2
        %v3207 = vrot.slane %v3191, 2
        %v3208 = vrot.slane %v3192, 2
        %v3209 = vrot.slane %v3193, 2
        %v3210 = vrot.slane %v3194, 2
        %v3211 = vrot.slane %v3195, 2
        %v3214 = vsel %vm790, %v3188, %v3204
        %v3215 = vsel %vm794, %v3188, %v3204
        %v3217 = vrot.slane %v3215, 2
        %v3220 = vsel %vm790, %v3189, %v3205
        %v3221 = vsel %vm794, %v3189, %v3205
        %v3223 = vrot.slane %v3221, 2
        %v3226 = vsel %vm790, %v3190, %v3206
        %v3227 = vsel %vm794, %v3190, %v3206
        %v3229 = vrot.slane %v3227, 2
        %v3232 = vsel %vm790, %v3191, %v3207
        %v3233 = vsel %vm794, %v3191, %v3207
        %v3235 = vrot.slane %v3233, 2
        %v3238 = vsel %vm790, %v3192, %v3208
        %v3239 = vsel %vm794, %v3192, %v3208
        %v3241 = vrot.slane %v3239, 2
        %v3244 = vsel %vm790, %v3193, %v3209
        %v3245 = vsel %vm794, %v3193, %v3209
        %v3247 = vrot.slane %v3245, 2
        %v3250 = vsel %vm790, %v3194, %v3210
        %v3251 = vsel %vm794, %v3194, %v3210
        %v3253 = vrot.slane %v3251, 2
        %v3256 = vsel %vm790, %v3195, %v3211
        %v3257 = vsel %vm794, %v3195, %v3211
        %v3259 = vrot.slane %v3257, 2
        %v3260 = vshrl.u32 %v3214, 16
        %v3262 = vrot.slane %v3260, 6
        %v3263 = vshll.u32 %v3214, 16
        %v3265 = vrot.slane %v3263, 7
        %v3266 = vor.u32 %v3262, %v3265
        %v3267 = vrot.slane %v3266, 2
        %v3269 = vshll.u32 %v3217, 16
        %v3271 = vrot.slane %v3269, 7
        %v3272 = vsel %vm1011, %v3267, %v3271
        %v3273 = vshrl.u32 %v3220, 16
        %v3275 = vrot.slane %v3273, 6
        %v3276 = vshll.u32 %v3220, 16
        %v3278 = vrot.slane %v3276, 7
        %v3279 = vor.u32 %v3275, %v3278
        %v3280 = vrot.slane %v3279, 2
        %v3282 = vshll.u32 %v3223, 16
        %v3284 = vrot.slane %v3282, 7
        %v3285 = vsel %vm1011, %v3280, %v3284
        %v3286 = vshrl.u32 %v3226, 16
        %v3288 = vrot.slane %v3286, 6
        %v3289 = vshll.u32 %v3226, 16
        %v3291 = vrot.slane %v3289, 7
        %v3292 = vor.u32 %v3288, %v3291
        %v3293 = vrot.slane %v3292, 2
        %v3295 = vshll.u32 %v3229, 16
        %v3297 = vrot.slane %v3295, 7
        %v3298 = vsel %vm1011, %v3293, %v3297
        %v3299 = vshrl.u32 %v3232, 16
        %v3301 = vrot.slane %v3299, 6
        %v3302 = vshll.u32 %v3232, 16
        %v3304 = vrot.slane %v3302, 7
        %v3305 = vor.u32 %v3301, %v3304
        %v3306 = vrot.slane %v3305, 2
        %v3308 = vshll.u32 %v3235, 16
        %v3310 = vrot.slane %v3308, 7
        %v3311 = vsel %vm1011, %v3306, %v3310
        %v3312 = vshrl.u32 %v3238, 16
        %v3314 = vrot.slane %v3312, 6
        %v3315 = vshll.u32 %v3238, 16
        %v3317 = vrot.slane %v3315, 7
        %v3318 = vor.u32 %v3314, %v3317
        %v3319 = vrot.slane %v3318, 2
        %v3321 = vshll.u32 %v3241, 16
        %v3323 = vrot.slane %v3321, 7
        %v3324 = vsel %vm1011, %v3319, %v3323
        %v3325 = vshrl.u32 %v3244, 16
        %v3327 = vrot.slane %v3325, 6
        %v3328 = vshll.u32 %v3244, 16
        %v3330 = vrot.slane %v3328, 7
        %v3331 = vor.u32 %v3327, %v3330
        %v3332 = vrot.slane %v3331, 2
        %v3334 = vshll.u32 %v3247, 16
        %v3336 = vrot.slane %v3334, 7
        %v3337 = vsel %vm1011, %v3332, %v3336
        %v3338 = vshrl.u32 %v3250, 16
        %v3340 = vrot.slane %v3338, 6
        %v3341 = vshll.u32 %v3250, 16
        %v3343 = vrot.slane %v3341, 7
        %v3344 = vor.u32 %v3340, %v3343
        %v3345 = vrot.slane %v3344, 2
        %v3347 = vshll.u32 %v3253, 16
        %v3349 = vrot.slane %v3347, 7
        %v3350 = vsel %vm1011, %v3345, %v3349
        %v3351 = vshrl.u32 %v3256, 16
        %v3353 = vrot.slane %v3351, 6
        %v3354 = vshll.u32 %v3256, 16
        %v3356 = vrot.slane %v3354, 7
        %v3357 = vor.u32 %v3353, %v3356
        %v3358 = vrot.slane %v3357, 2
        %v3360 = vshll.u32 %v3259, 16
        %v3362 = vrot.slane %v3360, 7
        %v3363 = vsel %vm1011, %v3358, %v3362
        %s3364 = scalar_lea.vmem %s11, 32
        %v3365 = vld [vmem:[%s3364] sm:$0xf]
        %v3366 = vld [vmem:[%s3364 + $0x4] sm:$0xf]
        %3368 = vst [vmem:[#allocation1] ss:$4 sm:$0xff] %v3272
        %s3370 = scalar_lea.vmem [#allocation1], 1
        %3371 = vst [vmem:[%s3370] ss:$4 sm:$0xff] %v3285
        %s3373 = scalar_lea.vmem [#allocation1], 2
        %3374 = vst [vmem:[%s3373] ss:$4 sm:$0xff] %v3298
        %s3376 = scalar_lea.vmem [#allocation1], 3
        %3377 = vst [vmem:[%s3376] ss:$4 sm:$0xff] %v3311
        %s3379 = scalar_lea.vmem [#allocation1], 32
        %3380 = vst [vmem:[%s3379] ss:$4 sm:$0xff] %v3324
        %s3382 = scalar_lea.vmem [#allocation1], 33
        %3383 = vst [vmem:[%s3382] ss:$4 sm:$0xff] %v3337
        %s3385 = scalar_lea.vmem [#allocation1], 34
        %3386 = vst [vmem:[%s3385] ss:$4 sm:$0xff] %v3350
        %s3388 = scalar_lea.vmem [#allocation1], 35
        %3389 = vst [vmem:[%s3388] ss:$4 sm:$0xff] %v3363
        %v3390 = vld.sshfl [vmem:[#allocation1] sm:$0xff pattern:$0x73625140]
        %v3391 = vld.sshfl [vmem:[#allocation1 + $0x20] sm:$0xff pattern:$0x73625140]
        %v3394 = vunpack.c.l.b16 %v3365
        %v3395 = vunpack.c.l.b16 %v3366
        %v3396 = vpack.c.b16 %v3395, %v3394
        %v3398 = vsel %vm1150, %v3390, 0
        %v3400 = vsel %vm1150, %v3391, 0
        %3402 = vmatpush.bf16.msra.mxu0 0
        %3403 = vmatpush.bf16.msra.mxu0 0
        %3404 = vmatpush.bf16.msra.mxu0 0
        %3405 = vmatpush.bf16.msra.mxu0 0
        %3406 = vmatpush.bf16.msra.mxu0 0
        %3407 = vmatpush.bf16.msra.mxu0 0
        %3408 = vmatpush.bf16.msra.mxu0 0
        %3409 = vmatpush.bf16.msra.mxu0 %v3396
        %3410 = vmatmul.bf16.gmra.mxu0 %v3398
        %v3411 = vpop.f32.mrf.mxu0
        %v3412 = vadd.f32 0.0, %v3411
        %v3413 = vpop.f32.mrf.mxu0
        %v3414 = vadd.f32 0.0, %v3413
        %3415 = vmatmul.bf16.gmra.mxu0 %v3400
        %v3416 = vpop.f32.mrf.mxu0
        %v3417 = vadd.f32 0.0, %v3416
        %v3418 = vpop.f32.mrf.mxu0
        %v3419 = vadd.f32 0.0, %v3418
        %3420 = vdwg.mxu0
        %v3421 = vadd.f32 %v3184, %v3412
        %v3422 = vadd.f32 %v3185, %v3414
        %v3423 = vadd.f32 %v3186, %v3417
        %v3424 = vadd.f32 %v3187, %v3419
        %v3425 = vld [vmem:[%s895] sm:$0x6]
        %v3426 = vld [vmem:[%s895 + $0x4] sm:$0x6]
        %v3427 = vld [vmem:[%s895 + $0x8] sm:$0x6]
        %v3428 = vld [vmem:[%s895 + $0xc] sm:$0x6]
        %v3429 = vld [vmem:[%s895 + $0x18] sm:$0x6]
        %v3430 = vld [vmem:[%s895 + $0x1c] sm:$0x6]
        %v3431 = vld [vmem:[%s895 + $0x20] sm:$0x6]
        %v3432 = vld [vmem:[%s895 + $0x24] sm:$0x6]
        %v3441 = vrot.slane %v3425, 2
        %v3442 = vrot.slane %v3426, 2
        %v3443 = vrot.slane %v3427, 2
        %v3444 = vrot.slane %v3428, 2
        %v3445 = vrot.slane %v3429, 2
        %v3446 = vrot.slane %v3430, 2
        %v3447 = vrot.slane %v3431, 2
        %v3448 = vrot.slane %v3432, 2
        %v3451 = vsel %vm790, %v3425, %v3441
        %v3453 = vsel %vm794, %v3425, %v3441
        %v3455 = vrot.slane %v3453, 2
        %v3458 = vsel %vm790, %v3426, %v3442
        %v3460 = vsel %vm794, %v3426, %v3442
        %v3462 = vrot.slane %v3460, 2
        %v3465 = vsel %vm790, %v3427, %v3443
        %v3467 = vsel %vm794, %v3427, %v3443
        %v3469 = vrot.slane %v3467, 2
        %v3472 = vsel %vm790, %v3428, %v3444
        %v3474 = vsel %vm794, %v3428, %v3444
        %v3476 = vrot.slane %v3474, 2
        %v3479 = vsel %vm790, %v3429, %v3445
        %v3481 = vsel %vm794, %v3429, %v3445
        %v3483 = vrot.slane %v3481, 2
        %v3486 = vsel %vm790, %v3430, %v3446
        %v3488 = vsel %vm794, %v3430, %v3446
        %v3490 = vrot.slane %v3488, 2
        %v3493 = vsel %vm790, %v3431, %v3447
        %v3495 = vsel %vm794, %v3431, %v3447
        %v3497 = vrot.slane %v3495, 2
        %v3500 = vsel %vm790, %v3432, %v3448
        %v3502 = vsel %vm794, %v3432, %v3448
        %v3504 = vrot.slane %v3502, 2
        %v3505 = vrot.slane %v3451, 7
        %v3506 = vrot.slane %v3505, 2
        %v3507 = vrot.slane %v3455, 7
        %v3508 = vsel %vm1314, %v3506, %v3507
        %v3509 = vrot.slane %v3458, 7
        %v3510 = vrot.slane %v3509, 2
        %v3511 = vrot.slane %v3462, 7
        %v3512 = vsel %vm1314, %v3510, %v3511
        %v3513 = vrot.slane %v3465, 7
        %v3514 = vrot.slane %v3513, 2
        %v3515 = vrot.slane %v3469, 7
        %v3516 = vsel %vm1314, %v3514, %v3515
        %v3517 = vrot.slane %v3472, 7
        %v3518 = vrot.slane %v3517, 2
        %v3519 = vrot.slane %v3476, 7
        %v3520 = vsel %vm1314, %v3518, %v3519
        %v3521 = vrot.slane %v3479, 7
        %v3522 = vrot.slane %v3521, 2
        %v3523 = vrot.slane %v3483, 7
        %v3524 = vsel %vm1314, %v3522, %v3523
        %v3525 = vrot.slane %v3486, 7
        %v3526 = vrot.slane %v3525, 2
        %v3527 = vrot.slane %v3490, 7
        %v3528 = vsel %vm1314, %v3526, %v3527
        %v3529 = vrot.slane %v3493, 7
        %v3530 = vrot.slane %v3529, 2
        %v3531 = vrot.slane %v3497, 7
        %v3532 = vsel %vm1314, %v3530, %v3531
        %v3533 = vrot.slane %v3500, 7
        %v3534 = vrot.slane %v3533, 2
        %v3535 = vrot.slane %v3504, 7
        %v3536 = vsel %vm1314, %v3534, %v3535
        %s3537 = scalar_lea.vmem %s11, 40
        %v3538 = vld [vmem:[%s3537] sm:$0xf]
        %v3539 = vld [vmem:[%s3537 + $0x4] sm:$0xf]
        %3541 = vst [vmem:[#allocation1] ss:$4 sm:$0xff] %v3508
        %s3543 = scalar_lea.vmem [#allocation1], 1
        %3544 = vst [vmem:[%s3543] ss:$4 sm:$0xff] %v3512
        %s3546 = scalar_lea.vmem [#allocation1], 2
        %3547 = vst [vmem:[%s3546] ss:$4 sm:$0xff] %v3516
        %s3549 = scalar_lea.vmem [#allocation1], 3
        %3550 = vst [vmem:[%s3549] ss:$4 sm:$0xff] %v3520
        %s3552 = scalar_lea.vmem [#allocation1], 32
        %3553 = vst [vmem:[%s3552] ss:$4 sm:$0xff] %v3524
        %s3555 = scalar_lea.vmem [#allocation1], 33
        %3556 = vst [vmem:[%s3555] ss:$4 sm:$0xff] %v3528
        %s3558 = scalar_lea.vmem [#allocation1], 34
        %3559 = vst [vmem:[%s3558] ss:$4 sm:$0xff] %v3532
        %s3561 = scalar_lea.vmem [#allocation1], 35
        %3562 = vst [vmem:[%s3561] ss:$4 sm:$0xff] %v3536
        %v3563 = vld.sshfl [vmem:[#allocation1] sm:$0xff pattern:$0x73625140]
        %v3564 = vld.sshfl [vmem:[#allocation1 + $0x20] sm:$0xff pattern:$0x73625140]
        %v3567 = vunpack.c.l.b16 %v3538
        %v3568 = vunpack.c.l.b16 %v3539
        %v3569 = vpack.c.b16 %v3568, %v3567
        %v3571 = vsel %vm1150, %v3563, 0
        %v3573 = vsel %vm1150, %v3564, 0
        %3575 = vmatpush.bf16.msra.mxu0 0
        %3576 = vmatpush.bf16.msra.mxu0 0
        %3577 = vmatpush.bf16.msra.mxu0 0
        %3578 = vmatpush.bf16.msra.mxu0 0
        %3579 = vmatpush.bf16.msra.mxu0 0
        %3580 = vmatpush.bf16.msra.mxu0 0
        %3581 = vmatpush.bf16.msra.mxu0 0
        %3582 = vmatpush.bf16.msra.mxu0 %v3569
        %3583 = vmatmul.bf16.gmra.mxu0 %v3571
        %v3584 = vpop.f32.mrf.mxu0
        %v3585 = vadd.f32 0.0, %v3584
        %v3586 = vpop.f32.mrf.mxu0
        %v3587 = vadd.f32 0.0, %v3586
        %3588 = vmatmul.bf16.gmra.mxu0 %v3573
        %v3589 = vpop.f32.mrf.mxu0
        %v3590 = vadd.f32 0.0, %v3589
        %v3591 = vpop.f32.mrf.mxu0
        %v3592 = vadd.f32 0.0, %v3591
        %3593 = vdwg.mxu0
        %v3594 = vadd.f32 %v3421, %v3585
        %v3595 = vadd.f32 %v3422, %v3587
        %v3596 = vadd.f32 %v3423, %v3590
        %v3597 = vadd.f32 %v3424, %v3592
        %v3598 = vld [vmem:[%s1887] sm:$0x3]
        %v3599 = vld [vmem:[%s1887 + $0x4] sm:$0x3]
        %v3600 = vld [vmem:[%s1887 + $0x8] sm:$0x3]
        %v3601 = vld [vmem:[%s1887 + $0xc] sm:$0x3]
        %v3602 = vld [vmem:[%s1887 + $0x18] sm:$0x3]
        %v3603 = vld [vmem:[%s1887 + $0x1c] sm:$0x3]
        %v3604 = vld [vmem:[%s1887 + $0x20] sm:$0x3]
        %v3605 = vld [vmem:[%s1887 + $0x24] sm:$0x3]
        %s3606 = scalar_lea.vmem %s11, 48
        %v3607 = vld [vmem:[%s3606] sm:$0xf]
        %v3608 = vld [vmem:[%s3606 + $0x4] sm:$0xf]
        %3610 = vst [vmem:[#allocation1] ss:$4 sm:$0xff] %v3598
        %s3612 = scalar_lea.vmem [#allocation1], 1
        %3613 = vst [vmem:[%s3612] ss:$4 sm:$0xff] %v3599
        %s3615 = scalar_lea.vmem [#allocation1], 2
        %3616 = vst [vmem:[%s3615] ss:$4 sm:$0xff] %v3600
        %s3618 = scalar_lea.vmem [#allocation1], 3
        %3619 = vst [vmem:[%s3618] ss:$4 sm:$0xff] %v3601
        %s3621 = scalar_lea.vmem [#allocation1], 32
        %3622 = vst [vmem:[%s3621] ss:$4 sm:$0xff] %v3602
        %s3624 = scalar_lea.vmem [#allocation1], 33
        %3625 = vst [vmem:[%s3624] ss:$4 sm:$0xff] %v3603
        %s3627 = scalar_lea.vmem [#allocation1], 34
        %3628 = vst [vmem:[%s3627] ss:$4 sm:$0xff] %v3604
        %s3630 = scalar_lea.vmem [#allocation1], 35
        %3631 = vst [vmem:[%s3630] ss:$4 sm:$0xff] %v3605
        %v3632 = vld.sshfl [vmem:[#allocation1] sm:$0xff pattern:$0x73625140]
        %v3633 = vld.sshfl [vmem:[#allocation1 + $0x20] sm:$0xff pattern:$0x73625140]
        %v3636 = vunpack.c.l.b16 %v3607
        %v3637 = vunpack.c.l.b16 %v3608
        %v3638 = vpack.c.b16 %v3637, %v3636
        %v3640 = vsel %vm1150, %v3632, 0
        %v3642 = vsel %vm1150, %v3633, 0
        %3644 = vmatpush.bf16.msra.mxu0 0
        %3645 = vmatpush.bf16.msra.mxu0 0
        %3646 = vmatpush.bf16.msra.mxu0 0
        %3647 = vmatpush.bf16.msra.mxu0 0
        %3648 = vmatpush.bf16.msra.mxu0 0
        %3649 = vmatpush.bf16.msra.mxu0 0
        %3650 = vmatpush.bf16.msra.mxu0 0
        %3651 = vmatpush.bf16.msra.mxu0 %v3638
        %3652 = vmatmul.bf16.gmra.mxu0 %v3640
        %v3653 = vpop.f32.mrf.mxu0
        %v3654 = vadd.f32 0.0, %v3653
        %v3655 = vpop.f32.mrf.mxu0
        %v3656 = vadd.f32 0.0, %v3655
        %3657 = vmatmul.bf16.gmra.mxu0 %v3642
        %v3658 = vpop.f32.mrf.mxu0
        %v3659 = vadd.f32 0.0, %v3658
        %v3660 = vpop.f32.mrf.mxu0
        %v3661 = vadd.f32 0.0, %v3660
        %3662 = vdwg.mxu0
        %v3663 = vadd.f32 %v3594, %v3654
        %v3664 = vadd.f32 %v3595, %v3656
        %v3665 = vadd.f32 %v3596, %v3659
        %v3666 = vadd.f32 %v3597, %v3661
        %v3667 = vld [vmem:[%s1887] sm:$0x7]
        %v3668 = vld [vmem:[%s1887 + $0x4] sm:$0x7]
        %v3669 = vld [vmem:[%s1887 + $0x8] sm:$0x7]
        %v3670 = vld [vmem:[%s1887 + $0xc] sm:$0x7]
        %v3671 = vld [vmem:[%s1887 + $0x18] sm:$0x7]
        %v3672 = vld [vmem:[%s1887 + $0x1c] sm:$0x7]
        %v3673 = vld [vmem:[%s1887 + $0x20] sm:$0x7]
        %v3674 = vld [vmem:[%s1887 + $0x24] sm:$0x7]
        %v3683 = vrot.slane %v3667, 2
        %v3684 = vrot.slane %v3668, 2
        %v3685 = vrot.slane %v3669, 2
        %v3686 = vrot.slane %v3670, 2
        %v3687 = vrot.slane %v3671, 2
        %v3688 = vrot.slane %v3672, 2
        %v3689 = vrot.slane %v3673, 2
        %v3690 = vrot.slane %v3674, 2
        %v3693 = vsel %vm790, %v3667, %v3683
        %v3694 = vsel %vm794, %v3667, %v3683
        %v3696 = vrot.slane %v3694, 2
        %v3699 = vsel %vm790, %v3668, %v3684
        %v3700 = vsel %vm794, %v3668, %v3684
        %v3702 = vrot.slane %v3700, 2
        %v3705 = vsel %vm790, %v3669, %v3685
        %v3706 = vsel %vm794, %v3669, %v3685
        %v3708 = vrot.slane %v3706, 2
        %v3711 = vsel %vm790, %v3670, %v3686
        %v3712 = vsel %vm794, %v3670, %v3686
        %v3714 = vrot.slane %v3712, 2
        %v3717 = vsel %vm790, %v3671, %v3687
        %v3718 = vsel %vm794, %v3671, %v3687
        %v3720 = vrot.slane %v3718, 2
        %v3723 = vsel %vm790, %v3672, %v3688
        %v3724 = vsel %vm794, %v3672, %v3688
        %v3726 = vrot.slane %v3724, 2
        %v3729 = vsel %vm790, %v3673, %v3689
        %v3730 = vsel %vm794, %v3673, %v3689
        %v3732 = vrot.slane %v3730, 2
        %v3735 = vsel %vm790, %v3674, %v3690
        %v3736 = vsel %vm794, %v3674, %v3690
        %v3738 = vrot.slane %v3736, 2
        %v3739 = vshrl.u32 %v3693, 16
        %v3741 = vrot.slane %v3739, 6
        %v3742 = vshll.u32 %v3693, 16
        %v3744 = vrot.slane %v3742, 7
        %v3745 = vor.u32 %v3741, %v3744
        %v3746 = vrot.slane %v3745, 2
        %v3748 = vshll.u32 %v3696, 16
        %v3750 = vrot.slane %v3748, 7
        %v3751 = vsel %vm1011, %v3746, %v3750
        %v3752 = vshrl.u32 %v3699, 16
        %v3754 = vrot.slane %v3752, 6
        %v3755 = vshll.u32 %v3699, 16
        %v3757 = vrot.slane %v3755, 7
        %v3758 = vor.u32 %v3754, %v3757
        %v3759 = vrot.slane %v3758, 2
        %v3761 = vshll.u32 %v3702, 16
        %v3763 = vrot.slane %v3761, 7
        %v3764 = vsel %vm1011, %v3759, %v3763
        %v3765 = vshrl.u32 %v3705, 16
        %v3767 = vrot.slane %v3765, 6
        %v3768 = vshll.u32 %v3705, 16
        %v3770 = vrot.slane %v3768, 7
        %v3771 = vor.u32 %v3767, %v3770
        %v3772 = vrot.slane %v3771, 2
        %v3774 = vshll.u32 %v3708, 16
        %v3776 = vrot.slane %v3774, 7
        %v3777 = vsel %vm1011, %v3772, %v3776
        %v3778 = vshrl.u32 %v3711, 16
        %v3780 = vrot.slane %v3778, 6
        %v3781 = vshll.u32 %v3711, 16
        %v3783 = vrot.slane %v3781, 7
        %v3784 = vor.u32 %v3780, %v3783
        %v3785 = vrot.slane %v3784, 2
        %v3787 = vshll.u32 %v3714, 16
        %v3789 = vrot.slane %v3787, 7
        %v3790 = vsel %vm1011, %v3785, %v3789
        %v3791 = vshrl.u32 %v3717, 16
        %v3793 = vrot.slane %v3791, 6
        %v3794 = vshll.u32 %v3717, 16
        %v3796 = vrot.slane %v3794, 7
        %v3797 = vor.u32 %v3793, %v3796
        %v3798 = vrot.slane %v3797, 2
        %v3800 = vshll.u32 %v3720, 16
        %v3802 = vrot.slane %v3800, 7
        %v3803 = vsel %vm1011, %v3798, %v3802
        %v3804 = vshrl.u32 %v3723, 16
        %v3806 = vrot.slane %v3804, 6
        %v3807 = vshll.u32 %v3723, 16
        %v3809 = vrot.slane %v3807, 7
        %v3810 = vor.u32 %v3806, %v3809
        %v3811 = vrot.slane %v3810, 2
        %v3813 = vshll.u32 %v3726, 16
        %v3815 = vrot.slane %v3813, 7
        %v3816 = vsel %vm1011, %v3811, %v3815
        %v3817 = vshrl.u32 %v3729, 16
        %v3819 = vrot.slane %v3817, 6
        %v3820 = vshll.u32 %v3729, 16
        %v3822 = vrot.slane %v3820, 7
        %v3823 = vor.u32 %v3819, %v3822
        %v3824 = vrot.slane %v3823, 2
        %v3826 = vshll.u32 %v3732, 16
        %v3828 = vrot.slane %v3826, 7
        %v3829 = vsel %vm1011, %v3824, %v3828
        %v3830 = vshrl.u32 %v3735, 16
        %v3832 = vrot.slane %v3830, 6
        %v3833 = vshll.u32 %v3735, 16
        %v3835 = vrot.slane %v3833, 7
        %v3836 = vor.u32 %v3832, %v3835
        %v3837 = vrot.slane %v3836, 2
        %v3839 = vshll.u32 %v3738, 16
        %v3841 = vrot.slane %v3839, 7
        %v3842 = vsel %vm1011, %v3837, %v3841
        %s3843 = scalar_lea.vmem %s11, 56
        %v3844 = vld [vmem:[%s3843] sm:$0xf]
        %v3845 = vld [vmem:[%s3843 + $0x4] sm:$0xf]
        %3847 = vst [vmem:[#allocation1] ss:$4 sm:$0xff] %v3751
        %s3849 = scalar_lea.vmem [#allocation1], 1
        %3850 = vst [vmem:[%s3849] ss:$4 sm:$0xff] %v3764
        %s3852 = scalar_lea.vmem [#allocation1], 2
        %3853 = vst [vmem:[%s3852] ss:$4 sm:$0xff] %v3777
        %s3855 = scalar_lea.vmem [#allocation1], 3
        %3856 = vst [vmem:[%s3855] ss:$4 sm:$0xff] %v3790
        %s3858 = scalar_lea.vmem [#allocation1], 32
        %3859 = vst [vmem:[%s3858] ss:$4 sm:$0xff] %v3803
        %s3861 = scalar_lea.vmem [#allocation1], 33
        %3862 = vst [vmem:[%s3861] ss:$4 sm:$0xff] %v3816
        %s3864 = scalar_lea.vmem [#allocation1], 34
        %3865 = vst [vmem:[%s3864] ss:$4 sm:$0xff] %v3829
        %s3867 = scalar_lea.vmem [#allocation1], 35
        %3868 = vst [vmem:[%s3867] ss:$4 sm:$0xff] %v3842
        %v3869 = vld.sshfl [vmem:[#allocation1] sm:$0xff pattern:$0x73625140]
        %v3870 = vld.sshfl [vmem:[#allocation1 + $0x20] sm:$0xff pattern:$0x73625140]
        %v3873 = vunpack.c.l.b16 %v3844
        %v3874 = vunpack.c.l.b16 %v3845
        %v3875 = vpack.c.b16 %v3874, %v3873
        %v3877 = vsel %vm1150, %v3869, 0
        %v3879 = vsel %vm1150, %v3870, 0
        %3881 = vmatpush.bf16.msra.mxu0 0
        %3882 = vmatpush.bf16.msra.mxu0 0
        %3883 = vmatpush.bf16.msra.mxu0 0
        %3884 = vmatpush.bf16.msra.mxu0 0
        %3885 = vmatpush.bf16.msra.mxu0 0
        %3886 = vmatpush.bf16.msra.mxu0 0
        %3887 = vmatpush.bf16.msra.mxu0 0
        %3888 = vmatpush.bf16.msra.mxu0 %v3875
        %3889 = vmatmul.bf16.gmra.mxu0 %v3877
        %v3890 = vpop.f32.mrf.mxu0
        %v3891 = vadd.f32 0.0, %v3890
        %v3892 = vpop.f32.mrf.mxu0
        %v3893 = vadd.f32 0.0, %v3892
        %3894 = vmatmul.bf16.gmra.mxu0 %v3879
        %v3895 = vpop.f32.mrf.mxu0
        %v3896 = vadd.f32 0.0, %v3895
        %v3897 = vpop.f32.mrf.mxu0
        %v3898 = vadd.f32 0.0, %v3897
        %3899 = vdwg.mxu0
        %v3900 = vadd.f32 %v3663, %v3891
        %v3901 = vadd.f32 %v3664, %v3893
        %v3902 = vadd.f32 %v3665, %v3896
        %v3903 = vadd.f32 %v3666, %v3898
        %v3904 = vld [vmem:[%s1887] sm:$0x6]
        %v3905 = vld [vmem:[%s1887 + $0x4] sm:$0x6]
        %v3906 = vld [vmem:[%s1887 + $0x8] sm:$0x6]
        %v3907 = vld [vmem:[%s1887 + $0xc] sm:$0x6]
        %v3908 = vld [vmem:[%s1887 + $0x18] sm:$0x6]
        %v3909 = vld [vmem:[%s1887 + $0x1c] sm:$0x6]
        %v3910 = vld [vmem:[%s1887 + $0x20] sm:$0x6]
        %v3911 = vld [vmem:[%s1887 + $0x24] sm:$0x6]
        %v3920 = vrot.slane %v3904, 2
        %v3921 = vrot.slane %v3905, 2
        %v3922 = vrot.slane %v3906, 2
        %v3923 = vrot.slane %v3907, 2
        %v3924 = vrot.slane %v3908, 2
        %v3925 = vrot.slane %v3909, 2
        %v3926 = vrot.slane %v3910, 2
        %v3927 = vrot.slane %v3911, 2
        %v3930 = vsel %vm790, %v3904, %v3920
        %v3932 = vsel %vm794, %v3904, %v3920
        %v3934 = vrot.slane %v3932, 2
        %v3937 = vsel %vm790, %v3905, %v3921
        %v3939 = vsel %vm794, %v3905, %v3921
        %v3941 = vrot.slane %v3939, 2
        %v3944 = vsel %vm790, %v3906, %v3922
        %v3946 = vsel %vm794, %v3906, %v3922
        %v3948 = vrot.slane %v3946, 2
        %v3951 = vsel %vm790, %v3907, %v3923
        %v3953 = vsel %vm794, %v3907, %v3923
        %v3955 = vrot.slane %v3953, 2
        %v3958 = vsel %vm790, %v3908, %v3924
        %v3960 = vsel %vm794, %v3908, %v3924
        %v3962 = vrot.slane %v3960, 2
        %v3965 = vsel %vm790, %v3909, %v3925
        %v3967 = vsel %vm794, %v3909, %v3925
        %v3969 = vrot.slane %v3967, 2
        %v3972 = vsel %vm790, %v3910, %v3926
        %v3974 = vsel %vm794, %v3910, %v3926
        %v3976 = vrot.slane %v3974, 2
        %v3979 = vsel %vm790, %v3911, %v3927
        %v3981 = vsel %vm794, %v3911, %v3927
        %v3983 = vrot.slane %v3981, 2
        %v3984 = vrot.slane %v3930, 7
        %v3985 = vrot.slane %v3984, 2
        %v3986 = vrot.slane %v3934, 7
        %v3987 = vsel %vm1314, %v3985, %v3986
        %v3988 = vrot.slane %v3937, 7
        %v3989 = vrot.slane %v3988, 2
        %v3990 = vrot.slane %v3941, 7
        %v3991 = vsel %vm1314, %v3989, %v3990
        %v3992 = vrot.slane %v3944, 7
        %v3993 = vrot.slane %v3992, 2
        %v3994 = vrot.slane %v3948, 7
        %v3995 = vsel %vm1314, %v3993, %v3994
        %v3996 = vrot.slane %v3951, 7
        %v3997 = vrot.slane %v3996, 2
        %v3998 = vrot.slane %v3955, 7
        %v3999 = vsel %vm1314, %v3997, %v3998
        %v4000 = vrot.slane %v3958, 7
        %v4001 = vrot.slane %v4000, 2
        %v4002 = vrot.slane %v3962, 7
        %v4003 = vsel %vm1314, %v4001, %v4002
        %v4004 = vrot.slane %v3965, 7
        %v4005 = vrot.slane %v4004, 2
        %v4006 = vrot.slane %v3969, 7
        %v4007 = vsel %vm1314, %v4005, %v4006
        %v4008 = vrot.slane %v3972, 7
        %v4009 = vrot.slane %v4008, 2
        %v4010 = vrot.slane %v3976, 7
        %v4011 = vsel %vm1314, %v4009, %v4010
        %v4012 = vrot.slane %v3979, 7
        %v4013 = vrot.slane %v4012, 2
        %v4014 = vrot.slane %v3983, 7
        %v4015 = vsel %vm1314, %v4013, %v4014
        %s4016 = scalar_lea.vmem %s11, 64
        %v4017 = vld [vmem:[%s4016] sm:$0xf]
        %v4018 = vld [vmem:[%s4016 + $0x4] sm:$0xf]
        %4020 = vst [vmem:[#allocation1] ss:$4 sm:$0xff] %v3987
        %s4022 = scalar_lea.vmem [#allocation1], 1
        %4023 = vst [vmem:[%s4022] ss:$4 sm:$0xff] %v3991
        %s4025 = scalar_lea.vmem [#allocation1], 2
        %4026 = vst [vmem:[%s4025] ss:$4 sm:$0xff] %v3995
        %s4028 = scalar_lea.vmem [#allocation1], 3
        %4029 = vst [vmem:[%s4028] ss:$4 sm:$0xff] %v3999
        %s4031 = scalar_lea.vmem [#allocation1], 32
        %4032 = vst [vmem:[%s4031] ss:$4 sm:$0xff] %v4003
        %s4034 = scalar_lea.vmem [#allocation1], 33
        %4035 = vst [vmem:[%s4034] ss:$4 sm:$0xff] %v4007
        %s4037 = scalar_lea.vmem [#allocation1], 34
        %4038 = vst [vmem:[%s4037] ss:$4 sm:$0xff] %v4011
        %s4040 = scalar_lea.vmem [#allocation1], 35
        %4041 = vst [vmem:[%s4040] ss:$4 sm:$0xff] %v4015
        %v4042 = vld.sshfl [vmem:[#allocation1] sm:$0xff pattern:$0x73625140]
        %v4043 = vld.sshfl [vmem:[#allocation1 + $0x20] sm:$0xff pattern:$0x73625140]
        %v4046 = vunpack.c.l.b16 %v4017
        %v4047 = vunpack.c.l.b16 %v4018
        %v4048 = vpack.c.b16 %v4047, %v4046
        %v4050 = vsel %vm1150, %v4042, 0
        %v4052 = vsel %vm1150, %v4043, 0
        %4054 = vmatpush.bf16.msra.mxu0 0
        %4055 = vmatpush.bf16.msra.mxu0 0
        %4056 = vmatpush.bf16.msra.mxu0 0
        %4057 = vmatpush.bf16.msra.mxu0 0
        %4058 = vmatpush.bf16.msra.mxu0 0
        %4059 = vmatpush.bf16.msra.mxu0 0
        %4060 = vmatpush.bf16.msra.mxu0 0
        %4061 = vmatpush.bf16.msra.mxu0 %v4048
        %4062 = vmatmul.bf16.gmra.mxu0 %v4050
        %v4063 = vpop.f32.mrf.mxu0
        %v4064 = vadd.f32 0.0, %v4063
        %v4065 = vpop.f32.mrf.mxu0
        %v4066 = vadd.f32 0.0, %v4065
        %4067 = vmatmul.bf16.gmra.mxu0 %v4052
        %v4068 = vpop.f32.mrf.mxu0
        %v4069 = vadd.f32 0.0, %v4068
        %v4070 = vpop.f32.mrf.mxu0
        %v4071 = vadd.f32 0.0, %v4070
        %4072 = vdwg.mxu0
        %v4073 = vadd.f32 %v3900, %v4064
        %v4074 = vadd.f32 %v3901, %v4066
        %v4075 = vadd.f32 %v3902, %v4069
        %v4076 = vadd.f32 %v3903, %v4071
        %v4077 = vld [vmem:[%s12] sm:$0x1]
        %v4079 = vperm.slane %v4077, 0
        %v4081 = vadd.f32 %v4073, %v4079
        %v4082 = vadd.f32 %v4074, %v4079
        %v4083 = vadd.f32 %v4075, %v4079
        %v4084 = vadd.f32 %v4076, %v4079
        %v4085 = vmax.f32 %v4081, 0.0
        %v4086 = vmax.f32 %v4082, 0.0
        %v4087 = vmax.f32 %v4083, 0.0
        %v4088 = vmax.f32 %v4084, 0.0
        %v4089 = vpack.c.bf16 %v4086, %v4085
        %v4090 = vpack.c.bf16 %v4088, %v4087
        %v4091 = vld [vmem:[%s13] sm:$0xf]
        %v4092 = vld [vmem:[%s13 + $0x4] sm:$0xf]
        %v4093 = vld [vmem:[%s14] sm:$0x1]
        %v4095 = vperm.slane %v4093, 0
        %v4099 = vunpack.c.l.b16 %v4091
        %v4100 = vunpack.c.l.b16 %v4092
        %v4101 = vpack.c.b16 %v4100, %v4099
        %v4104 = vsel %vm1150, %v4089, 0
        %v4107 = vsel %vm1150, %v4090, 0
        %4109 = vmatpush.bf16.msra.mxu0 0
        %4110 = vmatpush.bf16.msra.mxu0 0
        %4111 = vmatpush.bf16.msra.mxu0 0
        %4112 = vmatpush.bf16.msra.mxu0 0
        %4113 = vmatpush.bf16.msra.mxu0 0
        %4114 = vmatpush.bf16.msra.mxu0 0
        %4115 = vmatpush.bf16.msra.mxu0 0
        %4116 = vmatpush.bf16.msra.mxu0 %v4101
        %4117 = vmatmul.bf16.gmra.mxu0 %v4104
        %v4118 = vpop.f32.mrf.mxu0
        %v4119 = vadd.f32 %v4095, %v4118
        %v4120 = vpop.f32.mrf.mxu0
        %v4121 = vadd.f32 %v4095, %v4120
        %4122 = vmatmul.bf16.gmra.mxu0 %v4107
        %v4123 = vpop.f32.mrf.mxu0
        %v4124 = vadd.f32 %v4095, %v4123
        %v4125 = vpop.f32.mrf.mxu0
        %v4126 = vadd.f32 %v4095, %v4125
        %4127 = vdwg.mxu0
        %v4128 = vadd.f32 %v4119, %v2430
        %v4129 = vadd.f32 %v4121, %v2431
        %v4130 = vadd.f32 %v4124, %v2432
        %v4131 = vadd.f32 %v4126, %v2433
        %v4132 = vmax.f32 %v4128, 0.0
        %v4133 = vmax.f32 %v4129, 0.0
        %v4134 = vmax.f32 %v4130, 0.0
        %v4135 = vmax.f32 %v4131, 0.0
        %v4136 = vpack.c.bf16 %v4132, %v4132
        %v4137 = vpack.c.bf16 %v4133, %v4133
        %v4138 = vpack.c.bf16 %v4134, %v4134
        %v4139 = vpack.c.bf16 %v4135, %v4135
        %v4140 = vunpack.c.l.bf16 %v4136
        %v4141 = vunpack.c.l.bf16 %v4137
        %v4142 = vunpack.c.l.bf16 %v4138
        %v4143 = vunpack.c.l.bf16 %v4139
        %v4144 = vld [vmem:[%s15] sm:$0xf]
        %v4145 = vld [vmem:[%s15 + $0x4] sm:$0xf]
        %v4146 = vld [vmem:[%s15 + $0x8] sm:$0xf]
        %v4147 = vld [vmem:[%s15 + $0xc] sm:$0xf]
        %v4148 = vld [vmem:[%s15 + $0x10] sm:$0xf]
        %v4149 = vld [vmem:[%s15 + $0x14] sm:$0xf]
        %v4150 = vld [vmem:[%s15 + $0x18] sm:$0xf]
        %v4151 = vld [vmem:[%s15 + $0x1c] sm:$0xf]
        %v4152 = vld [vmem:[%s16] sm:$0x1]
        %v4154 = vperm.slane %v4152, 0
        %v4160 = vunpack.c.l.b16 %v4136
        %v4161 = vunpack.c.l.b16 %v4137
        %v4162 = vunpack.c.l.b16 %v4138
        %v4163 = vunpack.c.l.b16 %v4139
        %v4164 = vpack.c.b16 %v4161, %v4160
        %v4165 = vpack.c.b16 %v4163, %v4162
        %v4174 = vunpack.c.l.b16 %v4144
        %v4175 = vunpack.c.l.b16 %v4145
        %v4176 = vunpack.c.l.b16 %v4146
        %v4177 = vunpack.c.l.b16 %v4147
        %v4178 = vunpack.c.l.b16 %v4148
        %v4179 = vunpack.c.l.b16 %v4149
        %v4180 = vunpack.c.l.b16 %v4150
        %v4181 = vunpack.c.l.b16 %v4151
        %v4182 = vpack.c.b16 %v4175, %v4174
        %v4183 = vpack.c.b16 %v4177, %v4176
        %v4184 = vpack.c.b16 %v4179, %v4178
        %v4185 = vpack.c.b16 %v4181, %v4180
        %v4191 = vsel %vm2480, %v4164, 0
        %v4194 = vsel %vm2480, %v4165, 0
        %4196 = vmatpush.bf16.msra.mxu0 0
        %4197 = vmatpush.bf16.msra.mxu0 0
        %4198 = vmatpush.bf16.msra.mxu0 0
        %4199 = vmatpush.bf16.msra.mxu0 0
        %4200 = vmatpush.bf16.msra.mxu0 %v4185
        %4201 = vmatpush.bf16.msra.mxu0 %v4184
        %4202 = vmatpush.bf16.msra.mxu0 %v4183
        %4203 = vmatpush.bf16.msra.mxu0 %v4182
        %4204 = vmatmul.bf16.gmra.mxu0 %v4191
        %v4205 = vpop.f32.mrf.mxu0
        %v4206 = vadd.f32 %v4154, %v4205
        %v4207 = vpop.f32.mrf.mxu0
        %v4208 = vadd.f32 %v4154, %v4207
        %4209 = vmatmul.bf16.gmra.mxu0 %v4194
        %v4210 = vpop.f32.mrf.mxu0
        %v4211 = vadd.f32 %v4154, %v4210
        %v4212 = vpop.f32.mrf.mxu0
        %v4213 = vadd.f32 %v4154, %v4212
        %4214 = vdwg.mxu0
        %v4215 = vmax.f32 %v4206, 0.0
        %v4216 = vmax.f32 %v4208, 0.0
        %v4217 = vmax.f32 %v4211, 0.0
        %v4218 = vmax.f32 %v4213, 0.0
        %v4219 = vpack.c.bf16 %v4215, %v4215
        %v4220 = vpack.c.bf16 %v4216, %v4216
        %v4221 = vpack.c.bf16 %v4217, %v4217
        %v4222 = vpack.c.bf16 %v4218, %v4218
        %v4227 = vrot.slane %v4219, 2
        %v4228 = vrot.slane %v4220, 2
        %v4229 = vrot.slane %v4221, 2
        %v4230 = vrot.slane %v4222, 2
        %v4233 = vsel %vm790, %v4219, %v4227
        %v4234 = vsel %vm794, %v4219, %v4227
        %v4236 = vrot.slane %v4234, 2
        %v4239 = vsel %vm790, %v4220, %v4228
        %v4240 = vsel %vm794, %v4220, %v4228
        %v4242 = vrot.slane %v4240, 2
        %v4245 = vsel %vm790, %v4221, %v4229
        %v4246 = vsel %vm794, %v4221, %v4229
        %v4248 = vrot.slane %v4246, 2
        %v4251 = vsel %vm790, %v4222, %v4230
        %v4252 = vsel %vm794, %v4222, %v4230
        %v4254 = vrot.slane %v4252, 2
        %4255 = vst [vmem:[#allocation1] ss:$2 sm:$0xff] %v4233
        %v4256 = vld.sshfl [vmem:[#allocation1] sm:$0xff pattern:$0x75643120]
        %s4258 = scalar_lea.vmem [#allocation1], 16
        %4259 = vst [vmem:[%s4258] ss:$2 sm:$0xff] %v4236
        %v4260 = vld.sshfl [vmem:[#allocation1 + $0x10] sm:$0xff pattern:$0x75643120]
        %s4261 = scalar_lea.vmem [#allocation1], 32
        %4262 = vst [vmem:[%s4261] ss:$2 sm:$0xff] %v4239
        %v4263 = vld.sshfl [vmem:[#allocation1 + $0x20] sm:$0xff pattern:$0x75643120]
        %s4265 = scalar_lea.vmem [#allocation1], 48
        %4266 = vst [vmem:[%s4265] ss:$2 sm:$0xff] %v4242
        %v4267 = vld.sshfl [vmem:[#allocation1 + $0x30] sm:$0xff pattern:$0x75643120]
        %4268 = vst [vmem:[#allocation1] ss:$2 sm:$0xff] %v4245
        %v4269 = vld.sshfl [vmem:[#allocation1] sm:$0xff pattern:$0x75643120]
        %4271 = vst [vmem:[%s4258] ss:$2 sm:$0xff] %v4248
        %v4272 = vld.sshfl [vmem:[#allocation1 + $0x10] sm:$0xff pattern:$0x75643120]
        %4273 = vst [vmem:[%s4261] ss:$2 sm:$0xff] %v4251
        %v4274 = vld.sshfl [vmem:[#allocation1 + $0x20] sm:$0xff pattern:$0x75643120]
        %4276 = vst [vmem:[%s4265] ss:$2 sm:$0xff] %v4254
        %v4277 = vld.sshfl [vmem:[#allocation1 + $0x30] sm:$0xff pattern:$0x75643120]
        %v4278 = vshrl.u32 %v4256, 16
        %v4280 = vrot.slane %v4278, 7
        %v4281 = vshll.u32 %v4256, 16
        %v4283 = vor.u32 %v4280, %v4281
        %v4284 = vshrl.u32 %v4260, 16
        %v4286 = vrot.slane %v4284, 7
        %v4287 = vshll.u32 %v4260, 16
        %v4289 = vor.u32 %v4286, %v4287
        %v4290 = vshrl.u32 %v4263, 16
        %v4292 = vrot.slane %v4290, 7
        %v4293 = vshll.u32 %v4263, 16
        %v4295 = vor.u32 %v4292, %v4293
        %v4296 = vshrl.u32 %v4267, 16
        %v4298 = vrot.slane %v4296, 7
        %v4299 = vshll.u32 %v4267, 16
        %v4301 = vor.u32 %v4298, %v4299
        %v4302 = vshrl.u32 %v4269, 16
        %v4304 = vrot.slane %v4302, 7
        %v4305 = vshll.u32 %v4269, 16
        %v4307 = vor.u32 %v4304, %v4305
        %v4308 = vshrl.u32 %v4272, 16
        %v4310 = vrot.slane %v4308, 7
        %v4311 = vshll.u32 %v4272, 16
        %v4313 = vor.u32 %v4310, %v4311
        %v4314 = vshrl.u32 %v4274, 16
        %v4316 = vrot.slane %v4314, 7
        %v4317 = vshll.u32 %v4274, 16
        %v4319 = vor.u32 %v4316, %v4317
        %v4320 = vshrl.u32 %v4277, 16
        %v4322 = vrot.slane %v4320, 7
        %v4323 = vshll.u32 %v4277, 16
        %v4325 = vor.u32 %v4322, %v4323
        %v4334 = vld [vmem:[%s895] sm:$0x7]
        %v4335 = vsel %vm898, %v4283, %v4334
        %4336 = vst [vmem:[%s895] sm:$0x7] %v4335
        %v4337 = vld [vmem:[%s895 + $0x4] sm:$0x7]
        %v4338 = vsel %vm898, %v4289, %v4337
        %4339 = vst [vmem:[%s895 + $0x4] sm:$0x7] %v4338
        %v4340 = vld [vmem:[%s895 + $0x8] sm:$0x7]
        %v4341 = vsel %vm898, %v4295, %v4340
        %4342 = vst [vmem:[%s895 + $0x8] sm:$0x7] %v4341
        %v4343 = vld [vmem:[%s895 + $0xc] sm:$0x7]
        %v4344 = vsel %vm898, %v4301, %v4343
        %4345 = vst [vmem:[%s895 + $0xc] sm:$0x7] %v4344
        %v4346 = vld [vmem:[%s895 + $0x18] sm:$0x7]
        %v4347 = vsel %vm898, %v4307, %v4346
        %4348 = vst [vmem:[%s895 + $0x18] sm:$0x7] %v4347
        %v4349 = vld [vmem:[%s895 + $0x1c] sm:$0x7]
        %v4350 = vsel %vm898, %v4313, %v4349
        %4351 = vst [vmem:[%s895 + $0x1c] sm:$0x7] %v4350
        %v4352 = vld [vmem:[%s895 + $0x20] sm:$0x7]
        %v4353 = vsel %vm898, %v4319, %v4352
        %4354 = vst [vmem:[%s895 + $0x20] sm:$0x7] %v4353
        %v4355 = vld [vmem:[%s895 + $0x24] sm:$0x7]
        %v4356 = vsel %vm898, %v4325, %v4355
        %4357 = vst [vmem:[%s895 + $0x24] sm:$0x7] %v4356
        %v4358 = vld [vmem:[#allocation2] sm:$0x3]
        %v4359 = vld [vmem:[#allocation2 + $0x4] sm:$0x3]
        %v4360 = vld [vmem:[#allocation2 + $0x8] sm:$0x3]
        %v4361 = vld [vmem:[#allocation2 + $0xc] sm:$0x3]
        %v4362 = vld [vmem:[#allocation2 + $0x18] sm:$0x3]
        %v4363 = vld [vmem:[#allocation2 + $0x1c] sm:$0x3]
        %v4364 = vld [vmem:[#allocation2 + $0x20] sm:$0x3]
        %v4365 = vld [vmem:[#allocation2 + $0x24] sm:$0x3]
        %v4366 = vld [vmem:[%s17] sm:$0xf]
        %v4367 = vld [vmem:[%s17 + $0x4] sm:$0xf]
        %v4368 = vld [vmem:[#allocation2] sm:$0x7]
        %v4369 = vld [vmem:[#allocation2 + $0x4] sm:$0x7]
        %v4370 = vld [vmem:[#allocation2 + $0x8] sm:$0x7]
        %v4371 = vld [vmem:[#allocation2 + $0xc] sm:$0x7]
        %v4372 = vld [vmem:[#allocation2 + $0x18] sm:$0x7]
        %v4373 = vld [vmem:[#allocation2 + $0x1c] sm:$0x7]
        %v4374 = vld [vmem:[#allocation2 + $0x20] sm:$0x7]
        %v4375 = vld [vmem:[#allocation2 + $0x24] sm:$0x7]
        %v4384 = vrot.slane %v4368, 2
        %v4385 = vrot.slane %v4369, 2
        %v4386 = vrot.slane %v4370, 2
        %v4387 = vrot.slane %v4371, 2
        %v4388 = vrot.slane %v4372, 2
        %v4389 = vrot.slane %v4373, 2
        %v4390 = vrot.slane %v4374, 2
        %v4391 = vrot.slane %v4375, 2
        %v4394 = vsel %vm790, %v4368, %v4384
        %v4395 = vsel %vm794, %v4368, %v4384
        %v4397 = vrot.slane %v4395, 2
        %v4400 = vsel %vm790, %v4369, %v4385
        %v4401 = vsel %vm794, %v4369, %v4385
        %v4403 = vrot.slane %v4401, 2
        %v4406 = vsel %vm790, %v4370, %v4386
        %v4407 = vsel %vm794, %v4370, %v4386
        %v4409 = vrot.slane %v4407, 2
        %v4412 = vsel %vm790, %v4371, %v4387
        %v4413 = vsel %vm794, %v4371, %v4387
        %v4415 = vrot.slane %v4413, 2
        %v4418 = vsel %vm790, %v4372, %v4388
        %v4419 = vsel %vm794, %v4372, %v4388
        %v4421 = vrot.slane %v4419, 2
        %v4424 = vsel %vm790, %v4373, %v4389
        %v4425 = vsel %vm794, %v4373, %v4389
        %v4427 = vrot.slane %v4425, 2
        %v4430 = vsel %vm790, %v4374, %v4390
        %v4431 = vsel %vm794, %v4374, %v4390
        %v4433 = vrot.slane %v4431, 2
        %v4436 = vsel %vm790, %v4375, %v4391
        %v4437 = vsel %vm794, %v4375, %v4391
        %v4439 = vrot.slane %v4437, 2
        %v4440 = vshrl.u32 %v4394, 16
        %v4442 = vrot.slane %v4440, 6
        %v4443 = vshll.u32 %v4394, 16
        %v4445 = vrot.slane %v4443, 7
        %v4446 = vor.u32 %v4442, %v4445
        %v4447 = vrot.slane %v4446, 2
        %v4449 = vshll.u32 %v4397, 16
        %v4451 = vrot.slane %v4449, 7
        %v4452 = vsel %vm1011, %v4447, %v4451
        %v4453 = vshrl.u32 %v4400, 16
        %v4455 = vrot.slane %v4453, 6
        %v4456 = vshll.u32 %v4400, 16
        %v4458 = vrot.slane %v4456, 7
        %v4459 = vor.u32 %v4455, %v4458
        %v4460 = vrot.slane %v4459, 2
        %v4462 = vshll.u32 %v4403, 16
        %v4464 = vrot.slane %v4462, 7
        %v4465 = vsel %vm1011, %v4460, %v4464
        %v4466 = vshrl.u32 %v4406, 16
        %v4468 = vrot.slane %v4466, 6
        %v4469 = vshll.u32 %v4406, 16
        %v4471 = vrot.slane %v4469, 7
        %v4472 = vor.u32 %v4468, %v4471
        %v4473 = vrot.slane %v4472, 2
        %v4475 = vshll.u32 %v4409, 16
        %v4477 = vrot.slane %v4475, 7
        %v4478 = vsel %vm1011, %v4473, %v4477
        %v4479 = vshrl.u32 %v4412, 16
        %v4481 = vrot.slane %v4479, 6
        %v4482 = vshll.u32 %v4412, 16
        %v4484 = vrot.slane %v4482, 7
        %v4485 = vor.u32 %v4481, %v4484
        %v4486 = vrot.slane %v4485, 2
        %v4488 = vshll.u32 %v4415, 16
        %v4490 = vrot.slane %v4488, 7
        %v4491 = vsel %vm1011, %v4486, %v4490
        %v4492 = vshrl.u32 %v4418, 16
        %v4494 = vrot.slane %v4492, 6
        %v4495 = vshll.u32 %v4418, 16
        %v4497 = vrot.slane %v4495, 7
        %v4498 = vor.u32 %v4494, %v4497
        %v4499 = vrot.slane %v4498, 2
        %v4501 = vshll.u32 %v4421, 16
        %v4503 = vrot.slane %v4501, 7
        %v4504 = vsel %vm1011, %v4499, %v4503
        %v4505 = vshrl.u32 %v4424, 16
        %v4507 = vrot.slane %v4505, 6
        %v4508 = vshll.u32 %v4424, 16
        %v4510 = vrot.slane %v4508, 7
        %v4511 = vor.u32 %v4507, %v4510
        %v4512 = vrot.slane %v4511, 2
        %v4514 = vshll.u32 %v4427, 16
        %v4516 = vrot.slane %v4514, 7
        %v4517 = vsel %vm1011, %v4512, %v4516
        %v4518 = vshrl.u32 %v4430, 16
        %v4520 = vrot.slane %v4518, 6
        %v4521 = vshll.u32 %v4430, 16
        %v4523 = vrot.slane %v4521, 7
        %v4524 = vor.u32 %v4520, %v4523
        %v4525 = vrot.slane %v4524, 2
        %v4527 = vshll.u32 %v4433, 16
        %v4529 = vrot.slane %v4527, 7
        %v4530 = vsel %vm1011, %v4525, %v4529
        %v4531 = vshrl.u32 %v4436, 16
        %v4533 = vrot.slane %v4531, 6
        %v4534 = vshll.u32 %v4436, 16
        %v4536 = vrot.slane %v4534, 7
        %v4537 = vor.u32 %v4533, %v4536
        %v4538 = vrot.slane %v4537, 2
        %v4540 = vshll.u32 %v4439, 16
        %v4542 = vrot.slane %v4540, 7
        %v4543 = vsel %vm1011, %v4538, %v4542
        %s4544 = scalar_lea.vmem %s17, 8
        %v4545 = vld [vmem:[%s4544] sm:$0xf]
        %v4546 = vld [vmem:[%s4544 + $0x4] sm:$0xf]
        %4548 = vst [vmem:[#allocation1] ss:$4 sm:$0xff] %v4452
        %s4550 = scalar_lea.vmem [#allocation1], 1
        %4551 = vst [vmem:[%s4550] ss:$4 sm:$0xff] %v4465
        %s4553 = scalar_lea.vmem [#allocation1], 2
        %4554 = vst [vmem:[%s4553] ss:$4 sm:$0xff] %v4478
        %s4556 = scalar_lea.vmem [#allocation1], 3
        %4557 = vst [vmem:[%s4556] ss:$4 sm:$0xff] %v4491
        %s4559 = scalar_lea.vmem [#allocation1], 32
        %4560 = vst [vmem:[%s4559] ss:$4 sm:$0xff] %v4504
        %s4562 = scalar_lea.vmem [#allocation1], 33
        %4563 = vst [vmem:[%s4562] ss:$4 sm:$0xff] %v4517
        %s4565 = scalar_lea.vmem [#allocation1], 34
        %4566 = vst [vmem:[%s4565] ss:$4 sm:$0xff] %v4530
        %s4568 = scalar_lea.vmem [#allocation1], 35
        %4569 = vst [vmem:[%s4568] ss:$4 sm:$0xff] %v4543
        %v4570 = vld.sshfl [vmem:[#allocation1] sm:$0xff pattern:$0x73625140]
        %v4571 = vld.sshfl [vmem:[#allocation1 + $0x20] sm:$0xff pattern:$0x73625140]
        %v4574 = vunpack.c.l.b16 %v4545
        %v4575 = vunpack.c.l.b16 %v4546
        %v4576 = vpack.c.b16 %v4575, %v4574
        %v4578 = vsel %vm1150, %v4570, 0
        %v4580 = vsel %vm1150, %v4571, 0
        %4582 = vmatpush.bf16.msra.mxu0 0
        %4583 = vmatpush.bf16.msra.mxu0 0
        %4584 = vmatpush.bf16.msra.mxu0 0
        %4585 = vmatpush.bf16.msra.mxu0 0
        %4586 = vmatpush.bf16.msra.mxu0 0
        %4587 = vmatpush.bf16.msra.mxu0 0
        %4588 = vmatpush.bf16.msra.mxu0 0
        %4589 = vmatpush.bf16.msra.mxu0 %v4576
        %4590 = vmatmul.bf16.gmra.mxu0 %v4578
        %v4591 = vpop.f32.mrf.mxu0
        %v4592 = vadd.f32 0.0, %v4591
        %v4593 = vpop.f32.mrf.mxu0
        %v4594 = vadd.f32 0.0, %v4593
        %4595 = vmatmul.bf16.gmra.mxu0 %v4580
        %v4596 = vpop.f32.mrf.mxu0
        %v4597 = vadd.f32 0.0, %v4596
        %v4598 = vpop.f32.mrf.mxu0
        %v4599 = vadd.f32 0.0, %v4598
        %4600 = vdwg.mxu0
        %4602 = vst [vmem:[#allocation1] ss:$4 sm:$0xff] %v4358
        %s4604 = scalar_lea.vmem [#allocation1], 1
        %4605 = vst [vmem:[%s4604] ss:$4 sm:$0xff] %v4359
        %s4607 = scalar_lea.vmem [#allocation1], 2
        %4608 = vst [vmem:[%s4607] ss:$4 sm:$0xff] %v4360
        %s4610 = scalar_lea.vmem [#allocation1], 3
        %4611 = vst [vmem:[%s4610] ss:$4 sm:$0xff] %v4361
        %s4613 = scalar_lea.vmem [#allocation1], 32
        %4614 = vst [vmem:[%s4613] ss:$4 sm:$0xff] %v4362
        %s4616 = scalar_lea.vmem [#allocation1], 33
        %4617 = vst [vmem:[%s4616] ss:$4 sm:$0xff] %v4363
        %s4619 = scalar_lea.vmem [#allocation1], 34
        %4620 = vst [vmem:[%s4619] ss:$4 sm:$0xff] %v4364
        %s4622 = scalar_lea.vmem [#allocation1], 35
        %4623 = vst [vmem:[%s4622] ss:$4 sm:$0xff] %v4365
        %v4624 = vld.sshfl [vmem:[#allocation1] sm:$0xff pattern:$0x73625140]
        %v4625 = vld.sshfl [vmem:[#allocation1 + $0x20] sm:$0xff pattern:$0x73625140]
        %v4628 = vunpack.c.l.b16 %v4366
        %v4629 = vunpack.c.l.b16 %v4367
        %v4630 = vpack.c.b16 %v4629, %v4628
        %v4632 = vsel %vm1150, %v4624, 0
        %v4634 = vsel %vm1150, %v4625, 0
        %4636 = vmatpush.bf16.msra.mxu0 0
        %4637 = vmatpush.bf16.msra.mxu0 0
        %4638 = vmatpush.bf16.msra.mxu0 0
        %4639 = vmatpush.bf16.msra.mxu0 0
        %4640 = vmatpush.bf16.msra.mxu0 0
        %4641 = vmatpush.bf16.msra.mxu0 0
        %4642 = vmatpush.bf16.msra.mxu0 0
        %4643 = vmatpush.bf16.msra.mxu0 %v4630
        %4644 = vmatmul.bf16.gmra.mxu0 %v4632
        %v4645 = vpop.f32.mrf.mxu0
        %v4646 = vadd.f32 %v4592, %v4645
        %v4647 = vpop.f32.mrf.mxu0
        %v4648 = vadd.f32 %v4594, %v4647
        %4649 = vmatmul.bf16.gmra.mxu0 %v4634
        %v4650 = vpop.f32.mrf.mxu0
        %v4651 = vadd.f32 %v4597, %v4650
        %v4652 = vpop.f32.mrf.mxu0
        %v4653 = vadd.f32 %v4599, %v4652
        %4654 = vdwg.mxu0
        %v4655 = vld [vmem:[#allocation2] sm:$0x6]
        %v4656 = vld [vmem:[#allocation2 + $0x4] sm:$0x6]
        %v4657 = vld [vmem:[#allocation2 + $0x8] sm:$0x6]
        %v4658 = vld [vmem:[#allocation2 + $0xc] sm:$0x6]
        %v4659 = vld [vmem:[#allocation2 + $0x18] sm:$0x6]
        %v4660 = vld [vmem:[#allocation2 + $0x1c] sm:$0x6]
        %v4661 = vld [vmem:[#allocation2 + $0x20] sm:$0x6]
        %v4662 = vld [vmem:[#allocation2 + $0x24] sm:$0x6]
        %v4671 = vrot.slane %v4655, 2
        %v4672 = vrot.slane %v4656, 2
        %v4673 = vrot.slane %v4657, 2
        %v4674 = vrot.slane %v4658, 2
        %v4675 = vrot.slane %v4659, 2
        %v4676 = vrot.slane %v4660, 2
        %v4677 = vrot.slane %v4661, 2
        %v4678 = vrot.slane %v4662, 2
        %v4681 = vsel %vm790, %v4655, %v4671
        %v4683 = vsel %vm794, %v4655, %v4671
        %v4685 = vrot.slane %v4683, 2
        %v4688 = vsel %vm790, %v4656, %v4672
        %v4690 = vsel %vm794, %v4656, %v4672
        %v4692 = vrot.slane %v4690, 2
        %v4695 = vsel %vm790, %v4657, %v4673
        %v4697 = vsel %vm794, %v4657, %v4673
        %v4699 = vrot.slane %v4697, 2
        %v4702 = vsel %vm790, %v4658, %v4674
        %v4704 = vsel %vm794, %v4658, %v4674
        %v4706 = vrot.slane %v4704, 2
        %v4709 = vsel %vm790, %v4659, %v4675
        %v4711 = vsel %vm794, %v4659, %v4675
        %v4713 = vrot.slane %v4711, 2
        %v4716 = vsel %vm790, %v4660, %v4676
        %v4718 = vsel %vm794, %v4660, %v4676
        %v4720 = vrot.slane %v4718, 2
        %v4723 = vsel %vm790, %v4661, %v4677
        %v4725 = vsel %vm794, %v4661, %v4677
        %v4727 = vrot.slane %v4725, 2
        %v4730 = vsel %vm790, %v4662, %v4678
        %v4732 = vsel %vm794, %v4662, %v4678
        %v4734 = vrot.slane %v4732, 2
        %v4735 = vrot.slane %v4681, 7
        %v4736 = vrot.slane %v4735, 2
        %v4737 = vrot.slane %v4685, 7
        %v4738 = vsel %vm1314, %v4736, %v4737
        %v4739 = vrot.slane %v4688, 7
        %v4740 = vrot.slane %v4739, 2
        %v4741 = vrot.slane %v4692, 7
        %v4742 = vsel %vm1314, %v4740, %v4741
        %v4743 = vrot.slane %v4695, 7
        %v4744 = vrot.slane %v4743, 2
        %v4745 = vrot.slane %v4699, 7
        %v4746 = vsel %vm1314, %v4744, %v4745
        %v4747 = vrot.slane %v4702, 7
        %v4748 = vrot.slane %v4747, 2
        %v4749 = vrot.slane %v4706, 7
        %v4750 = vsel %vm1314, %v4748, %v4749
        %v4751 = vrot.slane %v4709, 7
        %v4752 = vrot.slane %v4751, 2
        %v4753 = vrot.slane %v4713, 7
        %v4754 = vsel %vm1314, %v4752, %v4753
        %v4755 = vrot.slane %v4716, 7
        %v4756 = vrot.slane %v4755, 2
        %v4757 = vrot.slane %v4720, 7
        %v4758 = vsel %vm1314, %v4756, %v4757
        %v4759 = vrot.slane %v4723, 7
        %v4760 = vrot.slane %v4759, 2
        %v4761 = vrot.slane %v4727, 7
        %v4762 = vsel %vm1314, %v4760, %v4761
        %v4763 = vrot.slane %v4730, 7
        %v4764 = vrot.slane %v4763, 2
        %v4765 = vrot.slane %v4734, 7
        %v4766 = vsel %vm1314, %v4764, %v4765
        %s4767 = scalar_lea.vmem %s17, 16
        %v4768 = vld [vmem:[%s4767] sm:$0xf]
        %v4769 = vld [vmem:[%s4767 + $0x4] sm:$0xf]
        %4771 = vst [vmem:[#allocation1] ss:$4 sm:$0xff] %v4738
        %s4773 = scalar_lea.vmem [#allocation1], 1
        %4774 = vst [vmem:[%s4773] ss:$4 sm:$0xff] %v4742
        %s4776 = scalar_lea.vmem [#allocation1], 2
        %4777 = vst [vmem:[%s4776] ss:$4 sm:$0xff] %v4746
        %s4779 = scalar_lea.vmem [#allocation1], 3
        %4780 = vst [vmem:[%s4779] ss:$4 sm:$0xff] %v4750
        %s4782 = scalar_lea.vmem [#allocation1], 32
        %4783 = vst [vmem:[%s4782] ss:$4 sm:$0xff] %v4754
        %s4785 = scalar_lea.vmem [#allocation1], 33
        %4786 = vst [vmem:[%s4785] ss:$4 sm:$0xff] %v4758
        %s4788 = scalar_lea.vmem [#allocation1], 34
        %4789 = vst [vmem:[%s4788] ss:$4 sm:$0xff] %v4762
        %s4791 = scalar_lea.vmem [#allocation1], 35
        %4792 = vst [vmem:[%s4791] ss:$4 sm:$0xff] %v4766
        %v4793 = vld.sshfl [vmem:[#allocation1] sm:$0xff pattern:$0x73625140]
        %v4794 = vld.sshfl [vmem:[#allocation1 + $0x20] sm:$0xff pattern:$0x73625140]
        %v4797 = vunpack.c.l.b16 %v4768
        %v4798 = vunpack.c.l.b16 %v4769
        %v4799 = vpack.c.b16 %v4798, %v4797
        %v4801 = vsel %vm1150, %v4793, 0
        %v4803 = vsel %vm1150, %v4794, 0
        %4805 = vmatpush.bf16.msra.mxu0 0
        %4806 = vmatpush.bf16.msra.mxu0 0
        %4807 = vmatpush.bf16.msra.mxu0 0
        %4808 = vmatpush.bf16.msra.mxu0 0
        %4809 = vmatpush.bf16.msra.mxu0 0
        %4810 = vmatpush.bf16.msra.mxu0 0
        %4811 = vmatpush.bf16.msra.mxu0 0
        %4812 = vmatpush.bf16.msra.mxu0 %v4799
        %4813 = vmatmul.bf16.gmra.mxu0 %v4801
        %v4814 = vpop.f32.mrf.mxu0
        %v4815 = vadd.f32 0.0, %v4814
        %v4816 = vpop.f32.mrf.mxu0
        %v4817 = vadd.f32 0.0, %v4816
        %4818 = vmatmul.bf16.gmra.mxu0 %v4803
        %v4819 = vpop.f32.mrf.mxu0
        %v4820 = vadd.f32 0.0, %v4819
        %v4821 = vpop.f32.mrf.mxu0
        %v4822 = vadd.f32 0.0, %v4821
        %4823 = vdwg.mxu0
        %v4824 = vadd.f32 %v4646, %v4815
        %v4825 = vadd.f32 %v4648, %v4817
        %v4826 = vadd.f32 %v4651, %v4820
        %v4827 = vadd.f32 %v4653, %v4822
        %v4828 = vld [vmem:[%s895] sm:$0x3]
        %v4829 = vld [vmem:[%s895 + $0x4] sm:$0x3]
        %v4830 = vld [vmem:[%s895 + $0x8] sm:$0x3]
        %v4831 = vld [vmem:[%s895 + $0xc] sm:$0x3]
        %v4832 = vld [vmem:[%s895 + $0x18] sm:$0x3]
        %v4833 = vld [vmem:[%s895 + $0x1c] sm:$0x3]
        %v4834 = vld [vmem:[%s895 + $0x20] sm:$0x3]
        %v4835 = vld [vmem:[%s895 + $0x24] sm:$0x3]
        %s4836 = scalar_lea.vmem %s17, 24
        %v4837 = vld [vmem:[%s4836] sm:$0xf]
        %v4838 = vld [vmem:[%s4836 + $0x4] sm:$0xf]
        %4840 = vst [vmem:[#allocation1] ss:$4 sm:$0xff] %v4828
        %s4842 = scalar_lea.vmem [#allocation1], 1
        %4843 = vst [vmem:[%s4842] ss:$4 sm:$0xff] %v4829
        %s4845 = scalar_lea.vmem [#allocation1], 2
        %4846 = vst [vmem:[%s4845] ss:$4 sm:$0xff] %v4830
        %s4848 = scalar_lea.vmem [#allocation1], 3
        %4849 = vst [vmem:[%s4848] ss:$4 sm:$0xff] %v4831
        %s4851 = scalar_lea.vmem [#allocation1], 32
        %4852 = vst [vmem:[%s4851] ss:$4 sm:$0xff] %v4832
        %s4854 = scalar_lea.vmem [#allocation1], 33
        %4855 = vst [vmem:[%s4854] ss:$4 sm:$0xff] %v4833
        %s4857 = scalar_lea.vmem [#allocation1], 34
        %4858 = vst [vmem:[%s4857] ss:$4 sm:$0xff] %v4834
        %s4860 = scalar_lea.vmem [#allocation1], 35
        %4861 = vst [vmem:[%s4860] ss:$4 sm:$0xff] %v4835
        %v4862 = vld.sshfl [vmem:[#allocation1] sm:$0xff pattern:$0x73625140]
        %v4863 = vld.sshfl [vmem:[#allocation1 + $0x20] sm:$0xff pattern:$0x73625140]
        %v4866 = vunpack.c.l.b16 %v4837
        %v4867 = vunpack.c.l.b16 %v4838
        %v4868 = vpack.c.b16 %v4867, %v4866
        %v4870 = vsel %vm1150, %v4862, 0
        %v4872 = vsel %vm1150, %v4863, 0
        %4874 = vmatpush.bf16.msra.mxu0 0
        %4875 = vmatpush.bf16.msra.mxu0 0
        %4876 = vmatpush.bf16.msra.mxu0 0
        %4877 = vmatpush.bf16.msra.mxu0 0
        %4878 = vmatpush.bf16.msra.mxu0 0
        %4879 = vmatpush.bf16.msra.mxu0 0
        %4880 = vmatpush.bf16.msra.mxu0 0
        %4881 = vmatpush.bf16.msra.mxu0 %v4868
        %4882 = vmatmul.bf16.gmra.mxu0 %v4870
        %v4883 = vpop.f32.mrf.mxu0
        %v4884 = vadd.f32 0.0, %v4883
        %v4885 = vpop.f32.mrf.mxu0
        %v4886 = vadd.f32 0.0, %v4885
        %4887 = vmatmul.bf16.gmra.mxu0 %v4872
        %v4888 = vpop.f32.mrf.mxu0
        %v4889 = vadd.f32 0.0, %v4888
        %v4890 = vpop.f32.mrf.mxu0
        %v4891 = vadd.f32 0.0, %v4890
        %4892 = vdwg.mxu0
        %v4893 = vadd.f32 %v4824, %v4884
        %v4894 = vadd.f32 %v4825, %v4886
        %v4895 = vadd.f32 %v4826, %v4889
        %v4896 = vadd.f32 %v4827, %v4891
        %v4897 = vld [vmem:[%s895] sm:$0x7]
        %v4898 = vld [vmem:[%s895 + $0x4] sm:$0x7]
        %v4899 = vld [vmem:[%s895 + $0x8] sm:$0x7]
        %v4900 = vld [vmem:[%s895 + $0xc] sm:$0x7]
        %v4901 = vld [vmem:[%s895 + $0x18] sm:$0x7]
        %v4902 = vld [vmem:[%s895 + $0x1c] sm:$0x7]
        %v4903 = vld [vmem:[%s895 + $0x20] sm:$0x7]
        %v4904 = vld [vmem:[%s895 + $0x24] sm:$0x7]
        %v4913 = vrot.slane %v4897, 2
        %v4914 = vrot.slane %v4898, 2
        %v4915 = vrot.slane %v4899, 2
        %v4916 = vrot.slane %v4900, 2
        %v4917 = vrot.slane %v4901, 2
        %v4918 = vrot.slane %v4902, 2
        %v4919 = vrot.slane %v4903, 2
        %v4920 = vrot.slane %v4904, 2
        %v4923 = vsel %vm790, %v4897, %v4913
        %v4924 = vsel %vm794, %v4897, %v4913
        %v4926 = vrot.slane %v4924, 2
        %v4929 = vsel %vm790, %v4898, %v4914
        %v4930 = vsel %vm794, %v4898, %v4914
        %v4932 = vrot.slane %v4930, 2
        %v4935 = vsel %vm790, %v4899, %v4915
        %v4936 = vsel %vm794, %v4899, %v4915
        %v4938 = vrot.slane %v4936, 2
        %v4941 = vsel %vm790, %v4900, %v4916
        %v4942 = vsel %vm794, %v4900, %v4916
        %v4944 = vrot.slane %v4942, 2
        %v4947 = vsel %vm790, %v4901, %v4917
        %v4948 = vsel %vm794, %v4901, %v4917
        %v4950 = vrot.slane %v4948, 2
        %v4953 = vsel %vm790, %v4902, %v4918
        %v4954 = vsel %vm794, %v4902, %v4918
        %v4956 = vrot.slane %v4954, 2
        %v4959 = vsel %vm790, %v4903, %v4919
        %v4960 = vsel %vm794, %v4903, %v4919
        %v4962 = vrot.slane %v4960, 2
        %v4965 = vsel %vm790, %v4904, %v4920
        %v4966 = vsel %vm794, %v4904, %v4920
        %v4968 = vrot.slane %v4966, 2
        %v4969 = vshrl.u32 %v4923, 16
        %v4971 = vrot.slane %v4969, 6
        %v4972 = vshll.u32 %v4923, 16
        %v4974 = vrot.slane %v4972, 7
        %v4975 = vor.u32 %v4971, %v4974
        %v4976 = vrot.slane %v4975, 2
        %v4978 = vshll.u32 %v4926, 16
        %v4980 = vrot.slane %v4978, 7
        %v4981 = vsel %vm1011, %v4976, %v4980
        %v4982 = vshrl.u32 %v4929, 16
        %v4984 = vrot.slane %v4982, 6
        %v4985 = vshll.u32 %v4929, 16
        %v4987 = vrot.slane %v4985, 7
        %v4988 = vor.u32 %v4984, %v4987
        %v4989 = vrot.slane %v4988, 2
        %v4991 = vshll.u32 %v4932, 16
        %v4993 = vrot.slane %v4991, 7
        %v4994 = vsel %vm1011, %v4989, %v4993
        %v4995 = vshrl.u32 %v4935, 16
        %v4997 = vrot.slane %v4995, 6
        %v4998 = vshll.u32 %v4935, 16
        %v5000 = vrot.slane %v4998, 7
        %v5001 = vor.u32 %v4997, %v5000
        %v5002 = vrot.slane %v5001, 2
        %v5004 = vshll.u32 %v4938, 16
        %v5006 = vrot.slane %v5004, 7
        %v5007 = vsel %vm1011, %v5002, %v5006
        %v5008 = vshrl.u32 %v4941, 16
        %v5010 = vrot.slane %v5008, 6
        %v5011 = vshll.u32 %v4941, 16
        %v5013 = vrot.slane %v5011, 7
        %v5014 = vor.u32 %v5010, %v5013
        %v5015 = vrot.slane %v5014, 2
        %v5017 = vshll.u32 %v4944, 16
        %v5019 = vrot.slane %v5017, 7
        %v5020 = vsel %vm1011, %v5015, %v5019
        %v5021 = vshrl.u32 %v4947, 16
        %v5023 = vrot.slane %v5021, 6
        %v5024 = vshll.u32 %v4947, 16
        %v5026 = vrot.slane %v5024, 7
        %v5027 = vor.u32 %v5023, %v5026
        %v5028 = vrot.slane %v5027, 2
        %v5030 = vshll.u32 %v4950, 16
        %v5032 = vrot.slane %v5030, 7
        %v5033 = vsel %vm1011, %v5028, %v5032
        %v5034 = vshrl.u32 %v4953, 16
        %v5036 = vrot.slane %v5034, 6
        %v5037 = vshll.u32 %v4953, 16
        %v5039 = vrot.slane %v5037, 7
        %v5040 = vor.u32 %v5036, %v5039
        %v5041 = vrot.slane %v5040, 2
        %v5043 = vshll.u32 %v4956, 16
        %v5045 = vrot.slane %v5043, 7
        %v5046 = vsel %vm1011, %v5041, %v5045
        %v5047 = vshrl.u32 %v4959, 16
        %v5049 = vrot.slane %v5047, 6
        %v5050 = vshll.u32 %v4959, 16
        %v5052 = vrot.slane %v5050, 7
        %v5053 = vor.u32 %v5049, %v5052
        %v5054 = vrot.slane %v5053, 2
        %v5056 = vshll.u32 %v4962, 16
        %v5058 = vrot.slane %v5056, 7
        %v5059 = vsel %vm1011, %v5054, %v5058
        %v5060 = vshrl.u32 %v4965, 16
        %v5062 = vrot.slane %v5060, 6
        %v5063 = vshll.u32 %v4965, 16
        %v5065 = vrot.slane %v5063, 7
        %v5066 = vor.u32 %v5062, %v5065
        %v5067 = vrot.slane %v5066, 2
        %v5069 = vshll.u32 %v4968, 16
        %v5071 = vrot.slane %v5069, 7
        %v5072 = vsel %vm1011, %v5067, %v5071
        %s5073 = scalar_lea.vmem %s17, 32
        %v5074 = vld [vmem:[%s5073] sm:$0xf]
        %v5075 = vld [vmem:[%s5073 + $0x4] sm:$0xf]
        %5077 = vst [vmem:[#allocation1] ss:$4 sm:$0xff] %v4981
        %s5079 = scalar_lea.vmem [#allocation1], 1
        %5080 = vst [vmem:[%s5079] ss:$4 sm:$0xff] %v4994
        %s5082 = scalar_lea.vmem [#allocation1], 2
        %5083 = vst [vmem:[%s5082] ss:$4 sm:$0xff] %v5007
        %s5085 = scalar_lea.vmem [#allocation1], 3
        %5086 = vst [vmem:[%s5085] ss:$4 sm:$0xff] %v5020
        %s5088 = scalar_lea.vmem [#allocation1], 32
        %5089 = vst [vmem:[%s5088] ss:$4 sm:$0xff] %v5033
        %s5091 = scalar_lea.vmem [#allocation1], 33
        %5092 = vst [vmem:[%s5091] ss:$4 sm:$0xff] %v5046
        %s5094 = scalar_lea.vmem [#allocation1], 34
        %5095 = vst [vmem:[%s5094] ss:$4 sm:$0xff] %v5059
        %s5097 = scalar_lea.vmem [#allocation1], 35
        %5098 = vst [vmem:[%s5097] ss:$4 sm:$0xff] %v5072
        %v5099 = vld.sshfl [vmem:[#allocation1] sm:$0xff pattern:$0x73625140]
        %v5100 = vld.sshfl [vmem:[#allocation1 + $0x20] sm:$0xff pattern:$0x73625140]
        %v5103 = vunpack.c.l.b16 %v5074
        %v5104 = vunpack.c.l.b16 %v5075
        %v5105 = vpack.c.b16 %v5104, %v5103
        %v5107 = vsel %vm1150, %v5099, 0
        %v5109 = vsel %vm1150, %v5100, 0
        %5111 = vmatpush.bf16.msra.mxu0 0
        %5112 = vmatpush.bf16.msra.mxu0 0
        %5113 = vmatpush.bf16.msra.mxu0 0
        %5114 = vmatpush.bf16.msra.mxu0 0
        %5115 = vmatpush.bf16.msra.mxu0 0
        %5116 = vmatpush.bf16.msra.mxu0 0
        %5117 = vmatpush.bf16.msra.mxu0 0
        %5118 = vmatpush.bf16.msra.mxu0 %v5105
        %5119 = vmatmul.bf16.gmra.mxu0 %v5107
        %v5120 = vpop.f32.mrf.mxu0
        %v5121 = vadd.f32 0.0, %v5120
        %v5122 = vpop.f32.mrf.mxu0
        %v5123 = vadd.f32 0.0, %v5122
        %5124 = vmatmul.bf16.gmra.mxu0 %v5109
        %v5125 = vpop.f32.mrf.mxu0
        %v5126 = vadd.f32 0.0, %v5125
        %v5127 = vpop.f32.mrf.mxu0
        %v5128 = vadd.f32 0.0, %v5127
        %5129 = vdwg.mxu0
        %v5130 = vadd.f32 %v4893, %v5121
        %v5131 = vadd.f32 %v4894, %v5123
        %v5132 = vadd.f32 %v4895, %v5126
        %v5133 = vadd.f32 %v4896, %v5128
        %v5134 = vld [vmem:[%s895] sm:$0x6]
        %v5135 = vld [vmem:[%s895 + $0x4] sm:$0x6]
        %v5136 = vld [vmem:[%s895 + $0x8] sm:$0x6]
        %v5137 = vld [vmem:[%s895 + $0xc] sm:$0x6]
        %v5138 = vld [vmem:[%s895 + $0x18] sm:$0x6]
        %v5139 = vld [vmem:[%s895 + $0x1c] sm:$0x6]
        %v5140 = vld [vmem:[%s895 + $0x20] sm:$0x6]
        %v5141 = vld [vmem:[%s895 + $0x24] sm:$0x6]
        %v5150 = vrot.slane %v5134, 2
        %v5151 = vrot.slane %v5135, 2
        %v5152 = vrot.slane %v5136, 2
        %v5153 = vrot.slane %v5137, 2
        %v5154 = vrot.slane %v5138, 2
        %v5155 = vrot.slane %v5139, 2
        %v5156 = vrot.slane %v5140, 2
        %v5157 = vrot.slane %v5141, 2
        %v5160 = vsel %vm790, %v5134, %v5150
        %v5162 = vsel %vm794, %v5134, %v5150
        %v5164 = vrot.slane %v5162, 2
        %v5167 = vsel %vm790, %v5135, %v5151
        %v5169 = vsel %vm794, %v5135, %v5151
        %v5171 = vrot.slane %v5169, 2
        %v5174 = vsel %vm790, %v5136, %v5152
        %v5176 = vsel %vm794, %v5136, %v5152
        %v5178 = vrot.slane %v5176, 2
        %v5181 = vsel %vm790, %v5137, %v5153
        %v5183 = vsel %vm794, %v5137, %v5153
        %v5185 = vrot.slane %v5183, 2
        %v5188 = vsel %vm790, %v5138, %v5154
        %v5190 = vsel %vm794, %v5138, %v5154
        %v5192 = vrot.slane %v5190, 2
        %v5195 = vsel %vm790, %v5139, %v5155
        %v5197 = vsel %vm794, %v5139, %v5155
        %v5199 = vrot.slane %v5197, 2
        %v5202 = vsel %vm790, %v5140, %v5156
        %v5204 = vsel %vm794, %v5140, %v5156
        %v5206 = vrot.slane %v5204, 2
        %v5209 = vsel %vm790, %v5141, %v5157
        %v5211 = vsel %vm794, %v5141, %v5157
        %v5213 = vrot.slane %v5211, 2
        %v5214 = vrot.slane %v5160, 7
        %v5215 = vrot.slane %v5214, 2
        %v5216 = vrot.slane %v5164, 7
        %v5217 = vsel %vm1314, %v5215, %v5216
        %v5218 = vrot.slane %v5167, 7
        %v5219 = vrot.slane %v5218, 2
        %v5220 = vrot.slane %v5171, 7
        %v5221 = vsel %vm1314, %v5219, %v5220
        %v5222 = vrot.slane %v5174, 7
        %v5223 = vrot.slane %v5222, 2
        %v5224 = vrot.slane %v5178, 7
        %v5225 = vsel %vm1314, %v5223, %v5224
        %v5226 = vrot.slane %v5181, 7
        %v5227 = vrot.slane %v5226, 2
        %v5228 = vrot.slane %v5185, 7
        %v5229 = vsel %vm1314, %v5227, %v5228
        %v5230 = vrot.slane %v5188, 7
        %v5231 = vrot.slane %v5230, 2
        %v5232 = vrot.slane %v5192, 7
        %v5233 = vsel %vm1314, %v5231, %v5232
        %v5234 = vrot.slane %v5195, 7
        %v5235 = vrot.slane %v5234, 2
        %v5236 = vrot.slane %v5199, 7
        %v5237 = vsel %vm1314, %v5235, %v5236
        %v5238 = vrot.slane %v5202, 7
        %v5239 = vrot.slane %v5238, 2
        %v5240 = vrot.slane %v5206, 7
        %v5241 = vsel %vm1314, %v5239, %v5240
        %v5242 = vrot.slane %v5209, 7
        %v5243 = vrot.slane %v5242, 2
        %v5244 = vrot.slane %v5213, 7
        %v5245 = vsel %vm1314, %v5243, %v5244
        %s5246 = scalar_lea.vmem %s17, 40
        %v5247 = vld [vmem:[%s5246] sm:$0xf]
        %v5248 = vld [vmem:[%s5246 + $0x4] sm:$0xf]
        %5250 = vst [vmem:[#allocation1] ss:$4 sm:$0xff] %v5217
        %s5252 = scalar_lea.vmem [#allocation1], 1
        %5253 = vst [vmem:[%s5252] ss:$4 sm:$0xff] %v5221
        %s5255 = scalar_lea.vmem [#allocation1], 2
        %5256 = vst [vmem:[%s5255] ss:$4 sm:$0xff] %v5225
        %s5258 = scalar_lea.vmem [#allocation1], 3
        %5259 = vst [vmem:[%s5258] ss:$4 sm:$0xff] %v5229
        %s5261 = scalar_lea.vmem [#allocation1], 32
        %5262 = vst [vmem:[%s5261] ss:$4 sm:$0xff] %v5233
        %s5264 = scalar_lea.vmem [#allocation1], 33
        %5265 = vst [vmem:[%s5264] ss:$4 sm:$0xff] %v5237
        %s5267 = scalar_lea.vmem [#allocation1], 34
        %5268 = vst [vmem:[%s5267] ss:$4 sm:$0xff] %v5241
        %s5270 = scalar_lea.vmem [#allocation1], 35
        %5271 = vst [vmem:[%s5270] ss:$4 sm:$0xff] %v5245
        %v5272 = vld.sshfl [vmem:[#allocation1] sm:$0xff pattern:$0x73625140]
        %v5273 = vld.sshfl [vmem:[#allocation1 + $0x20] sm:$0xff pattern:$0x73625140]
        %v5276 = vunpack.c.l.b16 %v5247
        %v5277 = vunpack.c.l.b16 %v5248
        %v5278 = vpack.c.b16 %v5277, %v5276
        %v5280 = vsel %vm1150, %v5272, 0
        %v5282 = vsel %vm1150, %v5273, 0
        %5284 = vmatpush.bf16.msra.mxu0 0
        %5285 = vmatpush.bf16.msra.mxu0 0
        %5286 = vmatpush.bf16.msra.mxu0 0
        %5287 = vmatpush.bf16.msra.mxu0 0
        %5288 = vmatpush.bf16.msra.mxu0 0
        %5289 = vmatpush.bf16.msra.mxu0 0
        %5290 = vmatpush.bf16.msra.mxu0 0
        %5291 = vmatpush.bf16.msra.mxu0 %v5278
        %5292 = vmatmul.bf16.gmra.mxu0 %v5280
        %v5293 = vpop.f32.mrf.mxu0
        %v5294 = vadd.f32 0.0, %v5293
        %v5295 = vpop.f32.mrf.mxu0
        %v5296 = vadd.f32 0.0, %v5295
        %5297 = vmatmul.bf16.gmra.mxu0 %v5282
        %v5298 = vpop.f32.mrf.mxu0
        %v5299 = vadd.f32 0.0, %v5298
        %v5300 = vpop.f32.mrf.mxu0
        %v5301 = vadd.f32 0.0, %v5300
        %5302 = vdwg.mxu0
        %v5303 = vadd.f32 %v5130, %v5294
        %v5304 = vadd.f32 %v5131, %v5296
        %v5305 = vadd.f32 %v5132, %v5299
        %v5306 = vadd.f32 %v5133, %v5301
        %v5307 = vld [vmem:[%s1887] sm:$0x3]
        %v5308 = vld [vmem:[%s1887 + $0x4] sm:$0x3]
        %v5309 = vld [vmem:[%s1887 + $0x8] sm:$0x3]
        %v5310 = vld [vmem:[%s1887 + $0xc] sm:$0x3]
        %v5311 = vld [vmem:[%s1887 + $0x18] sm:$0x3]
        %v5312 = vld [vmem:[%s1887 + $0x1c] sm:$0x3]
        %v5313 = vld [vmem:[%s1887 + $0x20] sm:$0x3]
        %v5314 = vld [vmem:[%s1887 + $0x24] sm:$0x3]
        %s5315 = scalar_lea.vmem %s17, 48
        %v5316 = vld [vmem:[%s5315] sm:$0xf]
        %v5317 = vld [vmem:[%s5315 + $0x4] sm:$0xf]
        %5319 = vst [vmem:[#allocation1] ss:$4 sm:$0xff] %v5307
        %s5321 = scalar_lea.vmem [#allocation1], 1
        %5322 = vst [vmem:[%s5321] ss:$4 sm:$0xff] %v5308
        %s5324 = scalar_lea.vmem [#allocation1], 2
        %5325 = vst [vmem:[%s5324] ss:$4 sm:$0xff] %v5309
        %s5327 = scalar_lea.vmem [#allocation1], 3
        %5328 = vst [vmem:[%s5327] ss:$4 sm:$0xff] %v5310
        %s5330 = scalar_lea.vmem [#allocation1], 32
        %5331 = vst [vmem:[%s5330] ss:$4 sm:$0xff] %v5311
        %s5333 = scalar_lea.vmem [#allocation1], 33
        %5334 = vst [vmem:[%s5333] ss:$4 sm:$0xff] %v5312
        %s5336 = scalar_lea.vmem [#allocation1], 34
        %5337 = vst [vmem:[%s5336] ss:$4 sm:$0xff] %v5313
        %s5339 = scalar_lea.vmem [#allocation1], 35
        %5340 = vst [vmem:[%s5339] ss:$4 sm:$0xff] %v5314
        %v5341 = vld.sshfl [vmem:[#allocation1] sm:$0xff pattern:$0x73625140]
        %v5342 = vld.sshfl [vmem:[#allocation1 + $0x20] sm:$0xff pattern:$0x73625140]
        %v5345 = vunpack.c.l.b16 %v5316
        %v5346 = vunpack.c.l.b16 %v5317
        %v5347 = vpack.c.b16 %v5346, %v5345
        %v5349 = vsel %vm1150, %v5341, 0
        %v5351 = vsel %vm1150, %v5342, 0
        %5353 = vmatpush.bf16.msra.mxu0 0
        %5354 = vmatpush.bf16.msra.mxu0 0
        %5355 = vmatpush.bf16.msra.mxu0 0
        %5356 = vmatpush.bf16.msra.mxu0 0
        %5357 = vmatpush.bf16.msra.mxu0 0
        %5358 = vmatpush.bf16.msra.mxu0 0
        %5359 = vmatpush.bf16.msra.mxu0 0
        %5360 = vmatpush.bf16.msra.mxu0 %v5347
        %5361 = vmatmul.bf16.gmra.mxu0 %v5349
        %v5362 = vpop.f32.mrf.mxu0
        %v5363 = vadd.f32 0.0, %v5362
        %v5364 = vpop.f32.mrf.mxu0
        %v5365 = vadd.f32 0.0, %v5364
        %5366 = vmatmul.bf16.gmra.mxu0 %v5351
        %v5367 = vpop.f32.mrf.mxu0
        %v5368 = vadd.f32 0.0, %v5367
        %v5369 = vpop.f32.mrf.mxu0
        %v5370 = vadd.f32 0.0, %v5369
        %5371 = vdwg.mxu0
        %v5372 = vadd.f32 %v5303, %v5363
        %v5373 = vadd.f32 %v5304, %v5365
        %v5374 = vadd.f32 %v5305, %v5368
        %v5375 = vadd.f32 %v5306, %v5370
        %v5376 = vld [vmem:[%s1887] sm:$0x7]
        %v5377 = vld [vmem:[%s1887 + $0x4] sm:$0x7]
        %v5378 = vld [vmem:[%s1887 + $0x8] sm:$0x7]
        %v5379 = vld [vmem:[%s1887 + $0xc] sm:$0x7]
        %v5380 = vld [vmem:[%s1887 + $0x18] sm:$0x7]
        %v5381 = vld [vmem:[%s1887 + $0x1c] sm:$0x7]
        %v5382 = vld [vmem:[%s1887 + $0x20] sm:$0x7]
        %v5383 = vld [vmem:[%s1887 + $0x24] sm:$0x7]
        %v5392 = vrot.slane %v5376, 2
        %v5393 = vrot.slane %v5377, 2
        %v5394 = vrot.slane %v5378, 2
        %v5395 = vrot.slane %v5379, 2
        %v5396 = vrot.slane %v5380, 2
        %v5397 = vrot.slane %v5381, 2
        %v5398 = vrot.slane %v5382, 2
        %v5399 = vrot.slane %v5383, 2
        %v5402 = vsel %vm790, %v5376, %v5392
        %v5403 = vsel %vm794, %v5376, %v5392
        %v5405 = vrot.slane %v5403, 2
        %v5408 = vsel %vm790, %v5377, %v5393
        %v5409 = vsel %vm794, %v5377, %v5393
        %v5411 = vrot.slane %v5409, 2
        %v5414 = vsel %vm790, %v5378, %v5394
        %v5415 = vsel %vm794, %v5378, %v5394
        %v5417 = vrot.slane %v5415, 2
        %v5420 = vsel %vm790, %v5379, %v5395
        %v5421 = vsel %vm794, %v5379, %v5395
        %v5423 = vrot.slane %v5421, 2
        %v5426 = vsel %vm790, %v5380, %v5396
        %v5427 = vsel %vm794, %v5380, %v5396
        %v5429 = vrot.slane %v5427, 2
        %v5432 = vsel %vm790, %v5381, %v5397
        %v5433 = vsel %vm794, %v5381, %v5397
        %v5435 = vrot.slane %v5433, 2
        %v5438 = vsel %vm790, %v5382, %v5398
        %v5439 = vsel %vm794, %v5382, %v5398
        %v5441 = vrot.slane %v5439, 2
        %v5444 = vsel %vm790, %v5383, %v5399
        %v5445 = vsel %vm794, %v5383, %v5399
        %v5447 = vrot.slane %v5445, 2
        %v5448 = vshrl.u32 %v5402, 16
        %v5450 = vrot.slane %v5448, 6
        %v5451 = vshll.u32 %v5402, 16
        %v5453 = vrot.slane %v5451, 7
        %v5454 = vor.u32 %v5450, %v5453
        %v5455 = vrot.slane %v5454, 2
        %v5457 = vshll.u32 %v5405, 16
        %v5459 = vrot.slane %v5457, 7
        %v5460 = vsel %vm1011, %v5455, %v5459
        %v5461 = vshrl.u32 %v5408, 16
        %v5463 = vrot.slane %v5461, 6
        %v5464 = vshll.u32 %v5408, 16
        %v5466 = vrot.slane %v5464, 7
        %v5467 = vor.u32 %v5463, %v5466
        %v5468 = vrot.slane %v5467, 2
        %v5470 = vshll.u32 %v5411, 16
        %v5472 = vrot.slane %v5470, 7
        %v5473 = vsel %vm1011, %v5468, %v5472
        %v5474 = vshrl.u32 %v5414, 16
        %v5476 = vrot.slane %v5474, 6
        %v5477 = vshll.u32 %v5414, 16
        %v5479 = vrot.slane %v5477, 7
        %v5480 = vor.u32 %v5476, %v5479
        %v5481 = vrot.slane %v5480, 2
        %v5483 = vshll.u32 %v5417, 16
        %v5485 = vrot.slane %v5483, 7
        %v5486 = vsel %vm1011, %v5481, %v5485
        %v5487 = vshrl.u32 %v5420, 16
        %v5489 = vrot.slane %v5487, 6
        %v5490 = vshll.u32 %v5420, 16
        %v5492 = vrot.slane %v5490, 7
        %v5493 = vor.u32 %v5489, %v5492
        %v5494 = vrot.slane %v5493, 2
        %v5496 = vshll.u32 %v5423, 16
        %v5498 = vrot.slane %v5496, 7
        %v5499 = vsel %vm1011, %v5494, %v5498
        %v5500 = vshrl.u32 %v5426, 16
        %v5502 = vrot.slane %v5500, 6
        %v5503 = vshll.u32 %v5426, 16
        %v5505 = vrot.slane %v5503, 7
        %v5506 = vor.u32 %v5502, %v5505
        %v5507 = vrot.slane %v5506, 2
        %v5509 = vshll.u32 %v5429, 16
        %v5511 = vrot.slane %v5509, 7
        %v5512 = vsel %vm1011, %v5507, %v5511
        %v5513 = vshrl.u32 %v5432, 16
        %v5515 = vrot.slane %v5513, 6
        %v5516 = vshll.u32 %v5432, 16
        %v5518 = vrot.slane %v5516, 7
        %v5519 = vor.u32 %v5515, %v5518
        %v5520 = vrot.slane %v5519, 2
        %v5522 = vshll.u32 %v5435, 16
        %v5524 = vrot.slane %v5522, 7
        %v5525 = vsel %vm1011, %v5520, %v5524
        %v5526 = vshrl.u32 %v5438, 16
        %v5528 = vrot.slane %v5526, 6
        %v5529 = vshll.u32 %v5438, 16
        %v5531 = vrot.slane %v5529, 7
        %v5532 = vor.u32 %v5528, %v5531
        %v5533 = vrot.slane %v5532, 2
        %v5535 = vshll.u32 %v5441, 16
        %v5537 = vrot.slane %v5535, 7
        %v5538 = vsel %vm1011, %v5533, %v5537
        %v5539 = vshrl.u32 %v5444, 16
        %v5541 = vrot.slane %v5539, 6
        %v5542 = vshll.u32 %v5444, 16
        %v5544 = vrot.slane %v5542, 7
        %v5545 = vor.u32 %v5541, %v5544
        %v5546 = vrot.slane %v5545, 2
        %v5548 = vshll.u32 %v5447, 16
        %v5550 = vrot.slane %v5548, 7
        %v5551 = vsel %vm1011, %v5546, %v5550
        %s5552 = scalar_lea.vmem %s17, 56
        %v5553 = vld [vmem:[%s5552] sm:$0xf]
        %v5554 = vld [vmem:[%s5552 + $0x4] sm:$0xf]
        %5556 = vst [vmem:[#allocation1] ss:$4 sm:$0xff] %v5460
        %s5558 = scalar_lea.vmem [#allocation1], 1
        %5559 = vst [vmem:[%s5558] ss:$4 sm:$0xff] %v5473
        %s5561 = scalar_lea.vmem [#allocation1], 2
        %5562 = vst [vmem:[%s5561] ss:$4 sm:$0xff] %v5486
        %s5564 = scalar_lea.vmem [#allocation1], 3
        %5565 = vst [vmem:[%s5564] ss:$4 sm:$0xff] %v5499
        %s5567 = scalar_lea.vmem [#allocation1], 32
        %5568 = vst [vmem:[%s5567] ss:$4 sm:$0xff] %v5512
        %s5570 = scalar_lea.vmem [#allocation1], 33
        %5571 = vst [vmem:[%s5570] ss:$4 sm:$0xff] %v5525
        %s5573 = scalar_lea.vmem [#allocation1], 34
        %5574 = vst [vmem:[%s5573] ss:$4 sm:$0xff] %v5538
        %s5576 = scalar_lea.vmem [#allocation1], 35
        %5577 = vst [vmem:[%s5576] ss:$4 sm:$0xff] %v5551
        %v5578 = vld.sshfl [vmem:[#allocation1] sm:$0xff pattern:$0x73625140]
        %v5579 = vld.sshfl [vmem:[#allocation1 + $0x20] sm:$0xff pattern:$0x73625140]
        %v5582 = vunpack.c.l.b16 %v5553
        %v5583 = vunpack.c.l.b16 %v5554
        %v5584 = vpack.c.b16 %v5583, %v5582
        %v5586 = vsel %vm1150, %v5578, 0
        %v5588 = vsel %vm1150, %v5579, 0
        %5590 = vmatpush.bf16.msra.mxu0 0
        %5591 = vmatpush.bf16.msra.mxu0 0
        %5592 = vmatpush.bf16.msra.mxu0 0
        %5593 = vmatpush.bf16.msra.mxu0 0
        %5594 = vmatpush.bf16.msra.mxu0 0
        %5595 = vmatpush.bf16.msra.mxu0 0
        %5596 = vmatpush.bf16.msra.mxu0 0
        %5597 = vmatpush.bf16.msra.mxu0 %v5584
        %5598 = vmatmul.bf16.gmra.mxu0 %v5586
        %v5599 = vpop.f32.mrf.mxu0
        %v5600 = vadd.f32 0.0, %v5599
        %v5601 = vpop.f32.mrf.mxu0
        %v5602 = vadd.f32 0.0, %v5601
        %5603 = vmatmul.bf16.gmra.mxu0 %v5588
        %v5604 = vpop.f32.mrf.mxu0
        %v5605 = vadd.f32 0.0, %v5604
        %v5606 = vpop.f32.mrf.mxu0
        %v5607 = vadd.f32 0.0, %v5606
        %5608 = vdwg.mxu0
        %v5609 = vadd.f32 %v5372, %v5600
        %v5610 = vadd.f32 %v5373, %v5602
        %v5611 = vadd.f32 %v5374, %v5605
        %v5612 = vadd.f32 %v5375, %v5607
        %v5613 = vld [vmem:[%s1887] sm:$0x6]
        %v5614 = vld [vmem:[%s1887 + $0x4] sm:$0x6]
        %v5615 = vld [vmem:[%s1887 + $0x8] sm:$0x6]
        %v5616 = vld [vmem:[%s1887 + $0xc] sm:$0x6]
        %v5617 = vld [vmem:[%s1887 + $0x18] sm:$0x6]
        %v5618 = vld [vmem:[%s1887 + $0x1c] sm:$0x6]
        %v5619 = vld [vmem:[%s1887 + $0x20] sm:$0x6]
        %v5620 = vld [vmem:[%s1887 + $0x24] sm:$0x6]
        %v5629 = vrot.slane %v5613, 2
        %v5630 = vrot.slane %v5614, 2
        %v5631 = vrot.slane %v5615, 2
        %v5632 = vrot.slane %v5616, 2
        %v5633 = vrot.slane %v5617, 2
        %v5634 = vrot.slane %v5618, 2
        %v5635 = vrot.slane %v5619, 2
        %v5636 = vrot.slane %v5620, 2
        %v5639 = vsel %vm790, %v5613, %v5629
        %v5641 = vsel %vm794, %v5613, %v5629
        %v5643 = vrot.slane %v5641, 2
        %v5646 = vsel %vm790, %v5614, %v5630
        %v5648 = vsel %vm794, %v5614, %v5630
        %v5650 = vrot.slane %v5648, 2
        %v5653 = vsel %vm790, %v5615, %v5631
        %v5655 = vsel %vm794, %v5615, %v5631
        %v5657 = vrot.slane %v5655, 2
        %v5660 = vsel %vm790, %v5616, %v5632
        %v5662 = vsel %vm794, %v5616, %v5632
        %v5664 = vrot.slane %v5662, 2
        %v5667 = vsel %vm790, %v5617, %v5633
        %v5669 = vsel %vm794, %v5617, %v5633
        %v5671 = vrot.slane %v5669, 2
        %v5674 = vsel %vm790, %v5618, %v5634
        %v5676 = vsel %vm794, %v5618, %v5634
        %v5678 = vrot.slane %v5676, 2
        %v5681 = vsel %vm790, %v5619, %v5635
        %v5683 = vsel %vm794, %v5619, %v5635
        %v5685 = vrot.slane %v5683, 2
        %v5688 = vsel %vm790, %v5620, %v5636
        %v5690 = vsel %vm794, %v5620, %v5636
        %v5692 = vrot.slane %v5690, 2
        %v5693 = vrot.slane %v5639, 7
        %v5694 = vrot.slane %v5693, 2
        %v5695 = vrot.slane %v5643, 7
        %v5696 = vsel %vm1314, %v5694, %v5695
        %v5697 = vrot.slane %v5646, 7
        %v5698 = vrot.slane %v5697, 2
        %v5699 = vrot.slane %v5650, 7
        %v5700 = vsel %vm1314, %v5698, %v5699
        %v5701 = vrot.slane %v5653, 7
        %v5702 = vrot.slane %v5701, 2
        %v5703 = vrot.slane %v5657, 7
        %v5704 = vsel %vm1314, %v5702, %v5703
        %v5705 = vrot.slane %v5660, 7
        %v5706 = vrot.slane %v5705, 2
        %v5707 = vrot.slane %v5664, 7
        %v5708 = vsel %vm1314, %v5706, %v5707
        %v5709 = vrot.slane %v5667, 7
        %v5710 = vrot.slane %v5709, 2
        %v5711 = vrot.slane %v5671, 7
        %v5712 = vsel %vm1314, %v5710, %v5711
        %v5713 = vrot.slane %v5674, 7
        %v5714 = vrot.slane %v5713, 2
        %v5715 = vrot.slane %v5678, 7
        %v5716 = vsel %vm1314, %v5714, %v5715
        %v5717 = vrot.slane %v5681, 7
        %v5718 = vrot.slane %v5717, 2
        %v5719 = vrot.slane %v5685, 7
        %v5720 = vsel %vm1314, %v5718, %v5719
        %v5721 = vrot.slane %v5688, 7
        %v5722 = vrot.slane %v5721, 2
        %v5723 = vrot.slane %v5692, 7
        %v5724 = vsel %vm1314, %v5722, %v5723
        %s5725 = scalar_lea.vmem %s17, 64
        %v5726 = vld [vmem:[%s5725] sm:$0xf]
        %v5727 = vld [vmem:[%s5725 + $0x4] sm:$0xf]
        %5729 = vst [vmem:[#allocation1] ss:$4 sm:$0xff] %v5696
        %s5731 = scalar_lea.vmem [#allocation1], 1
        %5732 = vst [vmem:[%s5731] ss:$4 sm:$0xff] %v5700
        %s5734 = scalar_lea.vmem [#allocation1], 2
        %5735 = vst [vmem:[%s5734] ss:$4 sm:$0xff] %v5704
        %s5737 = scalar_lea.vmem [#allocation1], 3
        %5738 = vst [vmem:[%s5737] ss:$4 sm:$0xff] %v5708
        %s5740 = scalar_lea.vmem [#allocation1], 32
        %5741 = vst [vmem:[%s5740] ss:$4 sm:$0xff] %v5712
        %s5743 = scalar_lea.vmem [#allocation1], 33
        %5744 = vst [vmem:[%s5743] ss:$4 sm:$0xff] %v5716
        %s5746 = scalar_lea.vmem [#allocation1], 34
        %5747 = vst [vmem:[%s5746] ss:$4 sm:$0xff] %v5720
        %s5749 = scalar_lea.vmem [#allocation1], 35
        %5750 = vst [vmem:[%s5749] ss:$4 sm:$0xff] %v5724
        %v5751 = vld.sshfl [vmem:[#allocation1] sm:$0xff pattern:$0x73625140]
        %v5752 = vld.sshfl [vmem:[#allocation1 + $0x20] sm:$0xff pattern:$0x73625140]
        %v5755 = vunpack.c.l.b16 %v5726
        %v5756 = vunpack.c.l.b16 %v5727
        %v5757 = vpack.c.b16 %v5756, %v5755
        %v5759 = vsel %vm1150, %v5751, 0
        %v5761 = vsel %vm1150, %v5752, 0
        %5763 = vmatpush.bf16.msra.mxu0 0
        %5764 = vmatpush.bf16.msra.mxu0 0
        %5765 = vmatpush.bf16.msra.mxu0 0
        %5766 = vmatpush.bf16.msra.mxu0 0
        %5767 = vmatpush.bf16.msra.mxu0 0
        %5768 = vmatpush.bf16.msra.mxu0 0
        %5769 = vmatpush.bf16.msra.mxu0 0
        %5770 = vmatpush.bf16.msra.mxu0 %v5757
        %5771 = vmatmul.bf16.gmra.mxu0 %v5759
        %v5772 = vpop.f32.mrf.mxu0
        %v5773 = vadd.f32 0.0, %v5772
        %v5774 = vpop.f32.mrf.mxu0
        %v5775 = vadd.f32 0.0, %v5774
        %5776 = vmatmul.bf16.gmra.mxu0 %v5761
        %v5777 = vpop.f32.mrf.mxu0
        %v5778 = vadd.f32 0.0, %v5777
        %v5779 = vpop.f32.mrf.mxu0
        %v5780 = vadd.f32 0.0, %v5779
        %5781 = vdwg.mxu0
        %v5782 = vadd.f32 %v5609, %v5773
        %v5783 = vadd.f32 %v5610, %v5775
        %v5784 = vadd.f32 %v5611, %v5778
        %v5785 = vadd.f32 %v5612, %v5780
        %v5786 = vld [vmem:[%s18] sm:$0x1]
        %v5788 = vperm.slane %v5786, 0
        %v5790 = vadd.f32 %v5782, %v5788
        %v5791 = vadd.f32 %v5783, %v5788
        %v5792 = vadd.f32 %v5784, %v5788
        %v5793 = vadd.f32 %v5785, %v5788
        %v5794 = vmax.f32 %v5790, 0.0
        %v5795 = vmax.f32 %v5791, 0.0
        %v5796 = vmax.f32 %v5792, 0.0
        %v5797 = vmax.f32 %v5793, 0.0
        %v5798 = vpack.c.bf16 %v5795, %v5794
        %v5799 = vpack.c.bf16 %v5797, %v5796
        %v5800 = vld [vmem:[%s19] sm:$0xf]
        %v5801 = vld [vmem:[%s19 + $0x4] sm:$0xf]
        %v5802 = vld [vmem:[%s20] sm:$0x1]
        %v5804 = vperm.slane %v5802, 0
        %v5808 = vunpack.c.l.b16 %v5800
        %v5809 = vunpack.c.l.b16 %v5801
        %v5810 = vpack.c.b16 %v5809, %v5808
        %v5813 = vsel %vm1150, %v5798, 0
        %v5816 = vsel %vm1150, %v5799, 0
        %5818 = vmatpush.bf16.msra.mxu0 0
        %5819 = vmatpush.bf16.msra.mxu0 0
        %5820 = vmatpush.bf16.msra.mxu0 0
        %5821 = vmatpush.bf16.msra.mxu0 0
        %5822 = vmatpush.bf16.msra.mxu0 0
        %5823 = vmatpush.bf16.msra.mxu0 0
        %5824 = vmatpush.bf16.msra.mxu0 0
        %5825 = vmatpush.bf16.msra.mxu0 %v5810
        %5826 = vmatmul.bf16.gmra.mxu0 %v5813
        %v5827 = vpop.f32.mrf.mxu0
        %v5828 = vadd.f32 %v5804, %v5827
        %v5829 = vpop.f32.mrf.mxu0
        %v5830 = vadd.f32 %v5804, %v5829
        %5831 = vmatmul.bf16.gmra.mxu0 %v5816
        %v5832 = vpop.f32.mrf.mxu0
        %v5833 = vadd.f32 %v5804, %v5832
        %v5834 = vpop.f32.mrf.mxu0
        %v5835 = vadd.f32 %v5804, %v5834
        %5836 = vdwg.mxu0
        %v5837 = vadd.f32 %v5828, %v4140
        %v5838 = vadd.f32 %v5830, %v4141
        %v5839 = vadd.f32 %v5833, %v4142
        %v5840 = vadd.f32 %v5835, %v4143
        %v5841 = vmax.f32 %v5837, 0.0
        %v5842 = vmax.f32 %v5838, 0.0
        %v5843 = vmax.f32 %v5839, 0.0
        %v5844 = vmax.f32 %v5840, 0.0
        %5845 = vst.msk [vmem:[%s652] sm:$0xff] %vm2480, %v5841
        %5846 = vst.msk [vmem:[%s652 + $0x8] sm:$0xff] %vm2480, %v5842
        %5847 = vst.msk [vmem:[%s652 + $0x10] sm:$0xff] %vm2480, %v5843
        %5848 = vst.msk [vmem:[%s652 + $0x18] sm:$0xff] %vm2480, %v5844
        %s5849 = sand.u32 %s489, 1
        %s5850 = scalar_lea.sflag [#allocation4], %s5849
        %s5851 = sand.u32 %s489, 1
        %s5852 = smul.addr %s5851, 32
        %s5853 = scalar_lea.vmem [#allocation3], %s5852
        // Predicated region
        $region105: #{forward.3} parent=103 // pred_check
          %p5854 = pneg %p499
        $region106: #{forward.3} parent=103 // pred_check_branch
          %5856 = sbr.rel (%p5854) target = $region108
        $region107: #{forward.3} parent=103 // pred_region
          %s5857 = smul.u32 2, %s35
          %5859 = vsyncadd %s5850, 0
          %s5860 = smul.addr %s5857, 2
          %s5861 = smul.addr %s5860, 8
          %s5862 = scalar_lea.hbm %s21, %s5861
          %s5863 = sshll.u32 %s5853, 4
          %s5864 = int_to_ptr.vmem [resolvable:$true] %s5863
          %s5865 = sshll.u32 %s5862, 4
          %s5866 = int_to_ptr.hbm [resolvable:$true] %s5865
          %5871 = dma.vmem_to_hbm [thread:$0]  %s5864, 512, %s5866, %s5850, 128, 128, 8
        $region108: #{forward.3} parent=103 // pred_fallthru
          _
      $region104: #{forward.3} parent=5 // pred_fallthru
        _
      %p5872 = scmp.le.s32.totalorder 2, %s30
      // Predicated region
      $region109: #{forward.3} parent=5 // pred_check
        %p5873 = pneg %p5872
      $region110: #{forward.3} parent=5 // pred_check_branch
        %5875 = sbr.rel (%p5873) target = $region112
      $region111: #{forward.3} parent=5 // pred_region
        %s5876 = ssub.s32 %s30, 2
        // Predicated region
        $region113: #{forward.3} parent=111 // pred_check
          %p5877 = pneg %p505
        $region114: #{forward.3} parent=111 // pred_check_branch
          %5879 = sbr.rel (%p5877) target = $region116
        $region115: #{forward.3} parent=111 // pred_region
          %s5880 = sand.u32 %s490, 1
          %s5881 = scalar_lea.sflag [#allocation4], %s5880
          %s5882 = sand.u32 %s490, 1
          %s5883 = smul.addr %s5882, 32
          %s5884 = scalar_lea.vmem [#allocation3], %s5883
          %5886 = dma.done %s5881, 512
        $region116: #{forward.3} parent=111 // pred_fallthru
          _
      $region112: #{forward.3} parent=5 // pred_fallthru
        _
    $region6: #{forward.3} parent=1 // loop_footer
      %s34 = sadd.s32 1, %s30
    $region7: #{forward.3} parent=1 // loop_footer_branch
      %29 = sbr.rel target = $region3
    $region8: #{forward.3} parent=1 // loop_exit
      _
    %5887 = vsyncpa [#allocation4], 1
    %s5888 = scalar_lea.sflag [#allocation4], 1
    %5889 = vsyncpa %s5888, 1

</llo_original>
